<compile_context>
chip_gen: v5e
topology: v5e:2x2
jax: 0.10.0
libtpu: 0.0.40
codegen_flags: <defaults>
</compile_context>

<pallas_src>
import functools
import math

import jax
import jax.numpy as jnp
from jax.experimental import pallas as pl
from jax.experimental.pallas import tpu as pltpu


def _encoder_block_kernel(
    # activations
    x_full_ref,               # (S, D)        f32  -- full sequence (keys/values)
    x_q_ref,                  # (block_q, D)  f32  -- query-row tile
    mask_ref,                 # (1, S)        f32  -- 1 = attend, 0 = masked
    # attention weights (bf16) / biases (f32), pre-packed per head
    wq_ref, wk_ref, wv_ref,   # (H, D, d_k)
    bq_ref, bk_ref, bv_ref,   # (H, 1, d_k)
    wo_ref,                   # (H, d_k, D)
    bo_ref,                   # (1, D)
    # feed-forward
    w1_ref, b1_ref,           # (D, d_ff), (1, d_ff)
    w2_ref, b2_ref,           # (d_ff, D), (1, D)
    # layer-norm gains / biases
    g1_ref, gb1_ref, g2_ref, gb2_ref,   # (1, D)
    # output
    out_ref,                  # (block_q, D)
    *, n_heads: int, d_model: int, d_k: int, eps: float):
  f32 = jnp.float32
  bf16 = jnp.bfloat16

  x_full = x_full_ref[...].astype(f32)       # (S, D)
  x_q = x_q_ref[...].astype(f32)             # (block_q, D)

  def normalize(v):
    # matches torch: (x - mean) / (std_unbiased + eps)
    mean = jnp.mean(v, axis=-1, keepdims=True)
    var = jnp.sum((v - mean) ** 2, axis=-1, keepdims=True) * (1.0 / (d_model - 1))
    return (v - mean) / (jnp.sqrt(var) + eps)

  g1 = g1_ref[...]
  gb1 = gb1_ref[...]
  ln1_kv = (g1 * normalize(x_full) + gb1).astype(bf16)   # (S, D)
  ln1_q = (g1 * normalize(x_q) + gb1).astype(bf16)       # (block_q, D)

  def project(x_bf16, w_ref, b_ref):
    # Per-head projections as H full-D-contraction (rows, D) x (D, d_k) MXU matmuls,
    # stacked along a new *untiled* leading head axis -> (H, rows, d_k).  This keeps
    # the MXU contraction at full D and avoids any in-kernel lane-dim reshape/relayout.
    heads = [jnp.dot(x_bf16, w_ref[h], preferred_element_type=f32)
             for h in range(n_heads)]
    return jnp.stack(heads, axis=0) + b_ref[...]

  scale = 1.0 / math.sqrt(d_k)
  q = (project(ln1_q, wq_ref, bq_ref) * scale).astype(bf16)   # (H, block_q, d_k)
  k = project(ln1_kv, wk_ref, bk_ref).astype(bf16)            # (H, S, d_k)
  v = project(ln1_kv, wv_ref, bv_ref).astype(bf16)            # (H, S, d_k)

  # Head-batched attention scores; additive mask bias computed once (hoisted).
  scores = jnp.einsum('hqd,hkd->hqk', q, k,
                      preferred_element_type=f32)             # (H, block_q, S)
  mask_bias = ((mask_ref[...].astype(f32) - 1.0) * 1.0e9)[None]   # (1, 1, S)
  scores = scores + mask_bias

  m = jnp.max(scores, axis=-1, keepdims=True)
  p = jnp.exp(scores - m)
  denom = jnp.sum(p, axis=-1, keepdims=True)
  p = (p * pl.reciprocal(denom, approx=True)).astype(bf16)    # softmax (EUP reciprocal)

  ctx = jnp.einsum('hqk,hkd->hqd', p, v,
                   preferred_element_type=f32)                # (H, block_q, d_k)

  # Output projection: batched per-head (block_q, d_k) x (d_k, D), summed over heads.
  # Mathematically identical to concat(heads) @ W_o, without the lane-dim concatenate.
  attn = jnp.sum(
      jnp.einsum('hqd,hdn->hqn', ctx.astype(bf16), wo_ref[...],
                 preferred_element_type=f32),
      axis=0) + bo_ref[...]                                   # (block_q, D)

  x2 = x_q + attn                                             # residual 1

  ln2 = (g2_ref[...] * normalize(x2) + gb2_ref[...]).astype(bf16)
  h1 = jnp.dot(ln2, w1_ref[...], preferred_element_type=f32) + b1_ref[...]
  h1 = jnp.maximum(h1, 0.0).astype(bf16)                      # relu
  ff = jnp.dot(h1, w2_ref[...], preferred_element_type=f32) + b2_ref[...]

  out_ref[...] = (x2 + ff).astype(out_ref.dtype)              # residual 2


def encoder_block(x, mask, params, *, n_heads, eps=1e-6, block_q=None):
  """x: (B, S, D), mask: (B, 1, S) with 1 = attend, 0 = masked. Returns (B, S, D).

  Best performance when D is a multiple of 128 and S / block_q are multiples of 8
  (lane/sublane-aligned tiles; no masked partial stores).
  """
  B, S, D = x.shape
  assert D % n_heads == 0
  d_k = D // n_heads
  d_ff = params["w1_t"].shape[-1]
  if block_q is None:
    block_q = min(S, 256)
  assert S % block_q == 0, "S must be divisible by block_q"
  n_q = S // block_q

  f32, bf16 = jnp.float32, jnp.bfloat16

  # Pre-pack per-head weight slabs (one-time layout prep, outside the kernel):
  #   head h of the Q/K/V projections uses columns [h*d_k, (h+1)*d_k) of W^T,
  #   head h of the output projection uses rows    [h*d_k, (h+1)*d_k) of W_o^T.
  def _split_cols(w_t):   # (D, D) -> (H, D, d_k)
    return w_t.reshape(D, n_heads, d_k).transpose(1, 0, 2).astype(bf16)

  wq_h = _split_cols(params["wq_t"])
  wk_h = _split_cols(params["wk_t"])
  wv_h = _split_cols(params["wv_t"])
  wo_h = params["wo_t"].reshape(n_heads, d_k, D).astype(bf16)
  bq_h = params["bq"].reshape(n_heads, 1, d_k).astype(f32)
  bk_h = params["bk"].reshape(n_heads, 1, d_k).astype(f32)
  bv_h = params["bv"].reshape(n_heads, 1, d_k).astype(f32)

  operands = (
      x, x, mask.astype(f32),
      wq_h, wk_h, wv_h, bq_h, bk_h, bv_h,
      wo_h, params["bo"].astype(f32),
      params["w1_t"].astype(bf16), params["b1"].astype(f32),
      params["w2_t"].astype(bf16), params["b2"].astype(f32),
      params["g1"].astype(f32), params["gb1"].astype(f32),
      params["g2"].astype(f32), params["gb2"].astype(f32),
  )

  kernel = functools.partial(
      _encoder_block_kernel, n_heads=n_heads, d_model=D, d_k=d_k, eps=eps)

  def _run(single_buffer_weights):
    def const_spec(shape):
      # Grid-invariant operand (weights / biases / gains): index_map is constant, so a
      # single VMEM buffer suffices -- skip the default double-buffering to save VMEM.
      idx = (lambda b, qt: (0, 0)) if len(shape) == 2 else (lambda b, qt: (0, 0, 0))
      if single_buffer_weights:
        return pl.BlockSpec(shape, idx, pipeline_mode=pl.Buffered(1))
      return pl.BlockSpec(shape, idx)

    in_specs = [
        pl.BlockSpec((pl.Squeezed(), S, D), lambda b, qt: (b, 0, 0)),         # x full seq
        pl.BlockSpec((pl.Squeezed(), block_q, D), lambda b, qt: (b, qt, 0)),  # x q-tile
        pl.BlockSpec((pl.Squeezed(), 1, S), lambda b, qt: (b, 0, 0)),         # mask
        const_spec((n_heads, D, d_k)), const_spec((n_heads, D, d_k)),
        const_spec((n_heads, D, d_k)),
        const_spec((n_heads, 1, d_k)), const_spec((n_heads, 1, d_k)),
        const_spec((n_heads, 1, d_k)),
        const_spec((n_heads, d_k, D)), const_spec((1, D)),
        const_spec((D, d_ff)), const_spec((1, d_ff)),
        const_spec((d_ff, D)), const_spec((1, D)),
        const_spec((1, D)), const_spec((1, D)),
        const_spec((1, D)), const_spec((1, D)),
    ]
    out_spec = pl.BlockSpec((pl.Squeezed(), block_q, D), lambda b, qt: (b, qt, 0))

    return pl.pallas_call(
        kernel,
        out_shape=jax.ShapeDtypeStruct((B, S, D), x.dtype),
        grid_spec=pltpu.PrefetchScalarGridSpec(
            num_scalar_prefetch=0,
            grid=(B, n_q),
            in_specs=in_specs,
            out_specs=out_spec),
        compiler_params=pltpu.CompilerParams(
            dimension_semantics=("parallel", "parallel"),
            vmem_limit_bytes=32 * 1024 * 1024),
    )(*operands)

  try:
    return _run(single_buffer_weights=True)
  except Exception:
    # Compatibility fallback for JAX builds without BlockSpec pipeline_mode /
    # single-buffered inputs: use default (double-buffered) weight specs.
    return _run(single_buffer_weights=False)


def init_params(key, d_model, d_ff, scale=0.1):
  """Canonical f32 parameters. Linear weights stored pre-transposed as (in, out)."""
  ks = jax.random.split(key, 12)

  def lin(kw, kb, din, dout):
    return (jax.random.normal(kw, (din, dout), jnp.float32) * scale,
            jax.random.normal(kb, (1, dout), jnp.float32) * scale)

  wq_t, bq = lin(ks[0], ks[1], d_model, d_model)
  wk_t, bk = lin(ks[2], ks[3], d_model, d_model)
  wv_t, bv = lin(ks[4], ks[5], d_model, d_model)
  wo_t, bo = lin(ks[6], ks[7], d_model, d_model)
  w1_t, b1 = lin(ks[8], ks[9], d_model, d_ff)
  w2_t, b2 = lin(ks[10], ks[11], d_ff, d_model)

  return dict(
      wq_t=wq_t, bq=bq, wk_t=wk_t, bk=bk, wv_t=wv_t, bv=bv, wo_t=wo_t, bo=bo,
      w1_t=w1_t, b1=b1, w2_t=w2_t, b2=b2,
      g1=jnp.ones((1, d_model), jnp.float32),
      gb1=jnp.zeros((1, d_model), jnp.float32),
      g2=jnp.ones((1, d_model), jnp.float32),
      gb2=jnp.zeros((1, d_model), jnp.float32),
  )


def encoder_block_reference(x, mask, params, *, n_heads, eps=1e-6):
  """Pure-JAX f32 reference mirroring the PyTorch EncoderBlock forward (eval mode)."""
  B, S, D = x.shape
  d_k = D // n_heads

  def normalize(v):
    mean = jnp.mean(v, axis=-1, keepdims=True)
    std = jnp.sqrt(jnp.sum((v - mean) ** 2, axis=-1, keepdims=True) / (D - 1))
    return (v - mean) / (std + eps)

  def linear(v, w_t, b):
    return v @ w_t + b

  def heads(v):
    return v.reshape(B, S, n_heads, d_k).transpose(0, 2, 1, 3)   # (B, H, S, d_k)

  ln1 = params["g1"] * normalize(x) + params["gb1"]
  q = heads(linear(ln1, params["wq_t"], params["bq"]))
  k = heads(linear(ln1, params["wk_t"], params["bk"]))
  v = heads(linear(ln1, params["wv_t"], params["bv"]))
  scores = q @ jnp.swapaxes(k, -1, -2) / math.sqrt(d_k)          # (B, H, S, S)
  scores = jnp.where(mask[:, None, :, :] == 0, -1.0e9, scores)
  p = jax.nn.softmax(scores, axis=-1)
  ctx = (p @ v).transpose(0, 2, 1, 3).reshape(B, S, D)
  x = x + linear(ctx, params["wo_t"], params["bo"])
  ln2 = params["g2"] * normalize(x) + params["gb2"]
  h1 = jnp.maximum(linear(ln2, params["w1_t"], params["b1"]), 0.0)
  return x + linear(h1, params["w2_t"], params["b2"])


if __name__ == "__main__":
  # Small but lane/sublane-aligned shapes: D multiple of 128, S and block_q multiples of 8.
  B, S, D, H, D_FF = 2, 16, 128, 4, 256
  BLOCK_Q = 8    # 2 query tiles per batch element -> grid (B, S // BLOCK_Q) = (2, 2)

  key = jax.random.PRNGKey(0)
  kx, kp = jax.random.split(key)
  x = jax.random.normal(kx, (B, S, D), jnp.float32)
  # mask: (B, 1, S), 1 = attend, 0 = masked; mask out the last 4 key positions of batch 1.
  mask = jnp.ones((B, 1, S), jnp.float32)
  mask = mask.at[1, 0, -4:].set(0.0)

  params = init_params(kp, D, D_FF)

  out = encoder_block(x, mask, params, n_heads=H, block_q=BLOCK_Q)
  out = jax.block_until_ready(out)

  assert out.shape == (B, S, D)
  assert bool(jnp.all(jnp.isfinite(out)))

  # Cross-check against the pure-JAX reference (bf16 MXU + approx reciprocal => loose tol).
  ref = encoder_block_reference(x, mask, params, n_heads=H)
  rel_err = float(jnp.sqrt(jnp.sum((out - ref) ** 2) / jnp.sum(ref ** 2)))
  assert rel_err < 0.08, f"relative error vs reference too large: {rel_err}"

  print("KERNEL_OK")
</pallas_src>

<mosaic_0001>
module attributes {stable_mosaic.version = 11 : i64} {
  func.func @_encoder_block_kernel(%arg0: i32, %arg1: i32, %arg2: memref<1x16x128xf32, #tpu.memory_space<vmem>>, %arg3: memref<1x8x128xf32, #tpu.memory_space<vmem>>, %arg4: memref<1x1x16xf32, #tpu.memory_space<vmem>>, %arg5: memref<4x128x32xbf16, #tpu.memory_space<vmem>>, %arg6: memref<4x128x32xbf16, #tpu.memory_space<vmem>>, %arg7: memref<4x128x32xbf16, #tpu.memory_space<vmem>>, %arg8: memref<4x1x32xf32, #tpu.memory_space<vmem>>, %arg9: memref<4x1x32xf32, #tpu.memory_space<vmem>>, %arg10: memref<4x1x32xf32, #tpu.memory_space<vmem>>, %arg11: memref<4x32x128xbf16, #tpu.memory_space<vmem>>, %arg12: memref<1x128xf32, #tpu.memory_space<vmem>>, %arg13: memref<128x256xbf16, #tpu.memory_space<vmem>>, %arg14: memref<1x256xf32, #tpu.memory_space<vmem>>, %arg15: memref<256x128xbf16, #tpu.memory_space<vmem>>, %arg16: memref<1x128xf32, #tpu.memory_space<vmem>>, %arg17: memref<1x128xf32, #tpu.memory_space<vmem>>, %arg18: memref<1x128xf32, #tpu.memory_space<vmem>>, %arg19: memref<1x128xf32, #tpu.memory_space<vmem>>, %arg20: memref<1x128xf32, #tpu.memory_space<vmem>>, %arg21: memref<1x8x128xf32, #tpu.memory_space<vmem>>) attributes {dimension_semantics = [#tpu.dimension_semantics<parallel>, #tpu.dimension_semantics<parallel>], iteration_bounds = array<i64: 2, 2>, scalar_prefetch = 0 : i64, scratch_operands = 0 : i64, tpu.core_type = #tpu.core_type<tc>, window_params = [{transform_indices = @transform_0, window_bounds = array<i64: 1, 16, 128>}, {transform_indices = @transform_1, window_bounds = array<i64: 1, 8, 128>}, {transform_indices = @transform_2, window_bounds = array<i64: 1, 1, 16>}, {pipeline_mode = #tpu.pipeline_mode<synchronous>, transform_indices = @transform_3, window_bounds = array<i64: 4, 128, 32>}, {pipeline_mode = #tpu.pipeline_mode<synchronous>, transform_indices = @transform_4, window_bounds = array<i64: 4, 128, 32>}, {pipeline_mode = #tpu.pipeline_mode<synchronous>, transform_indices = @transform_5, window_bounds = array<i64: 4, 128, 32>}, {pipeline_mode = #tpu.pipeline_mode<synchronous>, transform_indices = @transform_6, window_bounds = array<i64: 4, 1, 32>}, {pipeline_mode = #tpu.pipeline_mode<synchronous>, transform_indices = @transform_7, window_bounds = array<i64: 4, 1, 32>}, {pipeline_mode = #tpu.pipeline_mode<synchronous>, transform_indices = @transform_8, window_bounds = array<i64: 4, 1, 32>}, {pipeline_mode = #tpu.pipeline_mode<synchronous>, transform_indices = @transform_9, window_bounds = array<i64: 4, 32, 128>}, {pipeline_mode = #tpu.pipeline_mode<synchronous>, transform_indices = @transform_10, window_bounds = array<i64: 1, 128>}, {pipeline_mode = #tpu.pipeline_mode<synchronous>, transform_indices = @transform_11, window_bounds = array<i64: 128, 256>}, {pipeline_mode = #tpu.pipeline_mode<synchronous>, transform_indices = @transform_12, window_bounds = array<i64: 1, 256>}, {pipeline_mode = #tpu.pipeline_mode<synchronous>, transform_indices = @transform_13, window_bounds = array<i64: 256, 128>}, {pipeline_mode = #tpu.pipeline_mode<synchronous>, transform_indices = @transform_14, window_bounds = array<i64: 1, 128>}, {pipeline_mode = #tpu.pipeline_mode<synchronous>, transform_indices = @transform_15, window_bounds = array<i64: 1, 128>}, {pipeline_mode = #tpu.pipeline_mode<synchronous>, transform_indices = @transform_16, window_bounds = array<i64: 1, 128>}, {pipeline_mode = #tpu.pipeline_mode<synchronous>, transform_indices = @transform_17, window_bounds = array<i64: 1, 128>}, {pipeline_mode = #tpu.pipeline_mode<synchronous>, transform_indices = @transform_18, window_bounds = array<i64: 1, 128>}, {transform_indices = @transform_19, window_bounds = array<i64: 1, 8, 128>}]} {
    %c0 = arith.constant 0 : index
    %c0_0 = arith.constant 0 : index
    %c0_1 = arith.constant 0 : index
    %0 = vector.load %arg2[%c0, %c0_0, %c0_1] : memref<1x16x128xf32, #tpu.memory_space<vmem>>, vector<1x16x128xf32>
    %1 = vector.shape_cast %0 : vector<1x16x128xf32> to vector<16x128xf32>
    %c0_2 = arith.constant 0 : index
    %c0_3 = arith.constant 0 : index
    %c0_4 = arith.constant 0 : index
    %2 = vector.load %arg3[%c0_2, %c0_3, %c0_4] : memref<1x8x128xf32, #tpu.memory_space<vmem>>, vector<1x8x128xf32>
    %3 = vector.shape_cast %2 : vector<1x8x128xf32> to vector<8x128xf32>
    %c0_5 = arith.constant 0 : index
    %c0_6 = arith.constant 0 : index
    %4 = vector.load %arg17[%c0_5, %c0_6] : memref<1x128xf32, #tpu.memory_space<vmem>>, vector<1x128xf32>
    %c0_7 = arith.constant 0 : index
    %c0_8 = arith.constant 0 : index
    %5 = vector.load %arg18[%c0_7, %c0_8] : memref<1x128xf32, #tpu.memory_space<vmem>>, vector<1x128xf32>
    %cst = arith.constant dense<0.000000e+00> : vector<16xf32>
    %6 = vector.multi_reduction <add>, %1, %cst [1] : vector<16x128xf32> to vector<16xf32>
    %7 = vector.shape_cast %6 : vector<16xf32> to vector<16x1xf32>
    %cst_9 = arith.constant 1.280000e+02 : f32
    %8 = vector.broadcast %cst_9 : f32 to vector<16x1xf32>
    %9 = arith.divf %7, %8 : vector<16x1xf32>
    %10 = vector.broadcast %9 : vector<16x1xf32> to vector<16x128xf32>
    %11 = arith.subf %1, %10 : vector<16x128xf32>
    %12 = arith.mulf %11, %11 : vector<16x128xf32>
    %cst_10 = arith.constant dense<0.000000e+00> : vector<16xf32>
    %13 = vector.multi_reduction <add>, %12, %cst_10 [1] : vector<16x128xf32> to vector<16xf32>
    %14 = vector.shape_cast %13 : vector<16xf32> to vector<16x1xf32>
    %cst_11 = arith.constant 0.00787401571 : f32
    %15 = vector.broadcast %cst_11 : f32 to vector<16x1xf32>
    %16 = arith.mulf %14, %15 : vector<16x1xf32>
    %17 = vector.broadcast %9 : vector<16x1xf32> to vector<16x128xf32>
    %18 = arith.subf %1, %17 : vector<16x128xf32>
    %19 = math.sqrt %16 : vector<16x1xf32>
    %cst_12 = arith.constant 9.99999997E-7 : f32
    %20 = vector.broadcast %cst_12 : f32 to vector<16x1xf32>
    %21 = arith.addf %19, %20 : vector<16x1xf32>
    %22 = vector.broadcast %21 : vector<16x1xf32> to vector<16x128xf32>
    %23 = arith.divf %18, %22 : vector<16x128xf32>
    %24 = vector.broadcast %4 : vector<1x128xf32> to vector<16x128xf32>
    %25 = arith.mulf %24, %23 : vector<16x128xf32>
    %26 = vector.broadcast %5 : vector<1x128xf32> to vector<16x128xf32>
    %27 = arith.addf %25, %26 : vector<16x128xf32>
    %28 = arith.truncf %27 : vector<16x128xf32> to vector<16x128xbf16>
    %cst_13 = arith.constant dense<0.000000e+00> : vector<8xf32>
    %29 = vector.multi_reduction <add>, %3, %cst_13 [1] : vector<8x128xf32> to vector<8xf32>
    %30 = vector.shape_cast %29 : vector<8xf32> to vector<8x1xf32>
    %cst_14 = arith.constant 1.280000e+02 : f32
    %31 = vector.broadcast %cst_14 : f32 to vector<8x1xf32>
    %32 = arith.divf %30, %31 : vector<8x1xf32>
    %33 = vector.broadcast %32 : vector<8x1xf32> to vector<8x128xf32>
    %34 = arith.subf %3, %33 : vector<8x128xf32>
    %35 = arith.mulf %34, %34 : vector<8x128xf32>
    %cst_15 = arith.constant dense<0.000000e+00> : vector<8xf32>
    %36 = vector.multi_reduction <add>, %35, %cst_15 [1] : vector<8x128xf32> to vector<8xf32>
    %37 = vector.shape_cast %36 : vector<8xf32> to vector<8x1xf32>
    %cst_16 = arith.constant 0.00787401571 : f32
    %38 = vector.broadcast %cst_16 : f32 to vector<8x1xf32>
    %39 = arith.mulf %37, %38 : vector<8x1xf32>
    %40 = vector.broadcast %32 : vector<8x1xf32> to vector<8x128xf32>
    %41 = arith.subf %3, %40 : vector<8x128xf32>
    %42 = math.sqrt %39 : vector<8x1xf32>
    %cst_17 = arith.constant 9.99999997E-7 : f32
    %43 = vector.broadcast %cst_17 : f32 to vector<8x1xf32>
    %44 = arith.addf %42, %43 : vector<8x1xf32>
    %45 = vector.broadcast %44 : vector<8x1xf32> to vector<8x128xf32>
    %46 = arith.divf %41, %45 : vector<8x128xf32>
    %47 = vector.broadcast %4 : vector<1x128xf32> to vector<8x128xf32>
    %48 = arith.mulf %47, %46 : vector<8x128xf32>
    %49 = vector.broadcast %5 : vector<1x128xf32> to vector<8x128xf32>
    %50 = arith.addf %48, %49 : vector<8x128xf32>
    %51 = arith.truncf %50 : vector<8x128xf32> to vector<8x128xbf16>
    %c0_18 = arith.constant 0 : index
    %c0_19 = arith.constant 0 : index
    %c0_20 = arith.constant 0 : index
    %52 = vector.load %arg5[%c0_18, %c0_19, %c0_20] : memref<4x128x32xbf16, #tpu.memory_space<vmem>>, vector<1x128x32xbf16>
    %53 = vector.shape_cast %52 : vector<1x128x32xbf16> to vector<128x32xbf16>
    %cst_21 = arith.constant dense<0.000000e+00> : vector<8x32xf32>
    %54 = tpu.matmul %51, %53, %cst_21 {dimension_numbers = #tpu.dot_dimension_numbers<[1], [0], [0], [1], [0, 0, 1, 1], [], []>} : vector<8x128xbf16>, vector<128x32xbf16>, vector<8x32xf32> -> vector<8x32xf32>
    %c1 = arith.constant 1 : index
    %c0_22 = arith.constant 0 : index
    %c0_23 = arith.constant 0 : index
    %55 = vector.load %arg5[%c1, %c0_22, %c0_23] : memref<4x128x32xbf16, #tpu.memory_space<vmem>>, vector<1x128x32xbf16>
    %56 = vector.shape_cast %55 : vector<1x128x32xbf16> to vector<128x32xbf16>
    %cst_24 = arith.constant dense<0.000000e+00> : vector<8x32xf32>
    %57 = tpu.matmul %51, %56, %cst_24 {dimension_numbers = #tpu.dot_dimension_numbers<[1], [0], [0], [1], [0, 0, 1, 1], [], []>} : vector<8x128xbf16>, vector<128x32xbf16>, vector<8x32xf32> -> vector<8x32xf32>
    %c2 = arith.constant 2 : index
    %c0_25 = arith.constant 0 : index
    %c0_26 = arith.constant 0 : index
    %58 = vector.load %arg5[%c2, %c0_25, %c0_26] : memref<4x128x32xbf16, #tpu.memory_space<vmem>>, vector<1x128x32xbf16>
    %59 = vector.shape_cast %58 : vector<1x128x32xbf16> to vector<128x32xbf16>
    %cst_27 = arith.constant dense<0.000000e+00> : vector<8x32xf32>
    %60 = tpu.matmul %51, %59, %cst_27 {dimension_numbers = #tpu.dot_dimension_numbers<[1], [0], [0], [1], [0, 0, 1, 1], [], []>} : vector<8x128xbf16>, vector<128x32xbf16>, vector<8x32xf32> -> vector<8x32xf32>
    %c3 = arith.constant 3 : index
    %c0_28 = arith.constant 0 : index
    %c0_29 = arith.constant 0 : index
    %61 = vector.load %arg5[%c3, %c0_28, %c0_29] : memref<4x128x32xbf16, #tpu.memory_space<vmem>>, vector<1x128x32xbf16>
    %62 = vector.shape_cast %61 : vector<1x128x32xbf16> to vector<128x32xbf16>
    %cst_30 = arith.constant dense<0.000000e+00> : vector<8x32xf32>
    %63 = tpu.matmul %51, %62, %cst_30 {dimension_numbers = #tpu.dot_dimension_numbers<[1], [0], [0], [1], [0, 0, 1, 1], [], []>} : vector<8x128xbf16>, vector<128x32xbf16>, vector<8x32xf32> -> vector<8x32xf32>
    %64 = vector.shape_cast %54 : vector<8x32xf32> to vector<1x8x32xf32>
    %65 = vector.shape_cast %57 : vector<8x32xf32> to vector<1x8x32xf32>
    %66 = vector.shape_cast %60 : vector<8x32xf32> to vector<1x8x32xf32>
    %67 = vector.shape_cast %63 : vector<8x32xf32> to vector<1x8x32xf32>
    %68 = tpu.concatenate %64, %65, %66, %67 in 0 : vector<1x8x32xf32>, vector<1x8x32xf32>, vector<1x8x32xf32>, vector<1x8x32xf32> -> vector<4x8x32xf32>
    %c0_31 = arith.constant 0 : index
    %c0_32 = arith.constant 0 : index
    %c0_33 = arith.constant 0 : index
    %69 = vector.load %arg8[%c0_31, %c0_32, %c0_33] : memref<4x1x32xf32, #tpu.memory_space<vmem>>, vector<4x1x32xf32>
    %70 = vector.broadcast %69 : vector<4x1x32xf32> to vector<4x8x32xf32>
    %71 = arith.addf %68, %70 : vector<4x8x32xf32>
    %cst_34 = arith.constant 0.176776692 : f32
    %72 = vector.broadcast %cst_34 : f32 to vector<4x8x32xf32>
    %73 = arith.mulf %71, %72 : vector<4x8x32xf32>
    %74 = arith.truncf %73 : vector<4x8x32xf32> to vector<4x8x32xbf16>
    %c0_35 = arith.constant 0 : index
    %c0_36 = arith.constant 0 : index
    %c0_37 = arith.constant 0 : index
    %75 = vector.load %arg6[%c0_35, %c0_36, %c0_37] : memref<4x128x32xbf16, #tpu.memory_space<vmem>>, vector<1x128x32xbf16>
    %76 = vector.shape_cast %75 : vector<1x128x32xbf16> to vector<128x32xbf16>
    %cst_38 = arith.constant dense<0.000000e+00> : vector<16x32xf32>
    %77 = tpu.matmul %28, %76, %cst_38 {dimension_numbers = #tpu.dot_dimension_numbers<[1], [0], [0], [1], [0, 0, 1, 1], [], []>} : vector<16x128xbf16>, vector<128x32xbf16>, vector<16x32xf32> -> vector<16x32xf32>
    %c1_39 = arith.constant 1 : index
    %c0_40 = arith.constant 0 : index
    %c0_41 = arith.constant 0 : index
    %78 = vector.load %arg6[%c1_39, %c0_40, %c0_41] : memref<4x128x32xbf16, #tpu.memory_space<vmem>>, vector<1x128x32xbf16>
    %79 = vector.shape_cast %78 : vector<1x128x32xbf16> to vector<128x32xbf16>
    %cst_42 = arith.constant dense<0.000000e+00> : vector<16x32xf32>
    %80 = tpu.matmul %28, %79, %cst_42 {dimension_numbers = #tpu.dot_dimension_numbers<[1], [0], [0], [1], [0, 0, 1, 1], [], []>} : vector<16x128xbf16>, vector<128x32xbf16>, vector<16x32xf32> -> vector<16x32xf32>
    %c2_43 = arith.constant 2 : index
    %c0_44 = arith.constant 0 : index
    %c0_45 = arith.constant 0 : index
    %81 = vector.load %arg6[%c2_43, %c0_44, %c0_45] : memref<4x128x32xbf16, #tpu.memory_space<vmem>>, vector<1x128x32xbf16>
    %82 = vector.shape_cast %81 : vector<1x128x32xbf16> to vector<128x32xbf16>
    %cst_46 = arith.constant dense<0.000000e+00> : vector<16x32xf32>
    %83 = tpu.matmul %28, %82, %cst_46 {dimension_numbers = #tpu.dot_dimension_numbers<[1], [0], [0], [1], [0, 0, 1, 1], [], []>} : vector<16x128xbf16>, vector<128x32xbf16>, vector<16x32xf32> -> vector<16x32xf32>
    %c3_47 = arith.constant 3 : index
    %c0_48 = arith.constant 0 : index
    %c0_49 = arith.constant 0 : index
    %84 = vector.load %arg6[%c3_47, %c0_48, %c0_49] : memref<4x128x32xbf16, #tpu.memory_space<vmem>>, vector<1x128x32xbf16>
    %85 = vector.shape_cast %84 : vector<1x128x32xbf16> to vector<128x32xbf16>
    %cst_50 = arith.constant dense<0.000000e+00> : vector<16x32xf32>
    %86 = tpu.matmul %28, %85, %cst_50 {dimension_numbers = #tpu.dot_dimension_numbers<[1], [0], [0], [1], [0, 0, 1, 1], [], []>} : vector<16x128xbf16>, vector<128x32xbf16>, vector<16x32xf32> -> vector<16x32xf32>
    %87 = vector.shape_cast %77 : vector<16x32xf32> to vector<1x16x32xf32>
    %88 = vector.shape_cast %80 : vector<16x32xf32> to vector<1x16x32xf32>
    %89 = vector.shape_cast %83 : vector<16x32xf32> to vector<1x16x32xf32>
    %90 = vector.shape_cast %86 : vector<16x32xf32> to vector<1x16x32xf32>
    %91 = tpu.concatenate %87, %88, %89, %90 in 0 : vector<1x16x32xf32>, vector<1x16x32xf32>, vector<1x16x32xf32>, vector<1x16x32xf32> -> vector<4x16x32xf32>
    %c0_51 = arith.constant 0 : index
    %c0_52 = arith.constant 0 : index
    %c0_53 = arith.constant 0 : index
    %92 = vector.load %arg9[%c0_51, %c0_52, %c0_53] : memref<4x1x32xf32, #tpu.memory_space<vmem>>, vector<4x1x32xf32>
    %93 = vector.broadcast %92 : vector<4x1x32xf32> to vector<4x16x32xf32>
    %94 = arith.addf %91, %93 : vector<4x16x32xf32>
    %95 = arith.truncf %94 : vector<4x16x32xf32> to vector<4x16x32xbf16>
    %c0_54 = arith.constant 0 : index
    %c0_55 = arith.constant 0 : index
    %c0_56 = arith.constant 0 : index
    %96 = vector.load %arg7[%c0_54, %c0_55, %c0_56] : memref<4x128x32xbf16, #tpu.memory_space<vmem>>, vector<1x128x32xbf16>
    %97 = vector.shape_cast %96 : vector<1x128x32xbf16> to vector<128x32xbf16>
    %cst_57 = arith.constant dense<0.000000e+00> : vector<16x32xf32>
    %98 = tpu.matmul %28, %97, %cst_57 {dimension_numbers = #tpu.dot_dimension_numbers<[1], [0], [0], [1], [0, 0, 1, 1], [], []>} : vector<16x128xbf16>, vector<128x32xbf16>, vector<16x32xf32> -> vector<16x32xf32>
    %c1_58 = arith.constant 1 : index
    %c0_59 = arith.constant 0 : index
    %c0_60 = arith.constant 0 : index
    %99 = vector.load %arg7[%c1_58, %c0_59, %c0_60] : memref<4x128x32xbf16, #tpu.memory_space<vmem>>, vector<1x128x32xbf16>
    %100 = vector.shape_cast %99 : vector<1x128x32xbf16> to vector<128x32xbf16>
    %cst_61 = arith.constant dense<0.000000e+00> : vector<16x32xf32>
    %101 = tpu.matmul %28, %100, %cst_61 {dimension_numbers = #tpu.dot_dimension_numbers<[1], [0], [0], [1], [0, 0, 1, 1], [], []>} : vector<16x128xbf16>, vector<128x32xbf16>, vector<16x32xf32> -> vector<16x32xf32>
    %c2_62 = arith.constant 2 : index
    %c0_63 = arith.constant 0 : index
    %c0_64 = arith.constant 0 : index
    %102 = vector.load %arg7[%c2_62, %c0_63, %c0_64] : memref<4x128x32xbf16, #tpu.memory_space<vmem>>, vector<1x128x32xbf16>
    %103 = vector.shape_cast %102 : vector<1x128x32xbf16> to vector<128x32xbf16>
    %cst_65 = arith.constant dense<0.000000e+00> : vector<16x32xf32>
    %104 = tpu.matmul %28, %103, %cst_65 {dimension_numbers = #tpu.dot_dimension_numbers<[1], [0], [0], [1], [0, 0, 1, 1], [], []>} : vector<16x128xbf16>, vector<128x32xbf16>, vector<16x32xf32> -> vector<16x32xf32>
    %c3_66 = arith.constant 3 : index
    %c0_67 = arith.constant 0 : index
    %c0_68 = arith.constant 0 : index
    %105 = vector.load %arg7[%c3_66, %c0_67, %c0_68] : memref<4x128x32xbf16, #tpu.memory_space<vmem>>, vector<1x128x32xbf16>
    %106 = vector.shape_cast %105 : vector<1x128x32xbf16> to vector<128x32xbf16>
    %cst_69 = arith.constant dense<0.000000e+00> : vector<16x32xf32>
    %107 = tpu.matmul %28, %106, %cst_69 {dimension_numbers = #tpu.dot_dimension_numbers<[1], [0], [0], [1], [0, 0, 1, 1], [], []>} : vector<16x128xbf16>, vector<128x32xbf16>, vector<16x32xf32> -> vector<16x32xf32>
    %108 = vector.shape_cast %98 : vector<16x32xf32> to vector<1x16x32xf32>
    %109 = vector.shape_cast %101 : vector<16x32xf32> to vector<1x16x32xf32>
    %110 = vector.shape_cast %104 : vector<16x32xf32> to vector<1x16x32xf32>
    %111 = vector.shape_cast %107 : vector<16x32xf32> to vector<1x16x32xf32>
    %112 = tpu.concatenate %108, %109, %110, %111 in 0 : vector<1x16x32xf32>, vector<1x16x32xf32>, vector<1x16x32xf32>, vector<1x16x32xf32> -> vector<4x16x32xf32>
    %c0_70 = arith.constant 0 : index
    %c0_71 = arith.constant 0 : index
    %c0_72 = arith.constant 0 : index
    %113 = vector.load %arg10[%c0_70, %c0_71, %c0_72] : memref<4x1x32xf32, #tpu.memory_space<vmem>>, vector<4x1x32xf32>
    %114 = vector.broadcast %113 : vector<4x1x32xf32> to vector<4x16x32xf32>
    %115 = arith.addf %112, %114 : vector<4x16x32xf32>
    %116 = arith.truncf %115 : vector<4x16x32xf32> to vector<4x16x32xbf16>
    "tpu.trace_start"() <{level = 10 : i32, message = "hqd,hkd->hqk"}> : () -> ()
    %cst_73 = arith.constant dense<0.000000e+00> : vector<4x8x16xf32>
    %117 = tpu.matmul %74, %95, %cst_73 {dimension_numbers = #tpu.dot_dimension_numbers<[2], [2], [1], [1], [0, 0, 0, 1, 1, 1], [0], [0]>} : vector<4x8x32xbf16>, vector<4x16x32xbf16>, vector<4x8x16xf32> -> vector<4x8x16xf32>
    "tpu.trace_stop"() : () -> ()
    %c0_74 = arith.constant 0 : index
    %c0_75 = arith.constant 0 : index
    %c0_76 = arith.constant 0 : index
    %118 = vector.load %arg4[%c0_74, %c0_75, %c0_76] : memref<1x1x16xf32, #tpu.memory_space<vmem>>, vector<1x1x16xf32>
    %119 = vector.shape_cast %118 : vector<1x1x16xf32> to vector<1x16xf32>
    %cst_77 = arith.constant 1.000000e+00 : f32
    %120 = vector.broadcast %cst_77 : f32 to vector<1x16xf32>
    %121 = arith.subf %119, %120 : vector<1x16xf32>
    %cst_78 = arith.constant 1.000000e+09 : f32
    %122 = vector.broadcast %cst_78 : f32 to vector<1x16xf32>
    %123 = arith.mulf %121, %122 : vector<1x16xf32>
    %124 = vector.shape_cast %123 : vector<1x16xf32> to vector<1x1x16xf32>
    %125 = vector.broadcast %124 : vector<1x1x16xf32> to vector<4x8x16xf32>
    %126 = arith.addf %117, %125 : vector<4x8x16xf32>
    %cst_79 = arith.constant dense<0xFF800000> : vector<4x8xf32>
    %127 = vector.multi_reduction <maximumf>, %126, %cst_79 [2] : vector<4x8x16xf32> to vector<4x8xf32>
    %128 = vector.shape_cast %127 : vector<4x8xf32> to vector<4x8x1xf32>
    %129 = vector.broadcast %128 : vector<4x8x1xf32> to vector<4x8x16xf32>
    %130 = arith.subf %126, %129 : vector<4x8x16xf32>
    %131 = math.exp %130 : vector<4x8x16xf32>
    %cst_80 = arith.constant dense<0.000000e+00> : vector<4x8xf32>
    %132 = vector.multi_reduction <add>, %131, %cst_80 [2] : vector<4x8x16xf32> to vector<4x8xf32>
    %133 = vector.shape_cast %132 : vector<4x8xf32> to vector<4x8x1xf32>
    %134 = tpu.reciprocal %133 {approx = true} : vector<4x8x1xf32> -> vector<4x8x1xf32>
    %135 = vector.broadcast %134 : vector<4x8x1xf32> to vector<4x8x16xf32>
    %136 = arith.mulf %131, %135 : vector<4x8x16xf32>
    %137 = arith.truncf %136 : vector<4x8x16xf32> to vector<4x8x16xbf16>
    "tpu.trace_start"() <{level = 10 : i32, message = "hqk,hkd->hqd"}> : () -> ()
    %cst_81 = arith.constant dense<0.000000e+00> : vector<4x8x32xf32>
    %138 = tpu.matmul %137, %116, %cst_81 {dimension_numbers = #tpu.dot_dimension_numbers<[2], [1], [1], [2], [0, 0, 0, 1, 1, 2], [0], [0]>} : vector<4x8x16xbf16>, vector<4x16x32xbf16>, vector<4x8x32xf32> -> vector<4x8x32xf32>
    "tpu.trace_stop"() : () -> ()
    %139 = arith.truncf %138 : vector<4x8x32xf32> to vector<4x8x32xbf16>
    %c0_82 = arith.constant 0 : index
    %c0_83 = arith.constant 0 : index
    %c0_84 = arith.constant 0 : index
    %140 = vector.load %arg11[%c0_82, %c0_83, %c0_84] : memref<4x32x128xbf16, #tpu.memory_space<vmem>>, vector<4x32x128xbf16>
    "tpu.trace_start"() <{level = 10 : i32, message = "hqd,hdn->hqn"}> : () -> ()
    %cst_85 = arith.constant dense<0.000000e+00> : vector<4x8x128xf32>
    %141 = tpu.matmul %139, %140, %cst_85 {dimension_numbers = #tpu.dot_dimension_numbers<[2], [1], [1], [2], [0, 0, 0, 1, 1, 2], [0], [0]>} : vector<4x8x32xbf16>, vector<4x32x128xbf16>, vector<4x8x128xf32> -> vector<4x8x128xf32>
    "tpu.trace_stop"() : () -> ()
    %cst_86 = arith.constant dense<0.000000e+00> : vector<8x128xf32>
    %142 = vector.multi_reduction <add>, %141, %cst_86 [0] : vector<4x8x128xf32> to vector<8x128xf32>
    %c0_87 = arith.constant 0 : index
    %c0_88 = arith.constant 0 : index
    %143 = vector.load %arg12[%c0_87, %c0_88] : memref<1x128xf32, #tpu.memory_space<vmem>>, vector<1x128xf32>
    %144 = vector.broadcast %143 : vector<1x128xf32> to vector<8x128xf32>
    %145 = arith.addf %142, %144 : vector<8x128xf32>
    %146 = arith.addf %3, %145 : vector<8x128xf32>
    %c0_89 = arith.constant 0 : index
    %c0_90 = arith.constant 0 : index
    %147 = vector.load %arg19[%c0_89, %c0_90] : memref<1x128xf32, #tpu.memory_space<vmem>>, vector<1x128xf32>
    %cst_91 = arith.constant dense<0.000000e+00> : vector<8xf32>
    %148 = vector.multi_reduction <add>, %146, %cst_91 [1] : vector<8x128xf32> to vector<8xf32>
    %149 = vector.shape_cast %148 : vector<8xf32> to vector<8x1xf32>
    %cst_92 = arith.constant 1.280000e+02 : f32
    %150 = vector.broadcast %cst_92 : f32 to vector<8x1xf32>
    %151 = arith.divf %149, %150 : vector<8x1xf32>
    %152 = vector.broadcast %151 : vector<8x1xf32> to vector<8x128xf32>
    %153 = arith.subf %146, %152 : vector<8x128xf32>
    %154 = arith.mulf %153, %153 : vector<8x128xf32>
    %cst_93 = arith.constant dense<0.000000e+00> : vector<8xf32>
    %155 = vector.multi_reduction <add>, %154, %cst_93 [1] : vector<8x128xf32> to vector<8xf32>
    %156 = vector.shape_cast %155 : vector<8xf32> to vector<8x1xf32>
    %cst_94 = arith.constant 0.00787401571 : f32
    %157 = vector.broadcast %cst_94 : f32 to vector<8x1xf32>
    %158 = arith.mulf %156, %157 : vector<8x1xf32>
    %159 = vector.broadcast %151 : vector<8x1xf32> to vector<8x128xf32>
    %160 = arith.subf %146, %159 : vector<8x128xf32>
    %161 = math.sqrt %158 : vector<8x1xf32>
    %cst_95 = arith.constant 9.99999997E-7 : f32
    %162 = vector.broadcast %cst_95 : f32 to vector<8x1xf32>
    %163 = arith.addf %161, %162 : vector<8x1xf32>
    %164 = vector.broadcast %163 : vector<8x1xf32> to vector<8x128xf32>
    %165 = arith.divf %160, %164 : vector<8x128xf32>
    %166 = vector.broadcast %147 : vector<1x128xf32> to vector<8x128xf32>
    %167 = arith.mulf %166, %165 : vector<8x128xf32>
    %c0_96 = arith.constant 0 : index
    %c0_97 = arith.constant 0 : index
    %168 = vector.load %arg20[%c0_96, %c0_97] : memref<1x128xf32, #tpu.memory_space<vmem>>, vector<1x128xf32>
    %169 = vector.broadcast %168 : vector<1x128xf32> to vector<8x128xf32>
    %170 = arith.addf %167, %169 : vector<8x128xf32>
    %171 = arith.truncf %170 : vector<8x128xf32> to vector<8x128xbf16>
    %c0_98 = arith.constant 0 : index
    %c0_99 = arith.constant 0 : index
    %172 = vector.load %arg13[%c0_98, %c0_99] : memref<128x256xbf16, #tpu.memory_space<vmem>>, vector<128x256xbf16>
    %cst_100 = arith.constant dense<0.000000e+00> : vector<8x256xf32>
    %173 = tpu.matmul %171, %172, %cst_100 {dimension_numbers = #tpu.dot_dimension_numbers<[1], [0], [0], [1], [0, 0, 1, 1], [], []>} : vector<8x128xbf16>, vector<128x256xbf16>, vector<8x256xf32> -> vector<8x256xf32>
    %c0_101 = arith.constant 0 : index
    %c0_102 = arith.constant 0 : index
    %174 = vector.load %arg14[%c0_101, %c0_102] : memref<1x256xf32, #tpu.memory_space<vmem>>, vector<1x256xf32>
    %175 = vector.broadcast %174 : vector<1x256xf32> to vector<8x256xf32>
    %176 = arith.addf %173, %175 : vector<8x256xf32>
    %cst_103 = arith.constant 0.000000e+00 : f32
    %177 = vector.broadcast %cst_103 : f32 to vector<8x256xf32>
    %178 = arith.maximumf %176, %177 : vector<8x256xf32>
    %179 = arith.truncf %178 : vector<8x256xf32> to vector<8x256xbf16>
    %c0_104 = arith.constant 0 : index
    %c0_105 = arith.constant 0 : index
    %180 = vector.load %arg15[%c0_104, %c0_105] : memref<256x128xbf16, #tpu.memory_space<vmem>>, vector<256x128xbf16>
    %cst_106 = arith.constant dense<0.000000e+00> : vector<8x128xf32>
    %181 = tpu.matmul %179, %180, %cst_106 {dimension_numbers = #tpu.dot_dimension_numbers<[1], [0], [0], [1], [0, 0, 1, 1], [], []>} : vector<8x256xbf16>, vector<256x128xbf16>, vector<8x128xf32> -> vector<8x128xf32>
    %c0_107 = arith.constant 0 : index
    %c0_108 = arith.constant 0 : index
    %182 = vector.load %arg16[%c0_107, %c0_108] : memref<1x128xf32, #tpu.memory_space<vmem>>, vector<1x128xf32>
    %183 = vector.broadcast %182 : vector<1x128xf32> to vector<8x128xf32>
    %184 = arith.addf %181, %183 : vector<8x128xf32>
    %185 = arith.addf %146, %184 : vector<8x128xf32>
    %c0_109 = arith.constant 0 : index
    %c0_110 = arith.constant 0 : index
    %c0_111 = arith.constant 0 : index
    %186 = vector.load %arg21[%c0_109, %c0_110, %c0_111] : memref<1x8x128xf32, #tpu.memory_space<vmem>>, vector<1x8x128xf32>
    %187 = vector.shape_cast %186 : vector<1x8x128xf32> to vector<8x128xf32>
    %188 = vector.shape_cast %185 : vector<8x128xf32> to vector<1x8x128xf32>
    tpu.vector_store %arg21[%c0_109, %c0_110, %c0_111], %188 {strides = array<i32>} : memref<1x8x128xf32, #tpu.memory_space<vmem>>, vector<1x8x128xf32>,
    return
  }
  func.func @transform_0(%arg0: i32, %arg1: i32) -> (i32, i32, i32) {
    %c0_i32 = arith.constant 0 : i32
    %c0_i32_0 = arith.constant 0 : i32
    %c0_i32_1 = arith.constant 0 : i32
    return %arg0, %c0_i32, %c0_i32_0 : i32, i32, i32
  }
  func.func @transform_1(%arg0: i32, %arg1: i32) -> (i32, i32, i32) {
    %c0_i32 = arith.constant 0 : i32
    %c0_i32_0 = arith.constant 0 : i32
    return %arg0, %arg1, %c0_i32 : i32, i32, i32
  }
  func.func @transform_2(%arg0: i32, %arg1: i32) -> (i32, i32, i32) {
    %c0_i32 = arith.constant 0 : i32
    %c0_i32_0 = arith.constant 0 : i32
    %c0_i32_1 = arith.constant 0 : i32
    return %arg0, %c0_i32, %c0_i32_0 : i32, i32, i32
  }
  func.func @transform_3(%arg0: i32, %arg1: i32) -> (i32, i32, i32) {
    %c0_i32 = arith.constant 0 : i32
    %c0_i32_0 = arith.constant 0 : i32
    %c0_i32_1 = arith.constant 0 : i32
    %c0_i32_2 = arith.constant 0 : i32
    return %c0_i32, %c0_i32_0, %c0_i32_1 : i32, i32, i32
  }
  func.func @transform_4(%arg0: i32, %arg1: i32) -> (i32, i32, i32) {
    %c0_i32 = arith.constant 0 : i32
    %c0_i32_0 = arith.constant 0 : i32
    %c0_i32_1 = arith.constant 0 : i32
    %c0_i32_2 = arith.constant 0 : i32
    return %c0_i32, %c0_i32_0, %c0_i32_1 : i32, i32, i32
  }
  func.func @transform_5(%arg0: i32, %arg1: i32) -> (i32, i32, i32) {
    %c0_i32 = arith.constant 0 : i32
    %c0_i32_0 = arith.constant 0 : i32
    %c0_i32_1 = arith.constant 0 : i32
    %c0_i32_2 = arith.constant 0 : i32
    return %c0_i32, %c0_i32_0, %c0_i32_1 : i32, i32, i32
  }
  func.func @transform_6(%arg0: i32, %arg1: i32) -> (i32, i32, i32) {
    %c0_i32 = arith.constant 0 : i32
    %c0_i32_0 = arith.constant 0 : i32
    %c0_i32_1 = arith.constant 0 : i32
    %c0_i32_2 = arith.constant 0 : i32
    return %c0_i32, %c0_i32_0, %c0_i32_1 : i32, i32, i32
  }
  func.func @transform_7(%arg0: i32, %arg1: i32) -> (i32, i32, i32) {
    %c0_i32 = arith.constant 0 : i32
    %c0_i32_0 = arith.constant 0 : i32
    %c0_i32_1 = arith.constant 0 : i32
    %c0_i32_2 = arith.constant 0 : i32
    return %c0_i32, %c0_i32_0, %c0_i32_1 : i32, i32, i32
  }
  func.func @transform_8(%arg0: i32, %arg1: i32) -> (i32, i32, i32) {
    %c0_i32 = arith.constant 0 : i32
    %c0_i32_0 = arith.constant 0 : i32
    %c0_i32_1 = arith.constant 0 : i32
    %c0_i32_2 = arith.constant 0 : i32
    return %c0_i32, %c0_i32_0, %c0_i32_1 : i32, i32, i32
  }
  func.func @transform_9(%arg0: i32, %arg1: i32) -> (i32, i32, i32) {
    %c0_i32 = arith.constant 0 : i32
    %c0_i32_0 = arith.constant 0 : i32
    %c0_i32_1 = arith.constant 0 : i32
    %c0_i32_2 = arith.constant 0 : i32
    return %c0_i32, %c0_i32_0, %c0_i32_1 : i32, i32, i32
  }
  func.func @transform_10(%arg0: i32, %arg1: i32) -> (i32, i32) {
    %c0_i32 = arith.constant 0 : i32
    %c0_i32_0 = arith.constant 0 : i32
    %c0_i32_1 = arith.constant 0 : i32
    return %c0_i32, %c0_i32_0 : i32, i32
  }
  func.func @transform_11(%arg0: i32, %arg1: i32) -> (i32, i32) {
    %c0_i32 = arith.constant 0 : i32
    %c0_i32_0 = arith.constant 0 : i32
    %c0_i32_1 = arith.constant 0 : i32
    return %c0_i32, %c0_i32_0 : i32, i32
  }
  func.func @transform_12(%arg0: i32, %arg1: i32) -> (i32, i32) {
    %c0_i32 = arith.constant 0 : i32
    %c0_i32_0 = arith.constant 0 : i32
    %c0_i32_1 = arith.constant 0 : i32
    return %c0_i32, %c0_i32_0 : i32, i32
  }
  func.func @transform_13(%arg0: i32, %arg1: i32) -> (i32, i32) {
    %c0_i32 = arith.constant 0 : i32
    %c0_i32_0 = arith.constant 0 : i32
    %c0_i32_1 = arith.constant 0 : i32
    return %c0_i32, %c0_i32_0 : i32, i32
  }
  func.func @transform_14(%arg0: i32, %arg1: i32) -> (i32, i32) {
    %c0_i32 = arith.constant 0 : i32
    %c0_i32_0 = arith.constant 0 : i32
    %c0_i32_1 = arith.constant 0 : i32
    return %c0_i32, %c0_i32_0 : i32, i32
  }
  func.func @transform_15(%arg0: i32, %arg1: i32) -> (i32, i32) {
    %c0_i32 = arith.constant 0 : i32
    %c0_i32_0 = arith.constant 0 : i32
    %c0_i32_1 = arith.constant 0 : i32
    return %c0_i32, %c0_i32_0 : i32, i32
  }
  func.func @transform_16(%arg0: i32, %arg1: i32) -> (i32, i32) {
    %c0_i32 = arith.constant 0 : i32
    %c0_i32_0 = arith.constant 0 : i32
    %c0_i32_1 = arith.constant 0 : i32
    return %c0_i32, %c0_i32_0 : i32, i32
  }
  func.func @transform_17(%arg0: i32, %arg1: i32) -> (i32, i32) {
    %c0_i32 = arith.constant 0 : i32
    %c0_i32_0 = arith.constant 0 : i32
    %c0_i32_1 = arith.constant 0 : i32
    return %c0_i32, %c0_i32_0 : i32, i32
  }
  func.func @transform_18(%arg0: i32, %arg1: i32) -> (i32, i32) {
    %c0_i32 = arith.constant 0 : i32
    %c0_i32_0 = arith.constant 0 : i32
    %c0_i32_1 = arith.constant 0 : i32
    return %c0_i32, %c0_i32_0 : i32, i32
  }
  func.func @transform_19(%arg0: i32, %arg1: i32) -> (i32, i32, i32) {
    %c0_i32 = arith.constant 0 : i32
    %c0_i32_0 = arith.constant 0 : i32
    return %arg0, %arg1, %c0_i32 : i32, i32, i32
  }
}

module attributes {stable_mosaic.version = 11 : i64} {
  func.func @_encoder_block_kernel(%arg0: i32, %arg1: i32, %arg2: memref<1x16x128xf32, #tpu.memory_space<vmem>>, %arg3: memref<1x8x128xf32, #tpu.memory_space<vmem>>, %arg4: memref<1x1x16xf32, #tpu.memory_space<vmem>>, %arg5: memref<4x128x32xbf16, #tpu.memory_space<vmem>>, %arg6: memref<4x128x32xbf16, #tpu.memory_space<vmem>>, %arg7: memref<4x128x32xbf16, #tpu.memory_space<vmem>>, %arg8: memref<4x1x32xf32, #tpu.memory_space<vmem>>, %arg9: memref<4x1x32xf32, #tpu.memory_space<vmem>>, %arg10: memref<4x1x32xf32, #tpu.memory_space<vmem>>, %arg11: memref<4x32x128xbf16, #tpu.memory_space<vmem>>, %arg12: memref<1x128xf32, #tpu.memory_space<vmem>>, %arg13: memref<128x256xbf16, #tpu.memory_space<vmem>>, %arg14: memref<1x256xf32, #tpu.memory_space<vmem>>, %arg15: memref<256x128xbf16, #tpu.memory_space<vmem>>, %arg16: memref<1x128xf32, #tpu.memory_space<vmem>>, %arg17: memref<1x128xf32, #tpu.memory_space<vmem>>, %arg18: memref<1x128xf32, #tpu.memory_space<vmem>>, %arg19: memref<1x128xf32, #tpu.memory_space<vmem>>, %arg20: memref<1x128xf32, #tpu.memory_space<vmem>>, %arg21: memref<1x8x128xf32, #tpu.memory_space<vmem>>) attributes {dimension_semantics = [#tpu.dimension_semantics<parallel>, #tpu.dimension_semantics<parallel>], iteration_bounds = array<i64: 2, 2>, scalar_prefetch = 0 : i64, scratch_operands = 0 : i64, tpu.core_type = #tpu.core_type<tc>, window_params = [{transform_indices = @transform_0, window_bounds = array<i64: 1, 16, 128>}, {transform_indices = @transform_1, window_bounds = array<i64: 1, 8, 128>}, {transform_indices = @transform_2, window_bounds = array<i64: 1, 1, 16>}, {pipeline_mode = #tpu.pipeline_mode<synchronous>, transform_indices = @transform_3, window_bounds = array<i64: 4, 128, 32>}, {pipeline_mode = #tpu.pipeline_mode<synchronous>, transform_indices = @transform_4, window_bounds = array<i64: 4, 128, 32>}, {pipeline_mode = #tpu.pipeline_mode<synchronous>, transform_indices = @transform_5, window_bounds = array<i64: 4, 128, 32>}, {pipeline_mode = #tpu.pipeline_mode<synchronous>, transform_indices = @transform_6, window_bounds = array<i64: 4, 1, 32>}, {pipeline_mode = #tpu.pipeline_mode<synchronous>, transform_indices = @transform_7, window_bounds = array<i64: 4, 1, 32>}, {pipeline_mode = #tpu.pipeline_mode<synchronous>, transform_indices = @transform_8, window_bounds = array<i64: 4, 1, 32>}, {pipeline_mode = #tpu.pipeline_mode<synchronous>, transform_indices = @transform_9, window_bounds = array<i64: 4, 32, 128>}, {pipeline_mode = #tpu.pipeline_mode<synchronous>, transform_indices = @transform_10, window_bounds = array<i64: 1, 128>}, {pipeline_mode = #tpu.pipeline_mode<synchronous>, transform_indices = @transform_11, window_bounds = array<i64: 128, 256>}, {pipeline_mode = #tpu.pipeline_mode<synchronous>, transform_indices = @transform_12, window_bounds = array<i64: 1, 256>}, {pipeline_mode = #tpu.pipeline_mode<synchronous>, transform_indices = @transform_13, window_bounds = array<i64: 256, 128>}, {pipeline_mode = #tpu.pipeline_mode<synchronous>, transform_indices = @transform_14, window_bounds = array<i64: 1, 128>}, {pipeline_mode = #tpu.pipeline_mode<synchronous>, transform_indices = @transform_15, window_bounds = array<i64: 1, 128>}, {pipeline_mode = #tpu.pipeline_mode<synchronous>, transform_indices = @transform_16, window_bounds = array<i64: 1, 128>}, {pipeline_mode = #tpu.pipeline_mode<synchronous>, transform_indices = @transform_17, window_bounds = array<i64: 1, 128>}, {pipeline_mode = #tpu.pipeline_mode<synchronous>, transform_indices = @transform_18, window_bounds = array<i64: 1, 128>}, {transform_indices = @transform_19, window_bounds = array<i64: 1, 8, 128>}]} {
    %c0 = arith.constant 0 : index
    %c0_0 = arith.constant 0 : index
    %c0_1 = arith.constant 0 : index
    %0 = vector.load %arg2[%c0, %c0_0, %c0_1] : memref<1x16x128xf32, #tpu.memory_space<vmem>>, vector<1x16x128xf32>
    %1 = vector.shape_cast %0 : vector<1x16x128xf32> to vector<16x128xf32>
    %c0_2 = arith.constant 0 : index
    %c0_3 = arith.constant 0 : index
    %c0_4 = arith.constant 0 : index
    %2 = vector.load %arg3[%c0_2, %c0_3, %c0_4] : memref<1x8x128xf32, #tpu.memory_space<vmem>>, vector<1x8x128xf32>
    %3 = vector.shape_cast %2 : vector<1x8x128xf32> to vector<8x128xf32>
    %c0_5 = arith.constant 0 : index
    %c0_6 = arith.constant 0 : index
    %4 = vector.load %arg17[%c0_5, %c0_6] : memref<1x128xf32, #tpu.memory_space<vmem>>, vector<1x128xf32>
    %c0_7 = arith.constant 0 : index
    %c0_8 = arith.constant 0 : index
    %5 = vector.load %arg18[%c0_7, %c0_8] : memref<1x128xf32, #tpu.memory_space<vmem>>, vector<1x128xf32>
    %cst = arith.constant dense<0.000000e+00> : vector<16xf32>
    %6 = vector.multi_reduction <add>, %1, %cst [1] : vector<16x128xf32> to vector<16xf32>
    %7 = vector.shape_cast %6 : vector<16xf32> to vector<16x1xf32>
    %cst_9 = arith.constant 1.280000e+02 : f32
    %8 = vector.broadcast %cst_9 : f32 to vector<16x1xf32>
    %9 = arith.divf %7, %8 : vector<16x1xf32>
    %10 = vector.broadcast %9 : vector<16x1xf32> to vector<16x128xf32>
    %11 = arith.subf %1, %10 : vector<16x128xf32>
    %12 = arith.mulf %11, %11 : vector<16x128xf32>
    %cst_10 = arith.constant dense<0.000000e+00> : vector<16xf32>
    %13 = vector.multi_reduction <add>, %12, %cst_10 [1] : vector<16x128xf32> to vector<16xf32>
    %14 = vector.shape_cast %13 : vector<16xf32> to vector<16x1xf32>
    %cst_11 = arith.constant 0.00787401571 : f32
    %15 = vector.broadcast %cst_11 : f32 to vector<16x1xf32>
    %16 = arith.mulf %14, %15 : vector<16x1xf32>
    %17 = vector.broadcast %9 : vector<16x1xf32> to vector<16x128xf32>
    %18 = arith.subf %1, %17 : vector<16x128xf32>
    %19 = math.sqrt %16 : vector<16x1xf32>
    %cst_12 = arith.constant 9.99999997E-7 : f32
    %20 = vector.broadcast %cst_12 : f32 to vector<16x1xf32>
    %21 = arith.addf %19, %20 : vector<16x1xf32>
    %22 = vector.broadcast %21 : vector<16x1xf32> to vector<16x128xf32>
    %23 = arith.divf %18, %22 : vector<16x128xf32>
    %24 = vector.broadcast %4 : vector<1x128xf32> to vector<16x128xf32>
    %25 = arith.mulf %24, %23 : vector<16x128xf32>
    %26 = vector.broadcast %5 : vector<1x128xf32> to vector<16x128xf32>
    %27 = arith.addf %25, %26 : vector<16x128xf32>
    %28 = arith.truncf %27 : vector<16x128xf32> to vector<16x128xbf16>
    %cst_13 = arith.constant dense<0.000000e+00> : vector<8xf32>
    %29 = vector.multi_reduction <add>, %3, %cst_13 [1] : vector<8x128xf32> to vector<8xf32>
    %30 = vector.shape_cast %29 : vector<8xf32> to vector<8x1xf32>
    %cst_14 = arith.constant 1.280000e+02 : f32
    %31 = vector.broadcast %cst_14 : f32 to vector<8x1xf32>
    %32 = arith.divf %30, %31 : vector<8x1xf32>
    %33 = vector.broadcast %32 : vector<8x1xf32> to vector<8x128xf32>
    %34 = arith.subf %3, %33 : vector<8x128xf32>
    %35 = arith.mulf %34, %34 : vector<8x128xf32>
    %cst_15 = arith.constant dense<0.000000e+00> : vector<8xf32>
    %36 = vector.multi_reduction <add>, %35, %cst_15 [1] : vector<8x128xf32> to vector<8xf32>
    %37 = vector.shape_cast %36 : vector<8xf32> to vector<8x1xf32>
    %cst_16 = arith.constant 0.00787401571 : f32
    %38 = vector.broadcast %cst_16 : f32 to vector<8x1xf32>
    %39 = arith.mulf %37, %38 : vector<8x1xf32>
    %40 = vector.broadcast %32 : vector<8x1xf32> to vector<8x128xf32>
    %41 = arith.subf %3, %40 : vector<8x128xf32>
    %42 = math.sqrt %39 : vector<8x1xf32>
    %cst_17 = arith.constant 9.99999997E-7 : f32
    %43 = vector.broadcast %cst_17 : f32 to vector<8x1xf32>
    %44 = arith.addf %42, %43 : vector<8x1xf32>
    %45 = vector.broadcast %44 : vector<8x1xf32> to vector<8x128xf32>
    %46 = arith.divf %41, %45 : vector<8x128xf32>
    %47 = vector.broadcast %4 : vector<1x128xf32> to vector<8x128xf32>
    %48 = arith.mulf %47, %46 : vector<8x128xf32>
    %49 = vector.broadcast %5 : vector<1x128xf32> to vector<8x128xf32>
    %50 = arith.addf %48, %49 : vector<8x128xf32>
    %51 = arith.truncf %50 : vector<8x128xf32> to vector<8x128xbf16>
    %c0_18 = arith.constant 0 : index
    %c0_19 = arith.constant 0 : index
    %c0_20 = arith.constant 0 : index
    %52 = vector.load %arg5[%c0_18, %c0_19, %c0_20] : memref<4x128x32xbf16, #tpu.memory_space<vmem>>, vector<1x128x32xbf16>
    %53 = vector.shape_cast %52 : vector<1x128x32xbf16> to vector<128x32xbf16>
    %cst_21 = arith.constant dense<0.000000e+00> : vector<8x32xf32>
    %54 = tpu.matmul %51, %53, %cst_21 {dimension_numbers = #tpu.dot_dimension_numbers<[1], [0], [0], [1], [0, 0, 1, 1], [], []>} : vector<8x128xbf16>, vector<128x32xbf16>, vector<8x32xf32> -> vector<8x32xf32>
    %c1 = arith.constant 1 : index
    %c0_22 = arith.constant 0 : index
    %c0_23 = arith.constant 0 : index
    %55 = vector.load %arg5[%c1, %c0_22, %c0_23] : memref<4x128x32xbf16, #tpu.memory_space<vmem>>, vector<1x128x32xbf16>
    %56 = vector.shape_cast %55 : vector<1x128x32xbf16> to vector<128x32xbf16>
    %cst_24 = arith.constant dense<0.000000e+00> : vector<8x32xf32>
    %57 = tpu.matmul %51, %56, %cst_24 {dimension_numbers = #tpu.dot_dimension_numbers<[1], [0], [0], [1], [0, 0, 1, 1], [], []>} : vector<8x128xbf16>, vector<128x32xbf16>, vector<8x32xf32> -> vector<8x32xf32>
    %c2 = arith.constant 2 : index
    %c0_25 = arith.constant 0 : index
    %c0_26 = arith.constant 0 : index
    %58 = vector.load %arg5[%c2, %c0_25, %c0_26] : memref<4x128x32xbf16, #tpu.memory_space<vmem>>, vector<1x128x32xbf16>
    %59 = vector.shape_cast %58 : vector<1x128x32xbf16> to vector<128x32xbf16>
    %cst_27 = arith.constant dense<0.000000e+00> : vector<8x32xf32>
    %60 = tpu.matmul %51, %59, %cst_27 {dimension_numbers = #tpu.dot_dimension_numbers<[1], [0], [0], [1], [0, 0, 1, 1], [], []>} : vector<8x128xbf16>, vector<128x32xbf16>, vector<8x32xf32> -> vector<8x32xf32>
    %c3 = arith.constant 3 : index
    %c0_28 = arith.constant 0 : index
    %c0_29 = arith.constant 0 : index
    %61 = vector.load %arg5[%c3, %c0_28, %c0_29] : memref<4x128x32xbf16, #tpu.memory_space<vmem>>, vector<1x128x32xbf16>
    %62 = vector.shape_cast %61 : vector<1x128x32xbf16> to vector<128x32xbf16>
    %cst_30 = arith.constant dense<0.000000e+00> : vector<8x32xf32>
    %63 = tpu.matmul %51, %62, %cst_30 {dimension_numbers = #tpu.dot_dimension_numbers<[1], [0], [0], [1], [0, 0, 1, 1], [], []>} : vector<8x128xbf16>, vector<128x32xbf16>, vector<8x32xf32> -> vector<8x32xf32>
    %64 = vector.shape_cast %54 : vector<8x32xf32> to vector<1x8x32xf32>
    %65 = vector.shape_cast %57 : vector<8x32xf32> to vector<1x8x32xf32>
    %66 = vector.shape_cast %60 : vector<8x32xf32> to vector<1x8x32xf32>
    %67 = vector.shape_cast %63 : vector<8x32xf32> to vector<1x8x32xf32>
    %68 = tpu.concatenate %64, %65, %66, %67 in 0 : vector<1x8x32xf32>, vector<1x8x32xf32>, vector<1x8x32xf32>, vector<1x8x32xf32> -> vector<4x8x32xf32>
    %c0_31 = arith.constant 0 : index
    %c0_32 = arith.constant 0 : index
    %c0_33 = arith.constant 0 : index
    %69 = vector.load %arg8[%c0_31, %c0_32, %c0_33] : memref<4x1x32xf32, #tpu.memory_space<vmem>>, vector<4x1x32xf32>
    %70 = vector.broadcast %69 : vector<4x1x32xf32> to vector<4x8x32xf32>
    %71 = arith.addf %68, %70 : vector<4x8x32xf32>
    %cst_34 = arith.constant 0.176776692 : f32
    %72 = vector.broadcast %cst_34 : f32 to vector<4x8x32xf32>
    %73 = arith.mulf %71, %72 : vector<4x8x32xf32>
    %74 = arith.truncf %73 : vector<4x8x32xf32> to vector<4x8x32xbf16>
    %c0_35 = arith.constant 0 : index
    %c0_36 = arith.constant 0 : index
    %c0_37 = arith.constant 0 : index
    %75 = vector.load %arg6[%c0_35, %c0_36, %c0_37] : memref<4x128x32xbf16, #tpu.memory_space<vmem>>, vector<1x128x32xbf16>
    %76 = vector.shape_cast %75 : vector<1x128x32xbf16> to vector<128x32xbf16>
    %cst_38 = arith.constant dense<0.000000e+00> : vector<16x32xf32>
    %77 = tpu.matmul %28, %76, %cst_38 {dimension_numbers = #tpu.dot_dimension_numbers<[1], [0], [0], [1], [0, 0, 1, 1], [], []>} : vector<16x128xbf16>, vector<128x32xbf16>, vector<16x32xf32> -> vector<16x32xf32>
    %c1_39 = arith.constant 1 : index
    %c0_40 = arith.constant 0 : index
    %c0_41 = arith.constant 0 : index
    %78 = vector.load %arg6[%c1_39, %c0_40, %c0_41] : memref<4x128x32xbf16, #tpu.memory_space<vmem>>, vector<1x128x32xbf16>
    %79 = vector.shape_cast %78 : vector<1x128x32xbf16> to vector<128x32xbf16>
    %cst_42 = arith.constant dense<0.000000e+00> : vector<16x32xf32>
    %80 = tpu.matmul %28, %79, %cst_42 {dimension_numbers = #tpu.dot_dimension_numbers<[1], [0], [0], [1], [0, 0, 1, 1], [], []>} : vector<16x128xbf16>, vector<128x32xbf16>, vector<16x32xf32> -> vector<16x32xf32>
    %c2_43 = arith.constant 2 : index
    %c0_44 = arith.constant 0 : index
    %c0_45 = arith.constant 0 : index
    %81 = vector.load %arg6[%c2_43, %c0_44, %c0_45] : memref<4x128x32xbf16, #tpu.memory_space<vmem>>, vector<1x128x32xbf16>
    %82 = vector.shape_cast %81 : vector<1x128x32xbf16> to vector<128x32xbf16>
    %cst_46 = arith.constant dense<0.000000e+00> : vector<16x32xf32>
    %83 = tpu.matmul %28, %82, %cst_46 {dimension_numbers = #tpu.dot_dimension_numbers<[1], [0], [0], [1], [0, 0, 1, 1], [], []>} : vector<16x128xbf16>, vector<128x32xbf16>, vector<16x32xf32> -> vector<16x32xf32>
    %c3_47 = arith.constant 3 : index
    %c0_48 = arith.constant 0 : index
    %c0_49 = arith.constant 0 : index
    %84 = vector.load %arg6[%c3_47, %c0_48, %c0_49] : memref<4x128x32xbf16, #tpu.memory_space<vmem>>, vector<1x128x32xbf16>
    %85 = vector.shape_cast %84 : vector<1x128x32xbf16> to vector<128x32xbf16>
    %cst_50 = arith.constant dense<0.000000e+00> : vector<16x32xf32>
    %86 = tpu.matmul %28, %85, %cst_50 {dimension_numbers = #tpu.dot_dimension_numbers<[1], [0], [0], [1], [0, 0, 1, 1], [], []>} : vector<16x128xbf16>, vector<128x32xbf16>, vector<16x32xf32> -> vector<16x32xf32>
    %87 = vector.shape_cast %77 : vector<16x32xf32> to vector<1x16x32xf32>
    %88 = vector.shape_cast %80 : vector<16x32xf32> to vector<1x16x32xf32>
    %89 = vector.shape_cast %83 : vector<16x32xf32> to vector<1x16x32xf32>
    %90 = vector.shape_cast %86 : vector<16x32xf32> to vector<1x16x32xf32>
    %91 = tpu.concatenate %87, %88, %89, %90 in 0 : vector<1x16x32xf32>, vector<1x16x32xf32>, vector<1x16x32xf32>, vector<1x16x32xf32> -> vector<4x16x32xf32>
    %c0_51 = arith.constant 0 : index
    %c0_52 = arith.constant 0 : index
    %c0_53 = arith.constant 0 : index
    %92 = vector.load %arg9[%c0_51, %c0_52, %c0_53] : memref<4x1x32xf32, #tpu.memory_space<vmem>>, vector<4x1x32xf32>
    %93 = vector.broadcast %92 : vector<4x1x32xf32> to vector<4x16x32xf32>
    %94 = arith.addf %91, %93 : vector<4x16x32xf32>
    %95 = arith.truncf %94 : vector<4x16x32xf32> to vector<4x16x32xbf16>
    %c0_54 = arith.constant 0 : index
    %c0_55 = arith.constant 0 : index
    %c0_56 = arith.constant 0 : index
    %96 = vector.load %arg7[%c0_54, %c0_55, %c0_56] : memref<4x128x32xbf16, #tpu.memory_space<vmem>>, vector<1x128x32xbf16>
    %97 = vector.shape_cast %96 : vector<1x128x32xbf16> to vector<128x32xbf16>
    %cst_57 = arith.constant dense<0.000000e+00> : vector<16x32xf32>
    %98 = tpu.matmul %28, %97, %cst_57 {dimension_numbers = #tpu.dot_dimension_numbers<[1], [0], [0], [1], [0, 0, 1, 1], [], []>} : vector<16x128xbf16>, vector<128x32xbf16>, vector<16x32xf32> -> vector<16x32xf32>
    %c1_58 = arith.constant 1 : index
    %c0_59 = arith.constant 0 : index
    %c0_60 = arith.constant 0 : index
    %99 = vector.load %arg7[%c1_58, %c0_59, %c0_60] : memref<4x128x32xbf16, #tpu.memory_space<vmem>>, vector<1x128x32xbf16>
    %100 = vector.shape_cast %99 : vector<1x128x32xbf16> to vector<128x32xbf16>
    %cst_61 = arith.constant dense<0.000000e+00> : vector<16x32xf32>
    %101 = tpu.matmul %28, %100, %cst_61 {dimension_numbers = #tpu.dot_dimension_numbers<[1], [0], [0], [1], [0, 0, 1, 1], [], []>} : vector<16x128xbf16>, vector<128x32xbf16>, vector<16x32xf32> -> vector<16x32xf32>
    %c2_62 = arith.constant 2 : index
    %c0_63 = arith.constant 0 : index
    %c0_64 = arith.constant 0 : index
    %102 = vector.load %arg7[%c2_62, %c0_63, %c0_64] : memref<4x128x32xbf16, #tpu.memory_space<vmem>>, vector<1x128x32xbf16>
    %103 = vector.shape_cast %102 : vector<1x128x32xbf16> to vector<128x32xbf16>
    %cst_65 = arith.constant dense<0.000000e+00> : vector<16x32xf32>
    %104 = tpu.matmul %28, %103, %cst_65 {dimension_numbers = #tpu.dot_dimension_numbers<[1], [0], [0], [1], [0, 0, 1, 1], [], []>} : vector<16x128xbf16>, vector<128x32xbf16>, vector<16x32xf32> -> vector<16x32xf32>
    %c3_66 = arith.constant 3 : index
    %c0_67 = arith.constant 0 : index
    %c0_68 = arith.constant 0 : index
    %105 = vector.load %arg7[%c3_66, %c0_67, %c0_68] : memref<4x128x32xbf16, #tpu.memory_space<vmem>>, vector<1x128x32xbf16>
    %106 = vector.shape_cast %105 : vector<1x128x32xbf16> to vector<128x32xbf16>
    %cst_69 = arith.constant dense<0.000000e+00> : vector<16x32xf32>
    %107 = tpu.matmul %28, %106, %cst_69 {dimension_numbers = #tpu.dot_dimension_numbers<[1], [0], [0], [1], [0, 0, 1, 1], [], []>} : vector<16x128xbf16>, vector<128x32xbf16>, vector<16x32xf32> -> vector<16x32xf32>
    %108 = vector.shape_cast %98 : vector<16x32xf32> to vector<1x16x32xf32>
    %109 = vector.shape_cast %101 : vector<16x32xf32> to vector<1x16x32xf32>
    %110 = vector.shape_cast %104 : vector<16x32xf32> to vector<1x16x32xf32>
    %111 = vector.shape_cast %107 : vector<16x32xf32> to vector<1x16x32xf32>
    %112 = tpu.concatenate %108, %109, %110, %111 in 0 : vector<1x16x32xf32>, vector<1x16x32xf32>, vector<1x16x32xf32>, vector<1x16x32xf32> -> vector<4x16x32xf32>
    %c0_70 = arith.constant 0 : index
    %c0_71 = arith.constant 0 : index
    %c0_72 = arith.constant 0 : index
    %113 = vector.load %arg10[%c0_70, %c0_71, %c0_72] : memref<4x1x32xf32, #tpu.memory_space<vmem>>, vector<4x1x32xf32>
    %114 = vector.broadcast %113 : vector<4x1x32xf32> to vector<4x16x32xf32>
    %115 = arith.addf %112, %114 : vector<4x16x32xf32>
    %116 = arith.truncf %115 : vector<4x16x32xf32> to vector<4x16x32xbf16>
    "tpu.trace_start"() <{level = 10 : i32, message = "hqd,hkd->hqk"}> : () -> ()
    %cst_73 = arith.constant dense<0.000000e+00> : vector<4x8x16xf32>
    %117 = tpu.matmul %74, %95, %cst_73 {dimension_numbers = #tpu.dot_dimension_numbers<[2], [2], [1], [1], [0, 0, 0, 1, 1, 1], [0], [0]>} : vector<4x8x32xbf16>, vector<4x16x32xbf16>, vector<4x8x16xf32> -> vector<4x8x16xf32>
    "tpu.trace_stop"() : () -> ()
    %c0_74 = arith.constant 0 : index
    %c0_75 = arith.constant 0 : index
    %c0_76 = arith.constant 0 : index
    %118 = vector.load %arg4[%c0_74, %c0_75, %c0_76] : memref<1x1x16xf32, #tpu.memory_space<vmem>>, vector<1x1x16xf32>
    %119 = vector.shape_cast %118 : vector<1x1x16xf32> to vector<1x16xf32>
    %cst_77 = arith.constant 1.000000e+00 : f32
    %120 = vector.broadcast %cst_77 : f32 to vector<1x16xf32>
    %121 = arith.subf %119, %120 : vector<1x16xf32>
    %cst_78 = arith.constant 1.000000e+09 : f32
    %122 = vector.broadcast %cst_78 : f32 to vector<1x16xf32>
    %123 = arith.mulf %121, %122 : vector<1x16xf32>
    %124 = vector.shape_cast %123 : vector<1x16xf32> to vector<1x1x16xf32>
    %125 = vector.broadcast %124 : vector<1x1x16xf32> to vector<4x8x16xf32>
    %126 = arith.addf %117, %125 : vector<4x8x16xf32>
    %cst_79 = arith.constant dense<0xFF800000> : vector<4x8xf32>
    %127 = vector.multi_reduction <maximumf>, %126, %cst_79 [2] : vector<4x8x16xf32> to vector<4x8xf32>
    %128 = vector.shape_cast %127 : vector<4x8xf32> to vector<4x8x1xf32>
    %129 = vector.broadcast %128 : vector<4x8x1xf32> to vector<4x8x16xf32>
    %130 = arith.subf %126, %129 : vector<4x8x16xf32>
    %131 = math.exp %130 : vector<4x8x16xf32>
    %cst_80 = arith.constant dense<0.000000e+00> : vector<4x8xf32>
    %132 = vector.multi_reduction <add>, %131, %cst_80 [2] : vector<4x8x16xf32> to vector<4x8xf32>
    %133 = vector.shape_cast %132 : vector<4x8xf32> to vector<4x8x1xf32>
    %134 = tpu.reciprocal %133 {approx = true} : vector<4x8x1xf32> -> vector<4x8x1xf32>
    %135 = vector.broadcast %134 : vector<4x8x1xf32> to vector<4x8x16xf32>
    %136 = arith.mulf %131, %135 : vector<4x8x16xf32>
    %137 = arith.truncf %136 : vector<4x8x16xf32> to vector<4x8x16xbf16>
    "tpu.trace_start"() <{level = 10 : i32, message = "hqk,hkd->hqd"}> : () -> ()
    %cst_81 = arith.constant dense<0.000000e+00> : vector<4x8x32xf32>
    %138 = tpu.matmul %137, %116, %cst_81 {dimension_numbers = #tpu.dot_dimension_numbers<[2], [1], [1], [2], [0, 0, 0, 1, 1, 2], [0], [0]>} : vector<4x8x16xbf16>, vector<4x16x32xbf16>, vector<4x8x32xf32> -> vector<4x8x32xf32>
    "tpu.trace_stop"() : () -> ()
    %139 = arith.truncf %138 : vector<4x8x32xf32> to vector<4x8x32xbf16>
    %c0_82 = arith.constant 0 : index
    %c0_83 = arith.constant 0 : index
    %c0_84 = arith.constant 0 : index
    %140 = vector.load %arg11[%c0_82, %c0_83, %c0_84] : memref<4x32x128xbf16, #tpu.memory_space<vmem>>, vector<4x32x128xbf16>
    "tpu.trace_start"() <{level = 10 : i32, message = "hqd,hdn->hqn"}> : () -> ()
    %cst_85 = arith.constant dense<0.000000e+00> : vector<4x8x128xf32>
    %141 = tpu.matmul %139, %140, %cst_85 {dimension_numbers = #tpu.dot_dimension_numbers<[2], [1], [1], [2], [0, 0, 0, 1, 1, 2], [0], [0]>} : vector<4x8x32xbf16>, vector<4x32x128xbf16>, vector<4x8x128xf32> -> vector<4x8x128xf32>
    "tpu.trace_stop"() : () -> ()
    %cst_86 = arith.constant dense<0.000000e+00> : vector<8x128xf32>
    %142 = vector.multi_reduction <add>, %141, %cst_86 [0] : vector<4x8x128xf32> to vector<8x128xf32>
    %c0_87 = arith.constant 0 : index
    %c0_88 = arith.constant 0 : index
    %143 = vector.load %arg12[%c0_87, %c0_88] : memref<1x128xf32, #tpu.memory_space<vmem>>, vector<1x128xf32>
    %144 = vector.broadcast %143 : vector<1x128xf32> to vector<8x128xf32>
    %145 = arith.addf %142, %144 : vector<8x128xf32>
    %146 = arith.addf %3, %145 : vector<8x128xf32>
    %c0_89 = arith.constant 0 : index
    %c0_90 = arith.constant 0 : index
    %147 = vector.load %arg19[%c0_89, %c0_90] : memref<1x128xf32, #tpu.memory_space<vmem>>, vector<1x128xf32>
    %cst_91 = arith.constant dense<0.000000e+00> : vector<8xf32>
    %148 = vector.multi_reduction <add>, %146, %cst_91 [1] : vector<8x128xf32> to vector<8xf32>
    %149 = vector.shape_cast %148 : vector<8xf32> to vector<8x1xf32>
    %cst_92 = arith.constant 1.280000e+02 : f32
    %150 = vector.broadcast %cst_92 : f32 to vector<8x1xf32>
    %151 = arith.divf %149, %150 : vector<8x1xf32>
    %152 = vector.broadcast %151 : vector<8x1xf32> to vector<8x128xf32>
    %153 = arith.subf %146, %152 : vector<8x128xf32>
    %154 = arith.mulf %153, %153 : vector<8x128xf32>
    %cst_93 = arith.constant dense<0.000000e+00> : vector<8xf32>
    %155 = vector.multi_reduction <add>, %154, %cst_93 [1] : vector<8x128xf32> to vector<8xf32>
    %156 = vector.shape_cast %155 : vector<8xf32> to vector<8x1xf32>
    %cst_94 = arith.constant 0.00787401571 : f32
    %157 = vector.broadcast %cst_94 : f32 to vector<8x1xf32>
    %158 = arith.mulf %156, %157 : vector<8x1xf32>
    %159 = vector.broadcast %151 : vector<8x1xf32> to vector<8x128xf32>
    %160 = arith.subf %146, %159 : vector<8x128xf32>
    %161 = math.sqrt %158 : vector<8x1xf32>
    %cst_95 = arith.constant 9.99999997E-7 : f32
    %162 = vector.broadcast %cst_95 : f32 to vector<8x1xf32>
    %163 = arith.addf %161, %162 : vector<8x1xf32>
    %164 = vector.broadcast %163 : vector<8x1xf32> to vector<8x128xf32>
    %165 = arith.divf %160, %164 : vector<8x128xf32>
    %166 = vector.broadcast %147 : vector<1x128xf32> to vector<8x128xf32>
    %167 = arith.mulf %166, %165 : vector<8x128xf32>
    %c0_96 = arith.constant 0 : index
    %c0_97 = arith.constant 0 : index
    %168 = vector.load %arg20[%c0_96, %c0_97] : memref<1x128xf32, #tpu.memory_space<vmem>>, vector<1x128xf32>
    %169 = vector.broadcast %168 : vector<1x128xf32> to vector<8x128xf32>
    %170 = arith.addf %167, %169 : vector<8x128xf32>
    %171 = arith.truncf %170 : vector<8x128xf32> to vector<8x128xbf16>
    %c0_98 = arith.constant 0 : index
    %c0_99 = arith.constant 0 : index
    %172 = vector.load %arg13[%c0_98, %c0_99] : memref<128x256xbf16, #tpu.memory_space<vmem>>, vector<128x256xbf16>
    %cst_100 = arith.constant dense<0.000000e+00> : vector<8x256xf32>
    %173 = tpu.matmul %171, %172, %cst_100 {dimension_numbers = #tpu.dot_dimension_numbers<[1], [0], [0], [1], [0, 0, 1, 1], [], []>} : vector<8x128xbf16>, vector<128x256xbf16>, vector<8x256xf32> -> vector<8x256xf32>
    %c0_101 = arith.constant 0 : index
    %c0_102 = arith.constant 0 : index
    %174 = vector.load %arg14[%c0_101, %c0_102] : memref<1x256xf32, #tpu.memory_space<vmem>>, vector<1x256xf32>
    %175 = vector.broadcast %174 : vector<1x256xf32> to vector<8x256xf32>
    %176 = arith.addf %173, %175 : vector<8x256xf32>
    %cst_103 = arith.constant 0.000000e+00 : f32
    %177 = vector.broadcast %cst_103 : f32 to vector<8x256xf32>
    %178 = arith.maximumf %176, %177 : vector<8x256xf32>
    %179 = arith.truncf %178 : vector<8x256xf32> to vector<8x256xbf16>
    %c0_104 = arith.constant 0 : index
    %c0_105 = arith.constant 0 : index
    %180 = vector.load %arg15[%c0_104, %c0_105] : memref<256x128xbf16, #tpu.memory_space<vmem>>, vector<256x128xbf16>
    %cst_106 = arith.constant dense<0.000000e+00> : vector<8x128xf32>
    %181 = tpu.matmul %179, %180, %cst_106 {dimension_numbers = #tpu.dot_dimension_numbers<[1], [0], [0], [1], [0, 0, 1, 1], [], []>} : vector<8x256xbf16>, vector<256x128xbf16>, vector<8x128xf32> -> vector<8x128xf32>
    %c0_107 = arith.constant 0 : index
    %c0_108 = arith.constant 0 : index
    %182 = vector.load %arg16[%c0_107, %c0_108] : memref<1x128xf32, #tpu.memory_space<vmem>>, vector<1x128xf32>
    %183 = vector.broadcast %182 : vector<1x128xf32> to vector<8x128xf32>
    %184 = arith.addf %181, %183 : vector<8x128xf32>
    %185 = arith.addf %146, %184 : vector<8x128xf32>
    %c0_109 = arith.constant 0 : index
    %c0_110 = arith.constant 0 : index
    %c0_111 = arith.constant 0 : index
    %186 = vector.load %arg21[%c0_109, %c0_110, %c0_111] : memref<1x8x128xf32, #tpu.memory_space<vmem>>, vector<1x8x128xf32>
    %187 = vector.shape_cast %186 : vector<1x8x128xf32> to vector<8x128xf32>
    %188 = vector.shape_cast %185 : vector<8x128xf32> to vector<1x8x128xf32>
    tpu.vector_store %arg21[%c0_109, %c0_110, %c0_111], %188 {strides = array<i32>} : memref<1x8x128xf32, #tpu.memory_space<vmem>>, vector<1x8x128xf32>,
    return
  }
  func.func @transform_0(%arg0: i32, %arg1: i32) -> (i32, i32, i32) {
    %c0_i32 = arith.constant 0 : i32
    %c0_i32_0 = arith.constant 0 : i32
    %c0_i32_1 = arith.constant 0 : i32
    return %arg0, %c0_i32, %c0_i32_0 : i32, i32, i32
  }
  func.func @transform_1(%arg0: i32, %arg1: i32) -> (i32, i32, i32) {
    %c0_i32 = arith.constant 0 : i32
    %c0_i32_0 = arith.constant 0 : i32
    return %arg0, %arg1, %c0_i32 : i32, i32, i32
  }
  func.func @transform_2(%arg0: i32, %arg1: i32) -> (i32, i32, i32) {
    %c0_i32 = arith.constant 0 : i32
    %c0_i32_0 = arith.constant 0 : i32
    %c0_i32_1 = arith.constant 0 : i32
    return %arg0, %c0_i32, %c0_i32_0 : i32, i32, i32
  }
  func.func @transform_3(%arg0: i32, %arg1: i32) -> (i32, i32, i32) {
    %c0_i32 = arith.constant 0 : i32
    %c0_i32_0 = arith.constant 0 : i32
    %c0_i32_1 = arith.constant 0 : i32
    %c0_i32_2 = arith.constant 0 : i32
    return %c0_i32, %c0_i32_0, %c0_i32_1 : i32, i32, i32
  }
  func.func @transform_4(%arg0: i32, %arg1: i32) -> (i32, i32, i32) {
    %c0_i32 = arith.constant 0 : i32
    %c0_i32_0 = arith.constant 0 : i32
    %c0_i32_1 = arith.constant 0 : i32
    %c0_i32_2 = arith.constant 0 : i32
    return %c0_i32, %c0_i32_0, %c0_i32_1 : i32, i32, i32
  }
  func.func @transform_5(%arg0: i32, %arg1: i32) -> (i32, i32, i32) {
    %c0_i32 = arith.constant 0 : i32
    %c0_i32_0 = arith.constant 0 : i32
    %c0_i32_1 = arith.constant 0 : i32
    %c0_i32_2 = arith.constant 0 : i32
    return %c0_i32, %c0_i32_0, %c0_i32_1 : i32, i32, i32
  }
  func.func @transform_6(%arg0: i32, %arg1: i32) -> (i32, i32, i32) {
    %c0_i32 = arith.constant 0 : i32
    %c0_i32_0 = arith.constant 0 : i32
    %c0_i32_1 = arith.constant 0 : i32
    %c0_i32_2 = arith.constant 0 : i32
    return %c0_i32, %c0_i32_0, %c0_i32_1 : i32, i32, i32
  }
  func.func @transform_7(%arg0: i32, %arg1: i32) -> (i32, i32, i32) {
    %c0_i32 = arith.constant 0 : i32
    %c0_i32_0 = arith.constant 0 : i32
    %c0_i32_1 = arith.constant 0 : i32
    %c0_i32_2 = arith.constant 0 : i32
    return %c0_i32, %c0_i32_0, %c0_i32_1 : i32, i32, i32
  }
  func.func @transform_8(%arg0: i32, %arg1: i32) -> (i32, i32, i32) {
    %c0_i32 = arith.constant 0 : i32
    %c0_i32_0 = arith.constant 0 : i32
    %c0_i32_1 = arith.constant 0 : i32
    %c0_i32_2 = arith.constant 0 : i32
    return %c0_i32, %c0_i32_0, %c0_i32_1 : i32, i32, i32
  }
  func.func @transform_9(%arg0: i32, %arg1: i32) -> (i32, i32, i32) {
    %c0_i32 = arith.constant 0 : i32
    %c0_i32_0 = arith.constant 0 : i32
    %c0_i32_1 = arith.constant 0 : i32
    %c0_i32_2 = arith.constant 0 : i32
    return %c0_i32, %c0_i32_0, %c0_i32_1 : i32, i32, i32
  }
  func.func @transform_10(%arg0: i32, %arg1: i32) -> (i32, i32) {
    %c0_i32 = arith.constant 0 : i32
    %c0_i32_0 = arith.constant 0 : i32
    %c0_i32_1 = arith.constant 0 : i32
    return %c0_i32, %c0_i32_0 : i32, i32
  }
  func.func @transform_11(%arg0: i32, %arg1: i32) -> (i32, i32) {
    %c0_i32 = arith.constant 0 : i32
    %c0_i32_0 = arith.constant 0 : i32
    %c0_i32_1 = arith.constant 0 : i32
    return %c0_i32, %c0_i32_0 : i32, i32
  }
  func.func @transform_12(%arg0: i32, %arg1: i32) -> (i32, i32) {
    %c0_i32 = arith.constant 0 : i32
    %c0_i32_0 = arith.constant 0 : i32
    %c0_i32_1 = arith.constant 0 : i32
    return %c0_i32, %c0_i32_0 : i32, i32
  }
  func.func @transform_13(%arg0: i32, %arg1: i32) -> (i32, i32) {
    %c0_i32 = arith.constant 0 : i32
    %c0_i32_0 = arith.constant 0 : i32
    %c0_i32_1 = arith.constant 0 : i32
    return %c0_i32, %c0_i32_0 : i32, i32
  }
  func.func @transform_14(%arg0: i32, %arg1: i32) -> (i32, i32) {
    %c0_i32 = arith.constant 0 : i32
    %c0_i32_0 = arith.constant 0 : i32
    %c0_i32_1 = arith.constant 0 : i32
    return %c0_i32, %c0_i32_0 : i32, i32
  }
  func.func @transform_15(%arg0: i32, %arg1: i32) -> (i32, i32) {
    %c0_i32 = arith.constant 0 : i32
    %c0_i32_0 = arith.constant 0 : i32
    %c0_i32_1 = arith.constant 0 : i32
    return %c0_i32, %c0_i32_0 : i32, i32
  }
  func.func @transform_16(%arg0: i32, %arg1: i32) -> (i32, i32) {
    %c0_i32 = arith.constant 0 : i32
    %c0_i32_0 = arith.constant 0 : i32
    %c0_i32_1 = arith.constant 0 : i32
    return %c0_i32, %c0_i32_0 : i32, i32
  }
  func.func @transform_17(%arg0: i32, %arg1: i32) -> (i32, i32) {
    %c0_i32 = arith.constant 0 : i32
    %c0_i32_0 = arith.constant 0 : i32
    %c0_i32_1 = arith.constant 0 : i32
    return %c0_i32, %c0_i32_0 : i32, i32
  }
  func.func @transform_18(%arg0: i32, %arg1: i32) -> (i32, i32) {
    %c0_i32 = arith.constant 0 : i32
    %c0_i32_0 = arith.constant 0 : i32
    %c0_i32_1 = arith.constant 0 : i32
    return %c0_i32, %c0_i32_0 : i32, i32
  }
  func.func @transform_19(%arg0: i32, %arg1: i32) -> (i32, i32, i32) {
    %c0_i32 = arith.constant 0 : i32
    %c0_i32_0 = arith.constant 0 : i32
    return %arg0, %arg1, %c0_i32 : i32, i32, i32
  }
}

</mosaic_0001>

<llo_original>
// kernel: tpu_custom_call.1
$region0: #{tpu_custom_call.1}
  #allocation0 [shape = 'u32[]', space=smem, size = 0x4, offset = 0x4, fixed_abs, tag = 'smem constant byte address 0x4 - core index']
  #allocation1 [shape = 'u32[72,128]{1,0:T(1,128)}', space=vmem, size = 0x9000, scoped, tag = 'internal scratch']
  %s0 = inlined_call_operand.vmem [shape: f32[2,16,128], index: 0, kind: input, shape index: {}]
  %s1 = inlined_call_operand.vmem [shape: f32[2,16,128], index: 1, kind: input, shape index: {}]
  %s2 = inlined_call_operand.vmem [shape: f32[2,1,16], index: 2, kind: input, shape index: {}]
  %s3 = inlined_call_operand.vmem [shape: bf16[4,128,32], index: 3, kind: input, shape index: {}]
  %s4 = inlined_call_operand.vmem [shape: bf16[4,128,32], index: 4, kind: input, shape index: {}]
  %s5 = inlined_call_operand.vmem [shape: bf16[4,128,32], index: 5, kind: input, shape index: {}]
  %s6 = inlined_call_operand.vmem [shape: f32[4,1,32], index: 6, kind: input, shape index: {}]
  %s7 = inlined_call_operand.vmem [shape: f32[4,1,32], index: 7, kind: input, shape index: {}]
  %s8 = inlined_call_operand.vmem [shape: f32[4,1,32], index: 8, kind: input, shape index: {}]
  %s9 = inlined_call_operand.vmem [shape: bf16[4,32,128], index: 9, kind: input, shape index: {}]
  %s10 = inlined_call_operand.vmem [shape: f32[1,128], index: 10, kind: input, shape index: {}]
  %s11 = inlined_call_operand.vmem [shape: bf16[128,256], index: 11, kind: input, shape index: {}]
  %s12 = inlined_call_operand.vmem [shape: f32[1,256], index: 12, kind: input, shape index: {}]
  %s13 = inlined_call_operand.vmem [shape: bf16[256,128], index: 13, kind: input, shape index: {}]
  %s14 = inlined_call_operand.vmem [shape: f32[1,128], index: 14, kind: input, shape index: {}]
  %s15 = inlined_call_operand.vmem [shape: f32[1,128], index: 15, kind: input, shape index: {}]
  %s16 = inlined_call_operand.vmem [shape: f32[1,128], index: 16, kind: input, shape index: {}]
  %s17 = inlined_call_operand.vmem [shape: f32[1,128], index: 17, kind: input, shape index: {}]
  %s18 = inlined_call_operand.vmem [shape: f32[1,128], index: 18, kind: input, shape index: {}]
  %s19 = inlined_call_operand.hbm [shape: f32[2,16,128], index: 19, kind: output, shape index: {}]
  %s20 = sld [smem:[#allocation0]]
  $region109: #{tpu_custom_call.1} parent=0
    _
  %s22 = ssub.s32 1, %s20
  %s23 = scalar_select 0, %s22, %s20
  $region1: #{tpu_custom_call.1} parent=0
    #allocation2 [shape = 'u8[8192]{0}', space=vmem, size = 0x2000, scoped, tag = 'output window, operand 0']
    #allocation3 [shape = 's32[2]{0}', space=sflag, size = 0x8, scoped, tag = 'scoped memory for tpu_custom_call.1']
    %24 = vsyncpa [#allocation3], 0
    %s25 = scalar_lea.sflag [#allocation3], 1
    %26 = vsyncpa %s25, 0
    loop: start=0, step=1, limit=6
    $region2: #{tpu_custom_call.1} parent=1 // loop_pre_header
      _
    $region3: #{tpu_custom_call.1} parent=1 // loop_header
      %s28 = sphi 0, %s32
      %p29 = scmp.ge.s32.totalorder %s28, 6
      %s35 = sphi 0, %s47
      %s36 = sphi 0, %s43
      %s37 = sphi 0, %s35
      %s38 = sphi 0, %s36
      %s39 = sphi 0, %s37
      %s40 = sphi 0, %s38
      %s50 = sphi 0, %s52
      %s53 = sphi 0, %s50
      %s54 = sphi 0, %s53
      %s70 = sphi 0, %s54
      %s78 = sphi 0, %s80
      %s81 = sphi 0, %s78
      %s82 = sphi 0, %s81
      %s98 = sphi 0, %s82
      %s104 = sphi 0, %s106
      %s107 = sphi 0, %s104
      %s108 = sphi 0, %s107
      %s124 = sphi 0, %s108
      %s128 = sphi 0, %s128
      %s130 = sphi 0, %s128
      %s131 = sphi 0, %s130
      %s145 = sphi 0, %s131
      %s149 = sphi 0, %s149
      %s151 = sphi 0, %s149
      %s152 = sphi 0, %s151
      %s166 = sphi 0, %s152
      %s170 = sphi 0, %s170
      %s172 = sphi 0, %s170
      %s173 = sphi 0, %s172
      %s187 = sphi 0, %s173
      %s191 = sphi 0, %s191
      %s193 = sphi 0, %s191
      %s194 = sphi 0, %s193
      %s208 = sphi 0, %s194
      %s212 = sphi 0, %s212
      %s214 = sphi 0, %s212
      %s215 = sphi 0, %s214
      %s229 = sphi 0, %s215
      %s233 = sphi 0, %s233
      %s235 = sphi 0, %s233
      %s236 = sphi 0, %s235
      %s250 = sphi 0, %s236
      %s254 = sphi 0, %s254
      %s256 = sphi 0, %s254
      %s257 = sphi 0, %s256
      %s271 = sphi 0, %s257
      %s275 = sphi 0, %s275
      %s277 = sphi 0, %s275
      %s278 = sphi 0, %s277
      %s292 = sphi 0, %s278
      %s296 = sphi 0, %s296
      %s298 = sphi 0, %s296
      %s299 = sphi 0, %s298
      %s313 = sphi 0, %s299
      %s317 = sphi 0, %s317
      %s319 = sphi 0, %s317
      %s320 = sphi 0, %s319
      %s334 = sphi 0, %s320
      %s338 = sphi 0, %s338
      %s340 = sphi 0, %s338
      %s341 = sphi 0, %s340
      %s355 = sphi 0, %s341
      %s359 = sphi 0, %s359
      %s361 = sphi 0, %s359
      %s362 = sphi 0, %s361
      %s376 = sphi 0, %s362
      %s380 = sphi 0, %s380
      %s382 = sphi 0, %s380
      %s383 = sphi 0, %s382
      %s397 = sphi 0, %s383
      %s401 = sphi 0, %s401
      %s403 = sphi 0, %s401
      %s404 = sphi 0, %s403
      %s418 = sphi 0, %s404
      %s422 = sphi 0, %s422
      %s424 = sphi 0, %s422
      %s425 = sphi 0, %s424
      %s439 = sphi 0, %s425
      %s443 = sphi 0, %s443
      %s445 = sphi 0, %s443
      %s446 = sphi 0, %s445
      %s460 = sphi 0, %s446
      %s468 = sphi 0, %s470
      %s471 = sphi 0, %s468
      %s472 = sphi 0, %s471
      %s488 = sphi 0, %s472
    $region4: #{tpu_custom_call.1} parent=1 // loop_header_branch
      %31 = sbr.rel (%p29) target = $region8
    $region5: #{tpu_custom_call.1} parent=1 // loop_body
      %s33 = ssub.s32 %s28, 1
      %s34 = ssub.s32 %s28, 2
      %s41 = sadd.s32 1, %s36
      %p42 = scmp.ge.s32.totalorder %s41, 2
      %s43 = scalar_select %p42, 0, %s41
      %s44 = sadd.s32 1, %s35
      %s45 = scalar_select %p42, %s44, %s35
      %p46 = scmp.ge.s32.totalorder %s45, 2
      %s47 = scalar_select %p46, 0, %s45
      %s48 = ssub.s32 %s35, %s47
      %p49 = scmp.eq.s32.totalorder %s48, 0
      %s51 = sadd.s32 %s50, 1
      %s52 = scalar_select %p49, %s50, %s51
      %p55 = pneg %p49
      %p56 = scmp.eq.s32.totalorder %s28, 3
      %p57 = por %p55, %p56
      %p58 = scmp.ne.s32.totalorder %s50, %s53
      %p59 = scmp.eq.s32.totalorder %s28, 0
      %p60 = por %p58, %p59
      %p61 = scmp.ne.s32.totalorder %s50, %s53
      %p62 = scmp.eq.s32.totalorder %s33, 3
      %p63 = por %p61, %p62
      %p64 = scmp.ne.s32.totalorder %s53, %s54
      %p65 = scmp.eq.s32.totalorder %s33, 0
      %p66 = por %p64, %p65
      %p67 = scmp.ne.s32.totalorder %s53, %s54
      %p68 = scmp.eq.s32.totalorder %s34, 3
      %p69 = por %p67, %p68
      %p71 = scmp.ne.s32.totalorder %s54, %s70
      %p72 = scmp.eq.s32.totalorder %s34, 0
      %p73 = por %p71, %p72
      %s74 = ssub.s32 %s35, %s47
      %s75 = ssub.s32 %s36, %s43
      %s76 = sor.u32 %s74, %s75
      %p77 = scmp.eq.s32.totalorder %s76, 0
      %s79 = sadd.s32 %s78, 1
      %s80 = scalar_select %p77, %s78, %s79
      %p83 = pneg %p77
      %p84 = scmp.eq.s32.totalorder %s28, 3
      %p85 = por %p83, %p84
      %p86 = scmp.ne.s32.totalorder %s78, %s81
      %p87 = scmp.eq.s32.totalorder %s28, 0
      %p88 = por %p86, %p87
      %p89 = scmp.ne.s32.totalorder %s78, %s81
      %p90 = scmp.eq.s32.totalorder %s33, 3
      %p91 = por %p89, %p90
      %p92 = scmp.ne.s32.totalorder %s81, %s82
      %p93 = scmp.eq.s32.totalorder %s33, 0
      %p94 = por %p92, %p93
      %p95 = scmp.ne.s32.totalorder %s81, %s82
      %p96 = scmp.eq.s32.totalorder %s34, 3
      %p97 = por %p95, %p96
      %p99 = scmp.ne.s32.totalorder %s82, %s98
      %p100 = scmp.eq.s32.totalorder %s34, 0
      %p101 = por %p99, %p100
      %s102 = ssub.s32 %s35, %s47
      %p103 = scmp.eq.s32.totalorder %s102, 0
      %s105 = sadd.s32 %s104, 1
      %s106 = scalar_select %p103, %s104, %s105
      %p109 = pneg %p103
      %p110 = scmp.eq.s32.totalorder %s28, 3
      %p111 = por %p109, %p110
      %p112 = scmp.ne.s32.totalorder %s104, %s107
      %p113 = scmp.eq.s32.totalorder %s28, 0
      %p114 = por %p112, %p113
      %p115 = scmp.ne.s32.totalorder %s104, %s107
      %p116 = scmp.eq.s32.totalorder %s33, 3
      %p117 = por %p115, %p116
      %p118 = scmp.ne.s32.totalorder %s107, %s108
      %p119 = scmp.eq.s32.totalorder %s33, 0
      %p120 = por %p118, %p119
      %p121 = scmp.ne.s32.totalorder %s107, %s108
      %p122 = scmp.eq.s32.totalorder %s34, 3
      %p123 = por %p121, %p122
      %p125 = scmp.ne.s32.totalorder %s108, %s124
      %p126 = scmp.eq.s32.totalorder %s34, 0
      %p127 = por %p125, %p126
      %s129 = sadd.s32 %s128, 1
      %p132 = scmp.eq.s32.totalorder %s28, 3
      %p133 = scmp.ne.s32.totalorder %s128, %s130
      %p134 = scmp.eq.s32.totalorder %s28, 0
      %p135 = por %p133, %p134
      %p136 = scmp.ne.s32.totalorder %s128, %s130
      %p137 = scmp.eq.s32.totalorder %s33, 3
      %p138 = por %p136, %p137
      %p139 = scmp.ne.s32.totalorder %s130, %s131
      %p140 = scmp.eq.s32.totalorder %s33, 0
      %p141 = por %p139, %p140
      %p142 = scmp.ne.s32.totalorder %s130, %s131
      %p143 = scmp.eq.s32.totalorder %s34, 3
      %p144 = por %p142, %p143
      %p146 = scmp.ne.s32.totalorder %s131, %s145
      %p147 = scmp.eq.s32.totalorder %s34, 0
      %p148 = por %p146, %p147
      %s150 = sadd.s32 %s149, 1
      %p153 = scmp.eq.s32.totalorder %s28, 3
      %p154 = scmp.ne.s32.totalorder %s149, %s151
      %p155 = scmp.eq.s32.totalorder %s28, 0
      %p156 = por %p154, %p155
      %p157 = scmp.ne.s32.totalorder %s149, %s151
      %p158 = scmp.eq.s32.totalorder %s33, 3
      %p159 = por %p157, %p158
      %p160 = scmp.ne.s32.totalorder %s151, %s152
      %p161 = scmp.eq.s32.totalorder %s33, 0
      %p162 = por %p160, %p161
      %p163 = scmp.ne.s32.totalorder %s151, %s152
      %p164 = scmp.eq.s32.totalorder %s34, 3
      %p165 = por %p163, %p164
      %p167 = scmp.ne.s32.totalorder %s152, %s166
      %p168 = scmp.eq.s32.totalorder %s34, 0
      %p169 = por %p167, %p168
      %s171 = sadd.s32 %s170, 1
      %p174 = scmp.eq.s32.totalorder %s28, 3
      %p175 = scmp.ne.s32.totalorder %s170, %s172
      %p176 = scmp.eq.s32.totalorder %s28, 0
      %p177 = por %p175, %p176
      %p178 = scmp.ne.s32.totalorder %s170, %s172
      %p179 = scmp.eq.s32.totalorder %s33, 3
      %p180 = por %p178, %p179
      %p181 = scmp.ne.s32.totalorder %s172, %s173
      %p182 = scmp.eq.s32.totalorder %s33, 0
      %p183 = por %p181, %p182
      %p184 = scmp.ne.s32.totalorder %s172, %s173
      %p185 = scmp.eq.s32.totalorder %s34, 3
      %p186 = por %p184, %p185
      %p188 = scmp.ne.s32.totalorder %s173, %s187
      %p189 = scmp.eq.s32.totalorder %s34, 0
      %p190 = por %p188, %p189
      %s192 = sadd.s32 %s191, 1
      %p195 = scmp.eq.s32.totalorder %s28, 3
      %p196 = scmp.ne.s32.totalorder %s191, %s193
      %p197 = scmp.eq.s32.totalorder %s28, 0
      %p198 = por %p196, %p197
      %p199 = scmp.ne.s32.totalorder %s191, %s193
      %p200 = scmp.eq.s32.totalorder %s33, 3
      %p201 = por %p199, %p200
      %p202 = scmp.ne.s32.totalorder %s193, %s194
      %p203 = scmp.eq.s32.totalorder %s33, 0
      %p204 = por %p202, %p203
      %p205 = scmp.ne.s32.totalorder %s193, %s194
      %p206 = scmp.eq.s32.totalorder %s34, 3
      %p207 = por %p205, %p206
      %p209 = scmp.ne.s32.totalorder %s194, %s208
      %p210 = scmp.eq.s32.totalorder %s34, 0
      %p211 = por %p209, %p210
      %s213 = sadd.s32 %s212, 1
      %p216 = scmp.eq.s32.totalorder %s28, 3
      %p217 = scmp.ne.s32.totalorder %s212, %s214
      %p218 = scmp.eq.s32.totalorder %s28, 0
      %p219 = por %p217, %p218
      %p220 = scmp.ne.s32.totalorder %s212, %s214
      %p221 = scmp.eq.s32.totalorder %s33, 3
      %p222 = por %p220, %p221
      %p223 = scmp.ne.s32.totalorder %s214, %s215
      %p224 = scmp.eq.s32.totalorder %s33, 0
      %p225 = por %p223, %p224
      %p226 = scmp.ne.s32.totalorder %s214, %s215
      %p227 = scmp.eq.s32.totalorder %s34, 3
      %p228 = por %p226, %p227
      %p230 = scmp.ne.s32.totalorder %s215, %s229
      %p231 = scmp.eq.s32.totalorder %s34, 0
      %p232 = por %p230, %p231
      %s234 = sadd.s32 %s233, 1
      %p237 = scmp.eq.s32.totalorder %s28, 3
      %p238 = scmp.ne.s32.totalorder %s233, %s235
      %p239 = scmp.eq.s32.totalorder %s28, 0
      %p240 = por %p238, %p239
      %p241 = scmp.ne.s32.totalorder %s233, %s235
      %p242 = scmp.eq.s32.totalorder %s33, 3
      %p243 = por %p241, %p242
      %p244 = scmp.ne.s32.totalorder %s235, %s236
      %p245 = scmp.eq.s32.totalorder %s33, 0
      %p246 = por %p244, %p245
      %p247 = scmp.ne.s32.totalorder %s235, %s236
      %p248 = scmp.eq.s32.totalorder %s34, 3
      %p249 = por %p247, %p248
      %p251 = scmp.ne.s32.totalorder %s236, %s250
      %p252 = scmp.eq.s32.totalorder %s34, 0
      %p253 = por %p251, %p252
      %s255 = sadd.s32 %s254, 1
      %p258 = scmp.eq.s32.totalorder %s28, 3
      %p259 = scmp.ne.s32.totalorder %s254, %s256
      %p260 = scmp.eq.s32.totalorder %s28, 0
      %p261 = por %p259, %p260
      %p262 = scmp.ne.s32.totalorder %s254, %s256
      %p263 = scmp.eq.s32.totalorder %s33, 3
      %p264 = por %p262, %p263
      %p265 = scmp.ne.s32.totalorder %s256, %s257
      %p266 = scmp.eq.s32.totalorder %s33, 0
      %p267 = por %p265, %p266
      %p268 = scmp.ne.s32.totalorder %s256, %s257
      %p269 = scmp.eq.s32.totalorder %s34, 3
      %p270 = por %p268, %p269
      %p272 = scmp.ne.s32.totalorder %s257, %s271
      %p273 = scmp.eq.s32.totalorder %s34, 0
      %p274 = por %p272, %p273
      %s276 = sadd.s32 %s275, 1
      %p279 = scmp.eq.s32.totalorder %s28, 3
      %p280 = scmp.ne.s32.totalorder %s275, %s277
      %p281 = scmp.eq.s32.totalorder %s28, 0
      %p282 = por %p280, %p281
      %p283 = scmp.ne.s32.totalorder %s275, %s277
      %p284 = scmp.eq.s32.totalorder %s33, 3
      %p285 = por %p283, %p284
      %p286 = scmp.ne.s32.totalorder %s277, %s278
      %p287 = scmp.eq.s32.totalorder %s33, 0
      %p288 = por %p286, %p287
      %p289 = scmp.ne.s32.totalorder %s277, %s278
      %p290 = scmp.eq.s32.totalorder %s34, 3
      %p291 = por %p289, %p290
      %p293 = scmp.ne.s32.totalorder %s278, %s292
      %p294 = scmp.eq.s32.totalorder %s34, 0
      %p295 = por %p293, %p294
      %s297 = sadd.s32 %s296, 1
      %p300 = scmp.eq.s32.totalorder %s28, 3
      %p301 = scmp.ne.s32.totalorder %s296, %s298
      %p302 = scmp.eq.s32.totalorder %s28, 0
      %p303 = por %p301, %p302
      %p304 = scmp.ne.s32.totalorder %s296, %s298
      %p305 = scmp.eq.s32.totalorder %s33, 3
      %p306 = por %p304, %p305
      %p307 = scmp.ne.s32.totalorder %s298, %s299
      %p308 = scmp.eq.s32.totalorder %s33, 0
      %p309 = por %p307, %p308
      %p310 = scmp.ne.s32.totalorder %s298, %s299
      %p311 = scmp.eq.s32.totalorder %s34, 3
      %p312 = por %p310, %p311
      %p314 = scmp.ne.s32.totalorder %s299, %s313
      %p315 = scmp.eq.s32.totalorder %s34, 0
      %p316 = por %p314, %p315
      %s318 = sadd.s32 %s317, 1
      %p321 = scmp.eq.s32.totalorder %s28, 3
      %p322 = scmp.ne.s32.totalorder %s317, %s319
      %p323 = scmp.eq.s32.totalorder %s28, 0
      %p324 = por %p322, %p323
      %p325 = scmp.ne.s32.totalorder %s317, %s319
      %p326 = scmp.eq.s32.totalorder %s33, 3
      %p327 = por %p325, %p326
      %p328 = scmp.ne.s32.totalorder %s319, %s320
      %p329 = scmp.eq.s32.totalorder %s33, 0
      %p330 = por %p328, %p329
      %p331 = scmp.ne.s32.totalorder %s319, %s320
      %p332 = scmp.eq.s32.totalorder %s34, 3
      %p333 = por %p331, %p332
      %p335 = scmp.ne.s32.totalorder %s320, %s334
      %p336 = scmp.eq.s32.totalorder %s34, 0
      %p337 = por %p335, %p336
      %s339 = sadd.s32 %s338, 1
      %p342 = scmp.eq.s32.totalorder %s28, 3
      %p343 = scmp.ne.s32.totalorder %s338, %s340
      %p344 = scmp.eq.s32.totalorder %s28, 0
      %p345 = por %p343, %p344
      %p346 = scmp.ne.s32.totalorder %s338, %s340
      %p347 = scmp.eq.s32.totalorder %s33, 3
      %p348 = por %p346, %p347
      %p349 = scmp.ne.s32.totalorder %s340, %s341
      %p350 = scmp.eq.s32.totalorder %s33, 0
      %p351 = por %p349, %p350
      %p352 = scmp.ne.s32.totalorder %s340, %s341
      %p353 = scmp.eq.s32.totalorder %s34, 3
      %p354 = por %p352, %p353
      %p356 = scmp.ne.s32.totalorder %s341, %s355
      %p357 = scmp.eq.s32.totalorder %s34, 0
      %p358 = por %p356, %p357
      %s360 = sadd.s32 %s359, 1
      %p363 = scmp.eq.s32.totalorder %s28, 3
      %p364 = scmp.ne.s32.totalorder %s359, %s361
      %p365 = scmp.eq.s32.totalorder %s28, 0
      %p366 = por %p364, %p365
      %p367 = scmp.ne.s32.totalorder %s359, %s361
      %p368 = scmp.eq.s32.totalorder %s33, 3
      %p369 = por %p367, %p368
      %p370 = scmp.ne.s32.totalorder %s361, %s362
      %p371 = scmp.eq.s32.totalorder %s33, 0
      %p372 = por %p370, %p371
      %p373 = scmp.ne.s32.totalorder %s361, %s362
      %p374 = scmp.eq.s32.totalorder %s34, 3
      %p375 = por %p373, %p374
      %p377 = scmp.ne.s32.totalorder %s362, %s376
      %p378 = scmp.eq.s32.totalorder %s34, 0
      %p379 = por %p377, %p378
      %s381 = sadd.s32 %s380, 1
      %p384 = scmp.eq.s32.totalorder %s28, 3
      %p385 = scmp.ne.s32.totalorder %s380, %s382
      %p386 = scmp.eq.s32.totalorder %s28, 0
      %p387 = por %p385, %p386
      %p388 = scmp.ne.s32.totalorder %s380, %s382
      %p389 = scmp.eq.s32.totalorder %s33, 3
      %p390 = por %p388, %p389
      %p391 = scmp.ne.s32.totalorder %s382, %s383
      %p392 = scmp.eq.s32.totalorder %s33, 0
      %p393 = por %p391, %p392
      %p394 = scmp.ne.s32.totalorder %s382, %s383
      %p395 = scmp.eq.s32.totalorder %s34, 3
      %p396 = por %p394, %p395
      %p398 = scmp.ne.s32.totalorder %s383, %s397
      %p399 = scmp.eq.s32.totalorder %s34, 0
      %p400 = por %p398, %p399
      %s402 = sadd.s32 %s401, 1
      %p405 = scmp.eq.s32.totalorder %s28, 3
      %p406 = scmp.ne.s32.totalorder %s401, %s403
      %p407 = scmp.eq.s32.totalorder %s28, 0
      %p408 = por %p406, %p407
      %p409 = scmp.ne.s32.totalorder %s401, %s403
      %p410 = scmp.eq.s32.totalorder %s33, 3
      %p411 = por %p409, %p410
      %p412 = scmp.ne.s32.totalorder %s403, %s404
      %p413 = scmp.eq.s32.totalorder %s33, 0
      %p414 = por %p412, %p413
      %p415 = scmp.ne.s32.totalorder %s403, %s404
      %p416 = scmp.eq.s32.totalorder %s34, 3
      %p417 = por %p415, %p416
      %p419 = scmp.ne.s32.totalorder %s404, %s418
      %p420 = scmp.eq.s32.totalorder %s34, 0
      %p421 = por %p419, %p420
      %s423 = sadd.s32 %s422, 1
      %p426 = scmp.eq.s32.totalorder %s28, 3
      %p427 = scmp.ne.s32.totalorder %s422, %s424
      %p428 = scmp.eq.s32.totalorder %s28, 0
      %p429 = por %p427, %p428
      %p430 = scmp.ne.s32.totalorder %s422, %s424
      %p431 = scmp.eq.s32.totalorder %s33, 3
      %p432 = por %p430, %p431
      %p433 = scmp.ne.s32.totalorder %s424, %s425
      %p434 = scmp.eq.s32.totalorder %s33, 0
      %p435 = por %p433, %p434
      %p436 = scmp.ne.s32.totalorder %s424, %s425
      %p437 = scmp.eq.s32.totalorder %s34, 3
      %p438 = por %p436, %p437
      %p440 = scmp.ne.s32.totalorder %s425, %s439
      %p441 = scmp.eq.s32.totalorder %s34, 0
      %p442 = por %p440, %p441
      %s444 = sadd.s32 %s443, 1
      %p447 = scmp.eq.s32.totalorder %s28, 3
      %p448 = scmp.ne.s32.totalorder %s443, %s445
      %p449 = scmp.eq.s32.totalorder %s28, 0
      %p450 = por %p448, %p449
      %p451 = scmp.ne.s32.totalorder %s443, %s445
      %p452 = scmp.eq.s32.totalorder %s33, 3
      %p453 = por %p451, %p452
      %p454 = scmp.ne.s32.totalorder %s445, %s446
      %p455 = scmp.eq.s32.totalorder %s33, 0
      %p456 = por %p454, %p455
      %p457 = scmp.ne.s32.totalorder %s445, %s446
      %p458 = scmp.eq.s32.totalorder %s34, 3
      %p459 = por %p457, %p458
      %p461 = scmp.ne.s32.totalorder %s446, %s460
      %p462 = scmp.eq.s32.totalorder %s34, 0
      %p463 = por %p461, %p462
      %s464 = ssub.s32 %s35, %s47
      %s465 = ssub.s32 %s36, %s43
      %s466 = sor.u32 %s464, %s465
      %p467 = scmp.eq.s32.totalorder %s466, 0
      %s469 = sadd.s32 %s468, 1
      %s470 = scalar_select %p467, %s468, %s469
      %p473 = pneg %p467
      %p474 = scmp.eq.s32.totalorder %s28, 3
      %p475 = por %p473, %p474
      %p476 = scmp.ne.s32.totalorder %s468, %s471
      %p477 = scmp.eq.s32.totalorder %s28, 0
      %p478 = por %p476, %p477
      %p479 = scmp.ne.s32.totalorder %s468, %s471
      %p480 = scmp.eq.s32.totalorder %s33, 3
      %p481 = por %p479, %p480
      %p482 = scmp.ne.s32.totalorder %s471, %s472
      %p483 = scmp.eq.s32.totalorder %s33, 0
      %p484 = por %p482, %p483
      %p485 = scmp.ne.s32.totalorder %s471, %s472
      %p486 = scmp.eq.s32.totalorder %s34, 3
      %p487 = por %p485, %p486
      %p489 = scmp.ne.s32.totalorder %s472, %s488
      %p490 = scmp.eq.s32.totalorder %s34, 0
      %p491 = por %p489, %p490
      %p492 = scmp.le.s32.totalorder 1, %s28
      %p493 = scmp.lt.s32.totalorder %s28, 5
      %p494 = pnand %p492, %p493
      %p495 = pneg %p494
      // Predicated region
      $region9: #{tpu_custom_call.1} parent=5 // pred_check
        _
      $region10: #{tpu_custom_call.1} parent=5 // pred_check_branch
        %497 = sbr.rel (%p494) target = $region12
      $region11: #{tpu_custom_call.1} parent=5 // pred_region
        %s498 = ssub.s32 %s28, 1
        // Predicated region
        $region13: #{tpu_custom_call.1} parent=11 // pred_check
          %p499 = pneg %p141
        $region14: #{tpu_custom_call.1} parent=11 // pred_check_branch
          %501 = sbr.rel (%p499) target = $region16
        $region15: #{tpu_custom_call.1} parent=11 // pred_region
          _
        $region16: #{tpu_custom_call.1} parent=11 // pred_fallthru
          _
        // Predicated region
        $region17: #{tpu_custom_call.1} parent=11 // pred_check
          %p502 = pneg %p162
        $region18: #{tpu_custom_call.1} parent=11 // pred_check_branch
          %504 = sbr.rel (%p502) target = $region20
        $region19: #{tpu_custom_call.1} parent=11 // pred_region
          _
        $region20: #{tpu_custom_call.1} parent=11 // pred_fallthru
          _
        // Predicated region
        $region21: #{tpu_custom_call.1} parent=11 // pred_check
          %p505 = pneg %p183
        $region22: #{tpu_custom_call.1} parent=11 // pred_check_branch
          %507 = sbr.rel (%p505) target = $region24
        $region23: #{tpu_custom_call.1} parent=11 // pred_region
          _
        $region24: #{tpu_custom_call.1} parent=11 // pred_fallthru
          _
        // Predicated region
        $region25: #{tpu_custom_call.1} parent=11 // pred_check
          %p508 = pneg %p204
        $region26: #{tpu_custom_call.1} parent=11 // pred_check_branch
          %510 = sbr.rel (%p508) target = $region28
        $region27: #{tpu_custom_call.1} parent=11 // pred_region
          _
        $region28: #{tpu_custom_call.1} parent=11 // pred_fallthru
          _
        // Predicated region
        $region29: #{tpu_custom_call.1} parent=11 // pred_check
          %p511 = pneg %p225
        $region30: #{tpu_custom_call.1} parent=11 // pred_check_branch
          %513 = sbr.rel (%p511) target = $region32
        $region31: #{tpu_custom_call.1} parent=11 // pred_region
          _
        $region32: #{tpu_custom_call.1} parent=11 // pred_fallthru
          _
        // Predicated region
        $region33: #{tpu_custom_call.1} parent=11 // pred_check
          %p514 = pneg %p246
        $region34: #{tpu_custom_call.1} parent=11 // pred_check_branch
          %516 = sbr.rel (%p514) target = $region36
        $region35: #{tpu_custom_call.1} parent=11 // pred_region
          _
        $region36: #{tpu_custom_call.1} parent=11 // pred_fallthru
          _
        // Predicated region
        $region37: #{tpu_custom_call.1} parent=11 // pred_check
          %p517 = pneg %p267
        $region38: #{tpu_custom_call.1} parent=11 // pred_check_branch
          %519 = sbr.rel (%p517) target = $region40
        $region39: #{tpu_custom_call.1} parent=11 // pred_region
          _
        $region40: #{tpu_custom_call.1} parent=11 // pred_fallthru
          _
        // Predicated region
        $region41: #{tpu_custom_call.1} parent=11 // pred_check
          %p520 = pneg %p288
        $region42: #{tpu_custom_call.1} parent=11 // pred_check_branch
          %522 = sbr.rel (%p520) target = $region44
        $region43: #{tpu_custom_call.1} parent=11 // pred_region
          _
        $region44: #{tpu_custom_call.1} parent=11 // pred_fallthru
          _
        // Predicated region
        $region45: #{tpu_custom_call.1} parent=11 // pred_check
          %p523 = pneg %p309
        $region46: #{tpu_custom_call.1} parent=11 // pred_check_branch
          %525 = sbr.rel (%p523) target = $region48
        $region47: #{tpu_custom_call.1} parent=11 // pred_region
          _
        $region48: #{tpu_custom_call.1} parent=11 // pred_fallthru
          _
        // Predicated region
        $region49: #{tpu_custom_call.1} parent=11 // pred_check
          %p526 = pneg %p330
        $region50: #{tpu_custom_call.1} parent=11 // pred_check_branch
          %528 = sbr.rel (%p526) target = $region52
        $region51: #{tpu_custom_call.1} parent=11 // pred_region
          _
        $region52: #{tpu_custom_call.1} parent=11 // pred_fallthru
          _
        // Predicated region
        $region53: #{tpu_custom_call.1} parent=11 // pred_check
          %p529 = pneg %p351
        $region54: #{tpu_custom_call.1} parent=11 // pred_check_branch
          %531 = sbr.rel (%p529) target = $region56
        $region55: #{tpu_custom_call.1} parent=11 // pred_region
          _
        $region56: #{tpu_custom_call.1} parent=11 // pred_fallthru
          _
        // Predicated region
        $region57: #{tpu_custom_call.1} parent=11 // pred_check
          %p532 = pneg %p372
        $region58: #{tpu_custom_call.1} parent=11 // pred_check_branch
          %534 = sbr.rel (%p532) target = $region60
        $region59: #{tpu_custom_call.1} parent=11 // pred_region
          _
        $region60: #{tpu_custom_call.1} parent=11 // pred_fallthru
          _
        // Predicated region
        $region61: #{tpu_custom_call.1} parent=11 // pred_check
          %p535 = pneg %p393
        $region62: #{tpu_custom_call.1} parent=11 // pred_check_branch
          %537 = sbr.rel (%p535) target = $region64
        $region63: #{tpu_custom_call.1} parent=11 // pred_region
          _
        $region64: #{tpu_custom_call.1} parent=11 // pred_fallthru
          _
        // Predicated region
        $region65: #{tpu_custom_call.1} parent=11 // pred_check
          %p538 = pneg %p414
        $region66: #{tpu_custom_call.1} parent=11 // pred_check_branch
          %540 = sbr.rel (%p538) target = $region68
        $region67: #{tpu_custom_call.1} parent=11 // pred_region
          _
        $region68: #{tpu_custom_call.1} parent=11 // pred_fallthru
          _
        // Predicated region
        $region69: #{tpu_custom_call.1} parent=11 // pred_check
          %p541 = pneg %p435
        $region70: #{tpu_custom_call.1} parent=11 // pred_check_branch
          %543 = sbr.rel (%p541) target = $region72
        $region71: #{tpu_custom_call.1} parent=11 // pred_region
          _
        $region72: #{tpu_custom_call.1} parent=11 // pred_fallthru
          _
        // Predicated region
        $region73: #{tpu_custom_call.1} parent=11 // pred_check
          %p544 = pneg %p456
        $region74: #{tpu_custom_call.1} parent=11 // pred_check_branch
          %546 = sbr.rel (%p544) target = $region76
        $region75: #{tpu_custom_call.1} parent=11 // pred_region
          _
        $region76: #{tpu_custom_call.1} parent=11 // pred_fallthru
          _
      $region12: #{tpu_custom_call.1} parent=5 // pred_fallthru
        _
      %p547 = scmp.lt.s32.totalorder %s28, 4
      // Predicated region
      $region77: #{tpu_custom_call.1} parent=5 // pred_check
        %p548 = pneg %p547
      $region78: #{tpu_custom_call.1} parent=5 // pred_check_branch
        %550 = sbr.rel (%p548) target = $region80
      $region79: #{tpu_custom_call.1} parent=5 // pred_region
        // Predicated region
        $region81: #{tpu_custom_call.1} parent=79 // pred_check
          %p551 = pneg %p60
        $region82: #{tpu_custom_call.1} parent=79 // pred_check_branch
          %553 = sbr.rel (%p551) target = $region84
        $region83: #{tpu_custom_call.1} parent=79 // pred_region
          %p554 = scmp.lt.s32.totalorder %s35, 1
          %s555 = scalar_select %p554, %s35, 1
          %s556 = smul.addr %s555, 2
          %s557 = smul.addr %s556, 8
          %s558 = scalar_lea.vmem %s0, %s557
        $region84: #{tpu_custom_call.1} parent=79 // pred_fallthru
          _
        // Predicated region
        $region85: #{tpu_custom_call.1} parent=79 // pred_check
          %p559 = pneg %p88
        $region86: #{tpu_custom_call.1} parent=79 // pred_check_branch
          %561 = sbr.rel (%p559) target = $region88
        $region87: #{tpu_custom_call.1} parent=79 // pred_region
          %p562 = scmp.lt.s32.totalorder %s35, 1
          %s563 = scalar_select %p562, %s35, 1
          %p564 = scmp.lt.s32.totalorder %s36, 1
          %s565 = scalar_select %p564, %s36, 1
          %s566 = smul.addr %s563, 2
          %s567 = sadd.s32 %s565, %s566
          %s568 = smul.addr %s567, 8
          %s569 = scalar_lea.vmem %s1, %s568
        $region88: #{tpu_custom_call.1} parent=79 // pred_fallthru
          _
        // Predicated region
        $region89: #{tpu_custom_call.1} parent=79 // pred_check
          %p570 = pneg %p114
        $region90: #{tpu_custom_call.1} parent=79 // pred_check_branch
          %572 = sbr.rel (%p570) target = $region92
        $region91: #{tpu_custom_call.1} parent=79 // pred_region
          %p573 = scmp.lt.s32.totalorder %s35, 1
          %s574 = scalar_select %p573, %s35, 1
          %s575 = scalar_lea.vmem %s2, %s574
        $region92: #{tpu_custom_call.1} parent=79 // pred_fallthru
          _
      $region80: #{tpu_custom_call.1} parent=5 // pred_fallthru
        _
      %p576 = scmp.le.s32.totalorder 1, %s28
      %p577 = scmp.lt.s32.totalorder %s28, 5
      %p578 = pnand %p576, %p577
      %p579 = pneg %p578
      // Predicated region
      $region93: #{tpu_custom_call.1} parent=5 // pred_check
        _
      $region94: #{tpu_custom_call.1} parent=5 // pred_check_branch
        %581 = sbr.rel (%p578) target = $region96
      $region95: #{tpu_custom_call.1} parent=5 // pred_region
        %s582 = ssub.s32 %s28, 1
        %p583 = scmp.lt.s32.totalorder %s37, 1
        %s584 = scalar_select %p583, %s37, 1
        %s585 = smul.addr %s584, 2
        %s586 = smul.addr %s585, 8
        %s587 = scalar_lea.vmem %s0, %s586
        %p588 = pneg %p66
        %p589 = pneg %p63
        %p590 = scmp.lt.s32.totalorder %s37, 1
        %s591 = scalar_select %p590, %s37, 1
        %p592 = scmp.lt.s32.totalorder %s38, 1
        %s593 = scalar_select %p592, %s38, 1
        %s594 = smul.addr %s591, 2
        %s595 = sadd.s32 %s593, %s594
        %s596 = smul.addr %s595, 8
        %s597 = scalar_lea.vmem %s1, %s596
        %p598 = pneg %p94
        %p599 = pneg %p91
        %p600 = scmp.lt.s32.totalorder %s37, 1
        %s601 = scalar_select %p600, %s37, 1
        %s602 = scalar_lea.vmem %s2, %s601
        %p603 = pneg %p120
        %p604 = pneg %p117
        %p605 = pneg %p141
        %p606 = pneg %p138
        %p607 = pneg %p162
        %p608 = pneg %p159
        %p609 = pneg %p183
        %p610 = pneg %p180
        %p611 = pneg %p204
        %p612 = pneg %p201
        %p613 = pneg %p225
        %p614 = pneg %p222
        %p615 = pneg %p246
        %p616 = pneg %p243
        %p617 = pneg %p267
        %p618 = pneg %p264
        %p619 = pneg %p288
        %p620 = pneg %p285
        %p621 = pneg %p309
        %p622 = pneg %p306
        %p623 = pneg %p330
        %p624 = pneg %p327
        %p625 = pneg %p351
        %p626 = pneg %p348
        %p627 = pneg %p372
        %p628 = pneg %p369
        %p629 = pneg %p393
        %p630 = pneg %p390
        %p631 = pneg %p414
        %p632 = pneg %p411
        %p633 = pneg %p435
        %p634 = pneg %p432
        %p635 = pneg %p456
        %p636 = pneg %p453
        %p637 = pneg %p484
        %p638 = pneg %p481
        %s639 = sand.u32 %s471, 1
        %s640 = scalar_lea.sflag [#allocation3], %s639
        %s641 = sand.u32 %s471, 1
        %s642 = smul.addr %s641, 8
        %s643 = scalar_lea.vmem [#allocation2], %s642
        %p644 = scmp.lt.s32.totalorder %s37, 1
        %s645 = scalar_select %p644, %s37, 1
        %s646 = smul.addr %s645, 2
        %s647 = smul.addr %s646, 8
        %s648 = scalar_lea.vmem %s0, %s647
        %p649 = scmp.lt.s32.totalorder %s37, 1
        %s650 = scalar_select %p649, %s37, 1
        %p651 = scmp.lt.s32.totalorder %s38, 1
        %s652 = scalar_select %p651, %s38, 1
        %s653 = smul.addr %s650, 2
        %s654 = sadd.s32 %s652, %s653
        %s655 = smul.addr %s654, 8
        %s656 = scalar_lea.vmem %s1, %s655
        %p657 = scmp.lt.s32.totalorder %s37, 1
        %s658 = scalar_select %p657, %s37, 1
        %s659 = scalar_lea.vmem %s2, %s658
        %v661 = vld [vmem:[%s648] sm:$0xff]
        %v662 = vld [vmem:[%s648 + $0x8] sm:$0xff]
        %v663 = vld [vmem:[%s656] sm:$0xff]
        %v664 = vld [vmem:[%s15] sm:$0x1]
        %v665 = vld [vmem:[%s16] sm:$0x1]
        %666 = vadd.xlane.f32.xlu0 %v661
        %v667 = vpop.xlane.xlu0 %666
        %668 = vadd.xlane.f32.xlu0 %v662
        %v669 = vpop.xlane.xlu0 %668
        %v670 = vrcp.pop 128.0
        %v671 = vmul.f32 128.0, %v670
        %v672 = vsub.f32 1.0, %v671
        %v673 = vmul.f32 %v670, %v672
        %v674 = vadd.f32 %v670, %v673
        %vm675 = vweird.f32 %v670
        %v676 = vsel %vm675, %v670, %v674
        %v677 = vmul.f32 %v667, %v676
        %v678 = vmul.f32 %v669, %v676
        %v679 = vsub.f32 %v661, %v677
        %v680 = vsub.f32 %v662, %v678
        %v681 = vmul.f32 %v679, %v679
        %v682 = vmul.f32 %v680, %v680
        %683 = vadd.xlane.f32.xlu0 %v681
        %v684 = vpop.xlane.xlu0 %683
        %685 = vadd.xlane.f32.xlu0 %v682
        %v686 = vpop.xlane.xlu0 %685
        %v687 = vmul.f32 %v684, 0.007874016
        %v688 = vmul.f32 %v686, 0.007874016
        %v689 = vrsqrt.pop %v687
        %v690 = vmul.f32 %v689, %v687
        %v691 = vmul.f32 %v690, %v689
        %v692 = vmul.f32 0.5, %v691
        %v693 = vsub.f32 1.5, %v692
        %v694 = vmul.f32 %v689, %v693
        %v695 = vmul.f32 %v687, %v694
        %vm696 = vcmp.eq.f32.partialorder %v687, inf
        %v697 = vsel %vm696, %v687, %v695
        %vm698 = vcmp.eq.f32.partialorder %v687, 0.0
        %v699 = vand.u32 %v687, 2147483648
        %v700 = vsel %vm698, %v699, %v697
        %v701 = vrsqrt.pop %v688
        %v702 = vmul.f32 %v701, %v688
        %v703 = vmul.f32 %v702, %v701
        %v704 = vmul.f32 0.5, %v703
        %v705 = vsub.f32 1.5, %v704
        %v706 = vmul.f32 %v701, %v705
        %v707 = vmul.f32 %v688, %v706
        %vm708 = vcmp.eq.f32.partialorder %v688, inf
        %v709 = vsel %vm708, %v688, %v707
        %vm710 = vcmp.eq.f32.partialorder %v688, 0.0
        %v711 = vand.u32 %v688, 2147483648
        %v712 = vsel %vm710, %v711, %v709
        %v713 = vadd.f32 %v700, 1e-06
        %v714 = vadd.f32 %v712, 1e-06
        %v715 = vrcp.pop %v713
        %v716 = vmul.f32 %v713, %v715
        %v717 = vsub.f32 1.0, %v716
        %v718 = vmul.f32 %v715, %v717
        %v719 = vadd.f32 %v715, %v718
        %vm720 = vweird.f32 %v713
        %vm721 = vweird.f32 %v715
        %vm722 = vmor %vm720, %vm721
        %v723 = vsel %vm722, %v715, %v719
        %v724 = vand.u32 2147483647, %v713
        %vm725 = vcmp.eq.f32.partialorder %v724, 8.507059e+37
        %v726 = vand.u32 %v713, 2147483648
        %v727 = vor.u32 1.1754944e-38, %v726
        %v728 = vsel %vm725, %v727, %v723
        %v729 = vmul.f32 %v679, %v728
        %v730 = vrcp.pop %v714
        %v731 = vmul.f32 %v714, %v730
        %v732 = vsub.f32 1.0, %v731
        %v733 = vmul.f32 %v730, %v732
        %v734 = vadd.f32 %v730, %v733
        %vm735 = vweird.f32 %v714
        %vm736 = vweird.f32 %v730
        %vm737 = vmor %vm735, %vm736
        %v738 = vsel %vm737, %v730, %v734
        %v739 = vand.u32 2147483647, %v714
        %vm740 = vcmp.eq.f32.partialorder %v739, 8.507059e+37
        %v741 = vand.u32 %v714, 2147483648
        %v742 = vor.u32 1.1754944e-38, %v741
        %v743 = vsel %vm740, %v742, %v738
        %v744 = vmul.f32 %v680, %v743
        %v746 = vperm.slane %v664, 0
        %v748 = vmul.f32 %v746, %v729
        %v749 = vmul.f32 %v746, %v744
        %v751 = vperm.slane %v665, 0
        %v753 = vadd.f32 %v748, %v751
        %v754 = vadd.f32 %v749, %v751
        %v755 = vpack.c.bf16 %v754, %v753
        %756 = vadd.xlane.f32.xlu0 %v663
        %v757 = vpop.xlane.xlu0 %756
        %v758 = vmul.f32 %v757, %v676
        %v759 = vsub.f32 %v663, %v758
        %v760 = vmul.f32 %v759, %v759
        %761 = vadd.xlane.f32.xlu0 %v760
        %v762 = vpop.xlane.xlu0 %761
        %v763 = vmul.f32 %v762, 0.007874016
        %v764 = vrsqrt.pop %v763
        %v765 = vmul.f32 %v764, %v763
        %v766 = vmul.f32 %v765, %v764
        %v767 = vmul.f32 0.5, %v766
        %v768 = vsub.f32 1.5, %v767
        %v769 = vmul.f32 %v764, %v768
        %v770 = vmul.f32 %v763, %v769
        %vm771 = vcmp.eq.f32.partialorder %v763, inf
        %v772 = vsel %vm771, %v763, %v770
        %vm773 = vcmp.eq.f32.partialorder %v763, 0.0
        %v774 = vand.u32 %v763, 2147483648
        %v775 = vsel %vm773, %v774, %v772
        %v776 = vadd.f32 %v775, 1e-06
        %v777 = vrcp.pop %v776
        %v778 = vmul.f32 %v776, %v777
        %v779 = vsub.f32 1.0, %v778
        %v780 = vmul.f32 %v777, %v779
        %v781 = vadd.f32 %v777, %v780
        %vm782 = vweird.f32 %v776
        %vm783 = vweird.f32 %v777
        %vm784 = vmor %vm782, %vm783
        %v785 = vsel %vm784, %v777, %v781
        %v786 = vand.u32 2147483647, %v776
        %vm787 = vcmp.eq.f32.partialorder %v786, 8.507059e+37
        %v788 = vand.u32 %v776, 2147483648
        %v789 = vor.u32 1.1754944e-38, %v788
        %v790 = vsel %vm787, %v789, %v785
        %v791 = vmul.f32 %v759, %v790
        %v792 = vmul.f32 %v746, %v791
        %v793 = vadd.f32 %v792, %v751
        %v794 = vpack.c.bf16 %v793, %v793
        %v795 = vld [vmem:[%s3] sm:$0xf]
        %v796 = vld [vmem:[%s3 + $0x4] sm:$0xf]
        %v797 = vld [vmem:[%s3 + $0x8] sm:$0xf]
        %v798 = vld [vmem:[%s3 + $0xc] sm:$0xf]
        %v799 = vld [vmem:[%s3 + $0x10] sm:$0xf]
        %v800 = vld [vmem:[%s3 + $0x14] sm:$0xf]
        %v801 = vld [vmem:[%s3 + $0x18] sm:$0xf]
        %v802 = vld [vmem:[%s3 + $0x1c] sm:$0xf]
        %v803 = vld [vmem:[%s3 + $0x20] sm:$0xf]
        %v804 = vld [vmem:[%s3 + $0x24] sm:$0xf]
        %v805 = vld [vmem:[%s3 + $0x28] sm:$0xf]
        %v806 = vld [vmem:[%s3 + $0x2c] sm:$0xf]
        %v807 = vld [vmem:[%s3 + $0x30] sm:$0xf]
        %v808 = vld [vmem:[%s3 + $0x34] sm:$0xf]
        %v809 = vld [vmem:[%s3 + $0x38] sm:$0xf]
        %v810 = vld [vmem:[%s3 + $0x3c] sm:$0xf]
        %v827 = vunpack.c.l.b16 %v795
        %v828 = vunpack.c.l.b16 %v796
        %v829 = vunpack.c.l.b16 %v797
        %v830 = vunpack.c.l.b16 %v798
        %v831 = vunpack.c.l.b16 %v799
        %v832 = vunpack.c.l.b16 %v800
        %v833 = vunpack.c.l.b16 %v801
        %v834 = vunpack.c.l.b16 %v802
        %v835 = vunpack.c.l.b16 %v803
        %v836 = vunpack.c.l.b16 %v804
        %v837 = vunpack.c.l.b16 %v805
        %v838 = vunpack.c.l.b16 %v806
        %v839 = vunpack.c.l.b16 %v807
        %v840 = vunpack.c.l.b16 %v808
        %v841 = vunpack.c.l.b16 %v809
        %v842 = vunpack.c.l.b16 %v810
        %v843 = vpack.c.b16 %v828, %v827
        %v844 = vpack.c.b16 %v830, %v829
        %v845 = vpack.c.b16 %v832, %v831
        %v846 = vpack.c.b16 %v834, %v833
        %v847 = vpack.c.b16 %v836, %v835
        %v848 = vpack.c.b16 %v838, %v837
        %v849 = vpack.c.b16 %v840, %v839
        %v850 = vpack.c.b16 %v842, %v841
        %859 = vmatpush.bf16.msra.mxu0 %v850
        %860 = vmatpush.bf16.msra.mxu0 %v849
        %861 = vmatpush.bf16.msra.mxu0 %v848
        %862 = vmatpush.bf16.msra.mxu0 %v847
        %863 = vmatpush.bf16.msra.mxu0 %v846
        %864 = vmatpush.bf16.msra.mxu0 %v845
        %865 = vmatpush.bf16.msra.mxu0 %v844
        %866 = vmatpush.bf16.msra.mxu0 %v843
        %867 = vmatmul.bf16.gmra.mxu0 %v794
        %v868 = vpop.f32.mrf.mxu0
        %v869 = vadd.f32 0.0, %v868
        %v870 = vpop.f32.mrf.mxu0
        %871 = vdwg.mxu0
        %s872 = scalar_lea.vmem %s3, 64
        %v873 = vld [vmem:[%s872] sm:$0xf]
        %v874 = vld [vmem:[%s872 + $0x4] sm:$0xf]
        %v875 = vld [vmem:[%s872 + $0x8] sm:$0xf]
        %v876 = vld [vmem:[%s872 + $0xc] sm:$0xf]
        %v877 = vld [vmem:[%s872 + $0x10] sm:$0xf]
        %v878 = vld [vmem:[%s872 + $0x14] sm:$0xf]
        %v879 = vld [vmem:[%s872 + $0x18] sm:$0xf]
        %v880 = vld [vmem:[%s872 + $0x1c] sm:$0xf]
        %v881 = vld [vmem:[%s872 + $0x20] sm:$0xf]
        %v882 = vld [vmem:[%s872 + $0x24] sm:$0xf]
        %v883 = vld [vmem:[%s872 + $0x28] sm:$0xf]
        %v884 = vld [vmem:[%s872 + $0x2c] sm:$0xf]
        %v885 = vld [vmem:[%s872 + $0x30] sm:$0xf]
        %v886 = vld [vmem:[%s872 + $0x34] sm:$0xf]
        %v887 = vld [vmem:[%s872 + $0x38] sm:$0xf]
        %v888 = vld [vmem:[%s872 + $0x3c] sm:$0xf]
        %v905 = vunpack.c.l.b16 %v873
        %v906 = vunpack.c.l.b16 %v874
        %v907 = vunpack.c.l.b16 %v875
        %v908 = vunpack.c.l.b16 %v876
        %v909 = vunpack.c.l.b16 %v877
        %v910 = vunpack.c.l.b16 %v878
        %v911 = vunpack.c.l.b16 %v879
        %v912 = vunpack.c.l.b16 %v880
        %v913 = vunpack.c.l.b16 %v881
        %v914 = vunpack.c.l.b16 %v882
        %v915 = vunpack.c.l.b16 %v883
        %v916 = vunpack.c.l.b16 %v884
        %v917 = vunpack.c.l.b16 %v885
        %v918 = vunpack.c.l.b16 %v886
        %v919 = vunpack.c.l.b16 %v887
        %v920 = vunpack.c.l.b16 %v888
        %v921 = vpack.c.b16 %v906, %v905
        %v922 = vpack.c.b16 %v908, %v907
        %v923 = vpack.c.b16 %v910, %v909
        %v924 = vpack.c.b16 %v912, %v911
        %v925 = vpack.c.b16 %v914, %v913
        %v926 = vpack.c.b16 %v916, %v915
        %v927 = vpack.c.b16 %v918, %v917
        %v928 = vpack.c.b16 %v920, %v919
        %937 = vmatpush.bf16.msra.mxu0 %v928
        %938 = vmatpush.bf16.msra.mxu0 %v927
        %939 = vmatpush.bf16.msra.mxu0 %v926
        %940 = vmatpush.bf16.msra.mxu0 %v925
        %941 = vmatpush.bf16.msra.mxu0 %v924
        %942 = vmatpush.bf16.msra.mxu0 %v923
        %943 = vmatpush.bf16.msra.mxu0 %v922
        %944 = vmatpush.bf16.msra.mxu0 %v921
        %945 = vmatmul.bf16.gmra.mxu0 %v794
        %v946 = vpop.f32.mrf.mxu0
        %v947 = vadd.f32 0.0, %v946
        %v948 = vpop.f32.mrf.mxu0
        %949 = vdwg.mxu0
        %s950 = scalar_lea.vmem %s3, 128
        %v951 = vld [vmem:[%s950] sm:$0xf]
        %v952 = vld [vmem:[%s950 + $0x4] sm:$0xf]
        %v953 = vld [vmem:[%s950 + $0x8] sm:$0xf]
        %v954 = vld [vmem:[%s950 + $0xc] sm:$0xf]
        %v955 = vld [vmem:[%s950 + $0x10] sm:$0xf]
        %v956 = vld [vmem:[%s950 + $0x14] sm:$0xf]
        %v957 = vld [vmem:[%s950 + $0x18] sm:$0xf]
        %v958 = vld [vmem:[%s950 + $0x1c] sm:$0xf]
        %v959 = vld [vmem:[%s950 + $0x20] sm:$0xf]
        %v960 = vld [vmem:[%s950 + $0x24] sm:$0xf]
        %v961 = vld [vmem:[%s950 + $0x28] sm:$0xf]
        %v962 = vld [vmem:[%s950 + $0x2c] sm:$0xf]
        %v963 = vld [vmem:[%s950 + $0x30] sm:$0xf]
        %v964 = vld [vmem:[%s950 + $0x34] sm:$0xf]
        %v965 = vld [vmem:[%s950 + $0x38] sm:$0xf]
        %v966 = vld [vmem:[%s950 + $0x3c] sm:$0xf]
        %v983 = vunpack.c.l.b16 %v951
        %v984 = vunpack.c.l.b16 %v952
        %v985 = vunpack.c.l.b16 %v953
        %v986 = vunpack.c.l.b16 %v954
        %v987 = vunpack.c.l.b16 %v955
        %v988 = vunpack.c.l.b16 %v956
        %v989 = vunpack.c.l.b16 %v957
        %v990 = vunpack.c.l.b16 %v958
        %v991 = vunpack.c.l.b16 %v959
        %v992 = vunpack.c.l.b16 %v960
        %v993 = vunpack.c.l.b16 %v961
        %v994 = vunpack.c.l.b16 %v962
        %v995 = vunpack.c.l.b16 %v963
        %v996 = vunpack.c.l.b16 %v964
        %v997 = vunpack.c.l.b16 %v965
        %v998 = vunpack.c.l.b16 %v966
        %v999 = vpack.c.b16 %v984, %v983
        %v1000 = vpack.c.b16 %v986, %v985
        %v1001 = vpack.c.b16 %v988, %v987
        %v1002 = vpack.c.b16 %v990, %v989
        %v1003 = vpack.c.b16 %v992, %v991
        %v1004 = vpack.c.b16 %v994, %v993
        %v1005 = vpack.c.b16 %v996, %v995
        %v1006 = vpack.c.b16 %v998, %v997
        %1015 = vmatpush.bf16.msra.mxu0 %v1006
        %1016 = vmatpush.bf16.msra.mxu0 %v1005
        %1017 = vmatpush.bf16.msra.mxu0 %v1004
        %1018 = vmatpush.bf16.msra.mxu0 %v1003
        %1019 = vmatpush.bf16.msra.mxu0 %v1002
        %1020 = vmatpush.bf16.msra.mxu0 %v1001
        %1021 = vmatpush.bf16.msra.mxu0 %v1000
        %1022 = vmatpush.bf16.msra.mxu0 %v999
        %1023 = vmatmul.bf16.gmra.mxu0 %v794
        %v1024 = vpop.f32.mrf.mxu0
        %v1025 = vadd.f32 0.0, %v1024
        %v1026 = vpop.f32.mrf.mxu0
        %1027 = vdwg.mxu0
        %s1028 = scalar_lea.vmem %s3, 192
        %v1029 = vld [vmem:[%s1028] sm:$0xf]
        %v1030 = vld [vmem:[%s1028 + $0x4] sm:$0xf]
        %v1031 = vld [vmem:[%s1028 + $0x8] sm:$0xf]
        %v1032 = vld [vmem:[%s1028 + $0xc] sm:$0xf]
        %v1033 = vld [vmem:[%s1028 + $0x10] sm:$0xf]
        %v1034 = vld [vmem:[%s1028 + $0x14] sm:$0xf]
        %v1035 = vld [vmem:[%s1028 + $0x18] sm:$0xf]
        %v1036 = vld [vmem:[%s1028 + $0x1c] sm:$0xf]
        %v1037 = vld [vmem:[%s1028 + $0x20] sm:$0xf]
        %v1038 = vld [vmem:[%s1028 + $0x24] sm:$0xf]
        %v1039 = vld [vmem:[%s1028 + $0x28] sm:$0xf]
        %v1040 = vld [vmem:[%s1028 + $0x2c] sm:$0xf]
        %v1041 = vld [vmem:[%s1028 + $0x30] sm:$0xf]
        %v1042 = vld [vmem:[%s1028 + $0x34] sm:$0xf]
        %v1043 = vld [vmem:[%s1028 + $0x38] sm:$0xf]
        %v1044 = vld [vmem:[%s1028 + $0x3c] sm:$0xf]
        %v1061 = vunpack.c.l.b16 %v1029
        %v1062 = vunpack.c.l.b16 %v1030
        %v1063 = vunpack.c.l.b16 %v1031
        %v1064 = vunpack.c.l.b16 %v1032
        %v1065 = vunpack.c.l.b16 %v1033
        %v1066 = vunpack.c.l.b16 %v1034
        %v1067 = vunpack.c.l.b16 %v1035
        %v1068 = vunpack.c.l.b16 %v1036
        %v1069 = vunpack.c.l.b16 %v1037
        %v1070 = vunpack.c.l.b16 %v1038
        %v1071 = vunpack.c.l.b16 %v1039
        %v1072 = vunpack.c.l.b16 %v1040
        %v1073 = vunpack.c.l.b16 %v1041
        %v1074 = vunpack.c.l.b16 %v1042
        %v1075 = vunpack.c.l.b16 %v1043
        %v1076 = vunpack.c.l.b16 %v1044
        %v1077 = vpack.c.b16 %v1062, %v1061
        %v1078 = vpack.c.b16 %v1064, %v1063
        %v1079 = vpack.c.b16 %v1066, %v1065
        %v1080 = vpack.c.b16 %v1068, %v1067
        %v1081 = vpack.c.b16 %v1070, %v1069
        %v1082 = vpack.c.b16 %v1072, %v1071
        %v1083 = vpack.c.b16 %v1074, %v1073
        %v1084 = vpack.c.b16 %v1076, %v1075
        %1093 = vmatpush.bf16.msra.mxu0 %v1084
        %1094 = vmatpush.bf16.msra.mxu0 %v1083
        %1095 = vmatpush.bf16.msra.mxu0 %v1082
        %1096 = vmatpush.bf16.msra.mxu0 %v1081
        %1097 = vmatpush.bf16.msra.mxu0 %v1080
        %1098 = vmatpush.bf16.msra.mxu0 %v1079
        %1099 = vmatpush.bf16.msra.mxu0 %v1078
        %1100 = vmatpush.bf16.msra.mxu0 %v1077
        %1101 = vmatmul.bf16.gmra.mxu0 %v794
        %v1102 = vpop.f32.mrf.mxu0
        %v1103 = vadd.f32 0.0, %v1102
        %v1104 = vpop.f32.mrf.mxu0
        %1105 = vdwg.mxu0
        %v1106 = vld [vmem:[%s6] sm:$0x1]
        %v1107 = vld [vmem:[%s6 + $0x1] sm:$0x1]
        %v1108 = vld [vmem:[%s6 + $0x2] sm:$0x1]
        %v1109 = vld [vmem:[%s6 + $0x3] sm:$0x1]
        %v1114 = vperm.slane %v1106, 0
        %v1115 = vperm.slane %v1107, 0
        %v1116 = vperm.slane %v1108, 0
        %v1117 = vperm.slane %v1109, 0
        %v1122 = vadd.f32 %v869, %v1114
        %v1123 = vadd.f32 %v947, %v1115
        %v1124 = vadd.f32 %v1025, %v1116
        %v1125 = vadd.f32 %v1103, %v1117
        %v1126 = vmul.f32 %v1122, 0.17677669
        %v1127 = vmul.f32 %v1123, 0.17677669
        %v1128 = vmul.f32 %v1124, 0.17677669
        %v1129 = vmul.f32 %v1125, 0.17677669
        %v1130 = vpack.c.bf16 %v1126, %v1126
        %v1131 = vpack.c.bf16 %v1127, %v1127
        %v1132 = vpack.c.bf16 %v1128, %v1128
        %v1133 = vpack.c.bf16 %v1129, %v1129
        %v1134 = vld [vmem:[%s4] sm:$0xf]
        %v1135 = vld [vmem:[%s4 + $0x4] sm:$0xf]
        %v1136 = vld [vmem:[%s4 + $0x8] sm:$0xf]
        %v1137 = vld [vmem:[%s4 + $0xc] sm:$0xf]
        %v1138 = vld [vmem:[%s4 + $0x10] sm:$0xf]
        %v1139 = vld [vmem:[%s4 + $0x14] sm:$0xf]
        %v1140 = vld [vmem:[%s4 + $0x18] sm:$0xf]
        %v1141 = vld [vmem:[%s4 + $0x1c] sm:$0xf]
        %v1142 = vld [vmem:[%s4 + $0x20] sm:$0xf]
        %v1143 = vld [vmem:[%s4 + $0x24] sm:$0xf]
        %v1144 = vld [vmem:[%s4 + $0x28] sm:$0xf]
        %v1145 = vld [vmem:[%s4 + $0x2c] sm:$0xf]
        %v1146 = vld [vmem:[%s4 + $0x30] sm:$0xf]
        %v1147 = vld [vmem:[%s4 + $0x34] sm:$0xf]
        %v1148 = vld [vmem:[%s4 + $0x38] sm:$0xf]
        %v1149 = vld [vmem:[%s4 + $0x3c] sm:$0xf]
        %v1166 = vunpack.c.l.b16 %v1134
        %v1167 = vunpack.c.l.b16 %v1135
        %v1168 = vunpack.c.l.b16 %v1136
        %v1169 = vunpack.c.l.b16 %v1137
        %v1170 = vunpack.c.l.b16 %v1138
        %v1171 = vunpack.c.l.b16 %v1139
        %v1172 = vunpack.c.l.b16 %v1140
        %v1173 = vunpack.c.l.b16 %v1141
        %v1174 = vunpack.c.l.b16 %v1142
        %v1175 = vunpack.c.l.b16 %v1143
        %v1176 = vunpack.c.l.b16 %v1144
        %v1177 = vunpack.c.l.b16 %v1145
        %v1178 = vunpack.c.l.b16 %v1146
        %v1179 = vunpack.c.l.b16 %v1147
        %v1180 = vunpack.c.l.b16 %v1148
        %v1181 = vunpack.c.l.b16 %v1149
        %v1182 = vpack.c.b16 %v1167, %v1166
        %v1183 = vpack.c.b16 %v1169, %v1168
        %v1184 = vpack.c.b16 %v1171, %v1170
        %v1185 = vpack.c.b16 %v1173, %v1172
        %v1186 = vpack.c.b16 %v1175, %v1174
        %v1187 = vpack.c.b16 %v1177, %v1176
        %v1188 = vpack.c.b16 %v1179, %v1178
        %v1189 = vpack.c.b16 %v1181, %v1180
        %1198 = vmatpush.bf16.msra.mxu0 %v1189
        %1199 = vmatpush.bf16.msra.mxu0 %v1188
        %1200 = vmatpush.bf16.msra.mxu0 %v1187
        %1201 = vmatpush.bf16.msra.mxu0 %v1186
        %1202 = vmatpush.bf16.msra.mxu0 %v1185
        %1203 = vmatpush.bf16.msra.mxu0 %v1184
        %1204 = vmatpush.bf16.msra.mxu0 %v1183
        %1205 = vmatpush.bf16.msra.mxu0 %v1182
        %1206 = vmatmul.bf16.gmra.mxu0 %v755
        %v1207 = vpop.f32.mrf.mxu0
        %v1208 = vadd.f32 0.0, %v1207
        %v1209 = vpop.f32.mrf.mxu0
        %v1210 = vadd.f32 0.0, %v1209
        %1211 = vdwg.mxu0
        %s1212 = scalar_lea.vmem %s4, 64
        %v1213 = vld [vmem:[%s1212] sm:$0xf]
        %v1214 = vld [vmem:[%s1212 + $0x4] sm:$0xf]
        %v1215 = vld [vmem:[%s1212 + $0x8] sm:$0xf]
        %v1216 = vld [vmem:[%s1212 + $0xc] sm:$0xf]
        %v1217 = vld [vmem:[%s1212 + $0x10] sm:$0xf]
        %v1218 = vld [vmem:[%s1212 + $0x14] sm:$0xf]
        %v1219 = vld [vmem:[%s1212 + $0x18] sm:$0xf]
        %v1220 = vld [vmem:[%s1212 + $0x1c] sm:$0xf]
        %v1221 = vld [vmem:[%s1212 + $0x20] sm:$0xf]
        %v1222 = vld [vmem:[%s1212 + $0x24] sm:$0xf]
        %v1223 = vld [vmem:[%s1212 + $0x28] sm:$0xf]
        %v1224 = vld [vmem:[%s1212 + $0x2c] sm:$0xf]
        %v1225 = vld [vmem:[%s1212 + $0x30] sm:$0xf]
        %v1226 = vld [vmem:[%s1212 + $0x34] sm:$0xf]
        %v1227 = vld [vmem:[%s1212 + $0x38] sm:$0xf]
        %v1228 = vld [vmem:[%s1212 + $0x3c] sm:$0xf]
        %v1245 = vunpack.c.l.b16 %v1213
        %v1246 = vunpack.c.l.b16 %v1214
        %v1247 = vunpack.c.l.b16 %v1215
        %v1248 = vunpack.c.l.b16 %v1216
        %v1249 = vunpack.c.l.b16 %v1217
        %v1250 = vunpack.c.l.b16 %v1218
        %v1251 = vunpack.c.l.b16 %v1219
        %v1252 = vunpack.c.l.b16 %v1220
        %v1253 = vunpack.c.l.b16 %v1221
        %v1254 = vunpack.c.l.b16 %v1222
        %v1255 = vunpack.c.l.b16 %v1223
        %v1256 = vunpack.c.l.b16 %v1224
        %v1257 = vunpack.c.l.b16 %v1225
        %v1258 = vunpack.c.l.b16 %v1226
        %v1259 = vunpack.c.l.b16 %v1227
        %v1260 = vunpack.c.l.b16 %v1228
        %v1261 = vpack.c.b16 %v1246, %v1245
        %v1262 = vpack.c.b16 %v1248, %v1247
        %v1263 = vpack.c.b16 %v1250, %v1249
        %v1264 = vpack.c.b16 %v1252, %v1251
        %v1265 = vpack.c.b16 %v1254, %v1253
        %v1266 = vpack.c.b16 %v1256, %v1255
        %v1267 = vpack.c.b16 %v1258, %v1257
        %v1268 = vpack.c.b16 %v1260, %v1259
        %1277 = vmatpush.bf16.msra.mxu0 %v1268
        %1278 = vmatpush.bf16.msra.mxu0 %v1267
        %1279 = vmatpush.bf16.msra.mxu0 %v1266
        %1280 = vmatpush.bf16.msra.mxu0 %v1265
        %1281 = vmatpush.bf16.msra.mxu0 %v1264
        %1282 = vmatpush.bf16.msra.mxu0 %v1263
        %1283 = vmatpush.bf16.msra.mxu0 %v1262
        %1284 = vmatpush.bf16.msra.mxu0 %v1261
        %1285 = vmatmul.bf16.gmra.mxu0 %v755
        %v1286 = vpop.f32.mrf.mxu0
        %v1287 = vadd.f32 0.0, %v1286
        %v1288 = vpop.f32.mrf.mxu0
        %v1289 = vadd.f32 0.0, %v1288
        %1290 = vdwg.mxu0
        %s1291 = scalar_lea.vmem %s4, 128
        %v1292 = vld [vmem:[%s1291] sm:$0xf]
        %v1293 = vld [vmem:[%s1291 + $0x4] sm:$0xf]
        %v1294 = vld [vmem:[%s1291 + $0x8] sm:$0xf]
        %v1295 = vld [vmem:[%s1291 + $0xc] sm:$0xf]
        %v1296 = vld [vmem:[%s1291 + $0x10] sm:$0xf]
        %v1297 = vld [vmem:[%s1291 + $0x14] sm:$0xf]
        %v1298 = vld [vmem:[%s1291 + $0x18] sm:$0xf]
        %v1299 = vld [vmem:[%s1291 + $0x1c] sm:$0xf]
        %v1300 = vld [vmem:[%s1291 + $0x20] sm:$0xf]
        %v1301 = vld [vmem:[%s1291 + $0x24] sm:$0xf]
        %v1302 = vld [vmem:[%s1291 + $0x28] sm:$0xf]
        %v1303 = vld [vmem:[%s1291 + $0x2c] sm:$0xf]
        %v1304 = vld [vmem:[%s1291 + $0x30] sm:$0xf]
        %v1305 = vld [vmem:[%s1291 + $0x34] sm:$0xf]
        %v1306 = vld [vmem:[%s1291 + $0x38] sm:$0xf]
        %v1307 = vld [vmem:[%s1291 + $0x3c] sm:$0xf]
        %v1324 = vunpack.c.l.b16 %v1292
        %v1325 = vunpack.c.l.b16 %v1293
        %v1326 = vunpack.c.l.b16 %v1294
        %v1327 = vunpack.c.l.b16 %v1295
        %v1328 = vunpack.c.l.b16 %v1296
        %v1329 = vunpack.c.l.b16 %v1297
        %v1330 = vunpack.c.l.b16 %v1298
        %v1331 = vunpack.c.l.b16 %v1299
        %v1332 = vunpack.c.l.b16 %v1300
        %v1333 = vunpack.c.l.b16 %v1301
        %v1334 = vunpack.c.l.b16 %v1302
        %v1335 = vunpack.c.l.b16 %v1303
        %v1336 = vunpack.c.l.b16 %v1304
        %v1337 = vunpack.c.l.b16 %v1305
        %v1338 = vunpack.c.l.b16 %v1306
        %v1339 = vunpack.c.l.b16 %v1307
        %v1340 = vpack.c.b16 %v1325, %v1324
        %v1341 = vpack.c.b16 %v1327, %v1326
        %v1342 = vpack.c.b16 %v1329, %v1328
        %v1343 = vpack.c.b16 %v1331, %v1330
        %v1344 = vpack.c.b16 %v1333, %v1332
        %v1345 = vpack.c.b16 %v1335, %v1334
        %v1346 = vpack.c.b16 %v1337, %v1336
        %v1347 = vpack.c.b16 %v1339, %v1338
        %1356 = vmatpush.bf16.msra.mxu0 %v1347
        %1357 = vmatpush.bf16.msra.mxu0 %v1346
        %1358 = vmatpush.bf16.msra.mxu0 %v1345
        %1359 = vmatpush.bf16.msra.mxu0 %v1344
        %1360 = vmatpush.bf16.msra.mxu0 %v1343
        %1361 = vmatpush.bf16.msra.mxu0 %v1342
        %1362 = vmatpush.bf16.msra.mxu0 %v1341
        %1363 = vmatpush.bf16.msra.mxu0 %v1340
        %1364 = vmatmul.bf16.gmra.mxu0 %v755
        %v1365 = vpop.f32.mrf.mxu0
        %v1366 = vadd.f32 0.0, %v1365
        %v1367 = vpop.f32.mrf.mxu0
        %v1368 = vadd.f32 0.0, %v1367
        %1369 = vdwg.mxu0
        %s1370 = scalar_lea.vmem %s4, 192
        %v1371 = vld [vmem:[%s1370] sm:$0xf]
        %v1372 = vld [vmem:[%s1370 + $0x4] sm:$0xf]
        %v1373 = vld [vmem:[%s1370 + $0x8] sm:$0xf]
        %v1374 = vld [vmem:[%s1370 + $0xc] sm:$0xf]
        %v1375 = vld [vmem:[%s1370 + $0x10] sm:$0xf]
        %v1376 = vld [vmem:[%s1370 + $0x14] sm:$0xf]
        %v1377 = vld [vmem:[%s1370 + $0x18] sm:$0xf]
        %v1378 = vld [vmem:[%s1370 + $0x1c] sm:$0xf]
        %v1379 = vld [vmem:[%s1370 + $0x20] sm:$0xf]
        %v1380 = vld [vmem:[%s1370 + $0x24] sm:$0xf]
        %v1381 = vld [vmem:[%s1370 + $0x28] sm:$0xf]
        %v1382 = vld [vmem:[%s1370 + $0x2c] sm:$0xf]
        %v1383 = vld [vmem:[%s1370 + $0x30] sm:$0xf]
        %v1384 = vld [vmem:[%s1370 + $0x34] sm:$0xf]
        %v1385 = vld [vmem:[%s1370 + $0x38] sm:$0xf]
        %v1386 = vld [vmem:[%s1370 + $0x3c] sm:$0xf]
        %v1403 = vunpack.c.l.b16 %v1371
        %v1404 = vunpack.c.l.b16 %v1372
        %v1405 = vunpack.c.l.b16 %v1373
        %v1406 = vunpack.c.l.b16 %v1374
        %v1407 = vunpack.c.l.b16 %v1375
        %v1408 = vunpack.c.l.b16 %v1376
        %v1409 = vunpack.c.l.b16 %v1377
        %v1410 = vunpack.c.l.b16 %v1378
        %v1411 = vunpack.c.l.b16 %v1379
        %v1412 = vunpack.c.l.b16 %v1380
        %v1413 = vunpack.c.l.b16 %v1381
        %v1414 = vunpack.c.l.b16 %v1382
        %v1415 = vunpack.c.l.b16 %v1383
        %v1416 = vunpack.c.l.b16 %v1384
        %v1417 = vunpack.c.l.b16 %v1385
        %v1418 = vunpack.c.l.b16 %v1386
        %v1419 = vpack.c.b16 %v1404, %v1403
        %v1420 = vpack.c.b16 %v1406, %v1405
        %v1421 = vpack.c.b16 %v1408, %v1407
        %v1422 = vpack.c.b16 %v1410, %v1409
        %v1423 = vpack.c.b16 %v1412, %v1411
        %v1424 = vpack.c.b16 %v1414, %v1413
        %v1425 = vpack.c.b16 %v1416, %v1415
        %v1426 = vpack.c.b16 %v1418, %v1417
        %1435 = vmatpush.bf16.msra.mxu0 %v1426
        %1436 = vmatpush.bf16.msra.mxu0 %v1425
        %1437 = vmatpush.bf16.msra.mxu0 %v1424
        %1438 = vmatpush.bf16.msra.mxu0 %v1423
        %1439 = vmatpush.bf16.msra.mxu0 %v1422
        %1440 = vmatpush.bf16.msra.mxu0 %v1421
        %1441 = vmatpush.bf16.msra.mxu0 %v1420
        %1442 = vmatpush.bf16.msra.mxu0 %v1419
        %1443 = vmatmul.bf16.gmra.mxu0 %v755
        %v1444 = vpop.f32.mrf.mxu0
        %v1445 = vadd.f32 0.0, %v1444
        %v1446 = vpop.f32.mrf.mxu0
        %v1447 = vadd.f32 0.0, %v1446
        %1448 = vdwg.mxu0
        %v1449 = vld [vmem:[%s7] sm:$0x1]
        %v1450 = vld [vmem:[%s7 + $0x1] sm:$0x1]
        %v1451 = vld [vmem:[%s7 + $0x2] sm:$0x1]
        %v1452 = vld [vmem:[%s7 + $0x3] sm:$0x1]
        %v1457 = vperm.slane %v1449, 0
        %v1458 = vperm.slane %v1450, 0
        %v1459 = vperm.slane %v1451, 0
        %v1460 = vperm.slane %v1452, 0
        %v1465 = vadd.f32 %v1208, %v1457
        %v1466 = vadd.f32 %v1210, %v1457
        %v1467 = vadd.f32 %v1287, %v1458
        %v1468 = vadd.f32 %v1289, %v1458
        %v1469 = vadd.f32 %v1366, %v1459
        %v1470 = vadd.f32 %v1368, %v1459
        %v1471 = vadd.f32 %v1445, %v1460
        %v1472 = vadd.f32 %v1447, %v1460
        %v1473 = vpack.c.bf16 %v1465, %v1465
        %v1474 = vpack.c.bf16 %v1466, %v1466
        %v1475 = vpack.c.bf16 %v1467, %v1467
        %v1476 = vpack.c.bf16 %v1468, %v1468
        %v1477 = vpack.c.bf16 %v1469, %v1469
        %v1478 = vpack.c.bf16 %v1470, %v1470
        %v1479 = vpack.c.bf16 %v1471, %v1471
        %v1480 = vpack.c.bf16 %v1472, %v1472
        %v1481 = vld [vmem:[%s5] sm:$0xf]
        %v1482 = vld [vmem:[%s5 + $0x4] sm:$0xf]
        %v1483 = vld [vmem:[%s5 + $0x8] sm:$0xf]
        %v1484 = vld [vmem:[%s5 + $0xc] sm:$0xf]
        %v1485 = vld [vmem:[%s5 + $0x10] sm:$0xf]
        %v1486 = vld [vmem:[%s5 + $0x14] sm:$0xf]
        %v1487 = vld [vmem:[%s5 + $0x18] sm:$0xf]
        %v1488 = vld [vmem:[%s5 + $0x1c] sm:$0xf]
        %v1489 = vld [vmem:[%s5 + $0x20] sm:$0xf]
        %v1490 = vld [vmem:[%s5 + $0x24] sm:$0xf]
        %v1491 = vld [vmem:[%s5 + $0x28] sm:$0xf]
        %v1492 = vld [vmem:[%s5 + $0x2c] sm:$0xf]
        %v1493 = vld [vmem:[%s5 + $0x30] sm:$0xf]
        %v1494 = vld [vmem:[%s5 + $0x34] sm:$0xf]
        %v1495 = vld [vmem:[%s5 + $0x38] sm:$0xf]
        %v1496 = vld [vmem:[%s5 + $0x3c] sm:$0xf]
        %v1513 = vunpack.c.l.b16 %v1481
        %v1514 = vunpack.c.l.b16 %v1482
        %v1515 = vunpack.c.l.b16 %v1483
        %v1516 = vunpack.c.l.b16 %v1484
        %v1517 = vunpack.c.l.b16 %v1485
        %v1518 = vunpack.c.l.b16 %v1486
        %v1519 = vunpack.c.l.b16 %v1487
        %v1520 = vunpack.c.l.b16 %v1488
        %v1521 = vunpack.c.l.b16 %v1489
        %v1522 = vunpack.c.l.b16 %v1490
        %v1523 = vunpack.c.l.b16 %v1491
        %v1524 = vunpack.c.l.b16 %v1492
        %v1525 = vunpack.c.l.b16 %v1493
        %v1526 = vunpack.c.l.b16 %v1494
        %v1527 = vunpack.c.l.b16 %v1495
        %v1528 = vunpack.c.l.b16 %v1496
        %v1529 = vpack.c.b16 %v1514, %v1513
        %v1530 = vpack.c.b16 %v1516, %v1515
        %v1531 = vpack.c.b16 %v1518, %v1517
        %v1532 = vpack.c.b16 %v1520, %v1519
        %v1533 = vpack.c.b16 %v1522, %v1521
        %v1534 = vpack.c.b16 %v1524, %v1523
        %v1535 = vpack.c.b16 %v1526, %v1525
        %v1536 = vpack.c.b16 %v1528, %v1527
        %1545 = vmatpush.bf16.msra.mxu0 %v1536
        %1546 = vmatpush.bf16.msra.mxu0 %v1535
        %1547 = vmatpush.bf16.msra.mxu0 %v1534
        %1548 = vmatpush.bf16.msra.mxu0 %v1533
        %1549 = vmatpush.bf16.msra.mxu0 %v1532
        %1550 = vmatpush.bf16.msra.mxu0 %v1531
        %1551 = vmatpush.bf16.msra.mxu0 %v1530
        %1552 = vmatpush.bf16.msra.mxu0 %v1529
        %1553 = vmatmul.bf16.gmra.mxu0 %v755
        %v1554 = vpop.f32.mrf.mxu0
        %v1555 = vadd.f32 0.0, %v1554
        %v1556 = vpop.f32.mrf.mxu0
        %v1557 = vadd.f32 0.0, %v1556
        %1558 = vdwg.mxu0
        %s1559 = scalar_lea.vmem %s5, 64
        %v1560 = vld [vmem:[%s1559] sm:$0xf]
        %v1561 = vld [vmem:[%s1559 + $0x4] sm:$0xf]
        %v1562 = vld [vmem:[%s1559 + $0x8] sm:$0xf]
        %v1563 = vld [vmem:[%s1559 + $0xc] sm:$0xf]
        %v1564 = vld [vmem:[%s1559 + $0x10] sm:$0xf]
        %v1565 = vld [vmem:[%s1559 + $0x14] sm:$0xf]
        %v1566 = vld [vmem:[%s1559 + $0x18] sm:$0xf]
        %v1567 = vld [vmem:[%s1559 + $0x1c] sm:$0xf]
        %v1568 = vld [vmem:[%s1559 + $0x20] sm:$0xf]
        %v1569 = vld [vmem:[%s1559 + $0x24] sm:$0xf]
        %v1570 = vld [vmem:[%s1559 + $0x28] sm:$0xf]
        %v1571 = vld [vmem:[%s1559 + $0x2c] sm:$0xf]
        %v1572 = vld [vmem:[%s1559 + $0x30] sm:$0xf]
        %v1573 = vld [vmem:[%s1559 + $0x34] sm:$0xf]
        %v1574 = vld [vmem:[%s1559 + $0x38] sm:$0xf]
        %v1575 = vld [vmem:[%s1559 + $0x3c] sm:$0xf]
        %v1592 = vunpack.c.l.b16 %v1560
        %v1593 = vunpack.c.l.b16 %v1561
        %v1594 = vunpack.c.l.b16 %v1562
        %v1595 = vunpack.c.l.b16 %v1563
        %v1596 = vunpack.c.l.b16 %v1564
        %v1597 = vunpack.c.l.b16 %v1565
        %v1598 = vunpack.c.l.b16 %v1566
        %v1599 = vunpack.c.l.b16 %v1567
        %v1600 = vunpack.c.l.b16 %v1568
        %v1601 = vunpack.c.l.b16 %v1569
        %v1602 = vunpack.c.l.b16 %v1570
        %v1603 = vunpack.c.l.b16 %v1571
        %v1604 = vunpack.c.l.b16 %v1572
        %v1605 = vunpack.c.l.b16 %v1573
        %v1606 = vunpack.c.l.b16 %v1574
        %v1607 = vunpack.c.l.b16 %v1575
        %v1608 = vpack.c.b16 %v1593, %v1592
        %v1609 = vpack.c.b16 %v1595, %v1594
        %v1610 = vpack.c.b16 %v1597, %v1596
        %v1611 = vpack.c.b16 %v1599, %v1598
        %v1612 = vpack.c.b16 %v1601, %v1600
        %v1613 = vpack.c.b16 %v1603, %v1602
        %v1614 = vpack.c.b16 %v1605, %v1604
        %v1615 = vpack.c.b16 %v1607, %v1606
        %1624 = vmatpush.bf16.msra.mxu0 %v1615
        %1625 = vmatpush.bf16.msra.mxu0 %v1614
        %1626 = vmatpush.bf16.msra.mxu0 %v1613
        %1627 = vmatpush.bf16.msra.mxu0 %v1612
        %1628 = vmatpush.bf16.msra.mxu0 %v1611
        %1629 = vmatpush.bf16.msra.mxu0 %v1610
        %1630 = vmatpush.bf16.msra.mxu0 %v1609
        %1631 = vmatpush.bf16.msra.mxu0 %v1608
        %1632 = vmatmul.bf16.gmra.mxu0 %v755
        %v1633 = vpop.f32.mrf.mxu0
        %v1634 = vadd.f32 0.0, %v1633
        %v1635 = vpop.f32.mrf.mxu0
        %v1636 = vadd.f32 0.0, %v1635
        %1637 = vdwg.mxu0
        %s1638 = scalar_lea.vmem %s5, 128
        %v1639 = vld [vmem:[%s1638] sm:$0xf]
        %v1640 = vld [vmem:[%s1638 + $0x4] sm:$0xf]
        %v1641 = vld [vmem:[%s1638 + $0x8] sm:$0xf]
        %v1642 = vld [vmem:[%s1638 + $0xc] sm:$0xf]
        %v1643 = vld [vmem:[%s1638 + $0x10] sm:$0xf]
        %v1644 = vld [vmem:[%s1638 + $0x14] sm:$0xf]
        %v1645 = vld [vmem:[%s1638 + $0x18] sm:$0xf]
        %v1646 = vld [vmem:[%s1638 + $0x1c] sm:$0xf]
        %v1647 = vld [vmem:[%s1638 + $0x20] sm:$0xf]
        %v1648 = vld [vmem:[%s1638 + $0x24] sm:$0xf]
        %v1649 = vld [vmem:[%s1638 + $0x28] sm:$0xf]
        %v1650 = vld [vmem:[%s1638 + $0x2c] sm:$0xf]
        %v1651 = vld [vmem:[%s1638 + $0x30] sm:$0xf]
        %v1652 = vld [vmem:[%s1638 + $0x34] sm:$0xf]
        %v1653 = vld [vmem:[%s1638 + $0x38] sm:$0xf]
        %v1654 = vld [vmem:[%s1638 + $0x3c] sm:$0xf]
        %v1671 = vunpack.c.l.b16 %v1639
        %v1672 = vunpack.c.l.b16 %v1640
        %v1673 = vunpack.c.l.b16 %v1641
        %v1674 = vunpack.c.l.b16 %v1642
        %v1675 = vunpack.c.l.b16 %v1643
        %v1676 = vunpack.c.l.b16 %v1644
        %v1677 = vunpack.c.l.b16 %v1645
        %v1678 = vunpack.c.l.b16 %v1646
        %v1679 = vunpack.c.l.b16 %v1647
        %v1680 = vunpack.c.l.b16 %v1648
        %v1681 = vunpack.c.l.b16 %v1649
        %v1682 = vunpack.c.l.b16 %v1650
        %v1683 = vunpack.c.l.b16 %v1651
        %v1684 = vunpack.c.l.b16 %v1652
        %v1685 = vunpack.c.l.b16 %v1653
        %v1686 = vunpack.c.l.b16 %v1654
        %v1687 = vpack.c.b16 %v1672, %v1671
        %v1688 = vpack.c.b16 %v1674, %v1673
        %v1689 = vpack.c.b16 %v1676, %v1675
        %v1690 = vpack.c.b16 %v1678, %v1677
        %v1691 = vpack.c.b16 %v1680, %v1679
        %v1692 = vpack.c.b16 %v1682, %v1681
        %v1693 = vpack.c.b16 %v1684, %v1683
        %v1694 = vpack.c.b16 %v1686, %v1685
        %1703 = vmatpush.bf16.msra.mxu0 %v1694
        %1704 = vmatpush.bf16.msra.mxu0 %v1693
        %1705 = vmatpush.bf16.msra.mxu0 %v1692
        %1706 = vmatpush.bf16.msra.mxu0 %v1691
        %1707 = vmatpush.bf16.msra.mxu0 %v1690
        %1708 = vmatpush.bf16.msra.mxu0 %v1689
        %1709 = vmatpush.bf16.msra.mxu0 %v1688
        %1710 = vmatpush.bf16.msra.mxu0 %v1687
        %1711 = vmatmul.bf16.gmra.mxu0 %v755
        %v1712 = vpop.f32.mrf.mxu0
        %v1713 = vadd.f32 0.0, %v1712
        %v1714 = vpop.f32.mrf.mxu0
        %v1715 = vadd.f32 0.0, %v1714
        %1716 = vdwg.mxu0
        %s1717 = scalar_lea.vmem %s5, 192
        %v1718 = vld [vmem:[%s1717] sm:$0xf]
        %v1719 = vld [vmem:[%s1717 + $0x4] sm:$0xf]
        %v1720 = vld [vmem:[%s1717 + $0x8] sm:$0xf]
        %v1721 = vld [vmem:[%s1717 + $0xc] sm:$0xf]
        %v1722 = vld [vmem:[%s1717 + $0x10] sm:$0xf]
        %v1723 = vld [vmem:[%s1717 + $0x14] sm:$0xf]
        %v1724 = vld [vmem:[%s1717 + $0x18] sm:$0xf]
        %v1725 = vld [vmem:[%s1717 + $0x1c] sm:$0xf]
        %v1726 = vld [vmem:[%s1717 + $0x20] sm:$0xf]
        %v1727 = vld [vmem:[%s1717 + $0x24] sm:$0xf]
        %v1728 = vld [vmem:[%s1717 + $0x28] sm:$0xf]
        %v1729 = vld [vmem:[%s1717 + $0x2c] sm:$0xf]
        %v1730 = vld [vmem:[%s1717 + $0x30] sm:$0xf]
        %v1731 = vld [vmem:[%s1717 + $0x34] sm:$0xf]
        %v1732 = vld [vmem:[%s1717 + $0x38] sm:$0xf]
        %v1733 = vld [vmem:[%s1717 + $0x3c] sm:$0xf]
        %v1750 = vunpack.c.l.b16 %v1718
        %v1751 = vunpack.c.l.b16 %v1719
        %v1752 = vunpack.c.l.b16 %v1720
        %v1753 = vunpack.c.l.b16 %v1721
        %v1754 = vunpack.c.l.b16 %v1722
        %v1755 = vunpack.c.l.b16 %v1723
        %v1756 = vunpack.c.l.b16 %v1724
        %v1757 = vunpack.c.l.b16 %v1725
        %v1758 = vunpack.c.l.b16 %v1726
        %v1759 = vunpack.c.l.b16 %v1727
        %v1760 = vunpack.c.l.b16 %v1728
        %v1761 = vunpack.c.l.b16 %v1729
        %v1762 = vunpack.c.l.b16 %v1730
        %v1763 = vunpack.c.l.b16 %v1731
        %v1764 = vunpack.c.l.b16 %v1732
        %v1765 = vunpack.c.l.b16 %v1733
        %v1766 = vpack.c.b16 %v1751, %v1750
        %v1767 = vpack.c.b16 %v1753, %v1752
        %v1768 = vpack.c.b16 %v1755, %v1754
        %v1769 = vpack.c.b16 %v1757, %v1756
        %v1770 = vpack.c.b16 %v1759, %v1758
        %v1771 = vpack.c.b16 %v1761, %v1760
        %v1772 = vpack.c.b16 %v1763, %v1762
        %v1773 = vpack.c.b16 %v1765, %v1764
        %1782 = vmatpush.bf16.msra.mxu0 %v1773
        %1783 = vmatpush.bf16.msra.mxu0 %v1772
        %1784 = vmatpush.bf16.msra.mxu0 %v1771
        %1785 = vmatpush.bf16.msra.mxu0 %v1770
        %1786 = vmatpush.bf16.msra.mxu0 %v1769
        %1787 = vmatpush.bf16.msra.mxu0 %v1768
        %1788 = vmatpush.bf16.msra.mxu0 %v1767
        %1789 = vmatpush.bf16.msra.mxu0 %v1766
        %1790 = vmatmul.bf16.gmra.mxu0 %v755
        %v1791 = vpop.f32.mrf.mxu0
        %v1792 = vadd.f32 0.0, %v1791
        %v1793 = vpop.f32.mrf.mxu0
        %v1794 = vadd.f32 0.0, %v1793
        %1795 = vdwg.mxu0
        %v1796 = vld [vmem:[%s8] sm:$0x1]
        %v1797 = vld [vmem:[%s8 + $0x1] sm:$0x1]
        %v1798 = vld [vmem:[%s8 + $0x2] sm:$0x1]
        %v1799 = vld [vmem:[%s8 + $0x3] sm:$0x1]
        %v1804 = vperm.slane %v1796, 0
        %v1805 = vperm.slane %v1797, 0
        %v1806 = vperm.slane %v1798, 0
        %v1807 = vperm.slane %v1799, 0
        %v1812 = vadd.f32 %v1555, %v1804
        %v1813 = vadd.f32 %v1557, %v1804
        %v1814 = vadd.f32 %v1634, %v1805
        %v1815 = vadd.f32 %v1636, %v1805
        %v1816 = vadd.f32 %v1713, %v1806
        %v1817 = vadd.f32 %v1715, %v1806
        %v1818 = vadd.f32 %v1792, %v1807
        %v1819 = vadd.f32 %v1794, %v1807
        %v1820 = vpack.c.bf16 %v1812, %v1812
        %v1821 = vpack.c.bf16 %v1813, %v1813
        %v1822 = vpack.c.bf16 %v1814, %v1814
        %v1823 = vpack.c.bf16 %v1815, %v1815
        %v1824 = vpack.c.bf16 %v1816, %v1816
        %v1825 = vpack.c.bf16 %v1817, %v1817
        %v1826 = vpack.c.bf16 %v1818, %v1818
        %v1827 = vpack.c.bf16 %v1819, %v1819
        %v1828 = vld [vmem:[%s659] sm:$0x1]
        %v1829 = vsub.f32 %v1828, 1.0
        %v1830 = vmul.f32 %v1829, 1e+09
        %v1832 = vperm.slane %v1830, 0
        %v1836 = vunpack.c.l.b16 %v1473
        %v1837 = vunpack.c.l.b16 %v1474
        %v1838 = vpack.c.b16 %v1837, %v1836
        %vm1839 = vcmask 261120
        %v1841 = vsel %vm1839, %v1130, 0
        %v1844 = vsel %vm1839, %v1838, 0
        %1846 = vmatpush.bf16.xpose.msra.mxu0 0
        %1847 = vmatpush.bf16.xpose.msra.mxu0 0
        %1848 = vmatpush.bf16.xpose.msra.mxu0 0
        %1849 = vmatpush.bf16.xpose.msra.mxu0 0
        %1850 = vmatpush.bf16.xpose.msra.mxu0 0
        %1851 = vmatpush.bf16.xpose.msra.mxu0 0
        %1852 = vmatpush.bf16.xpose.msra.mxu0 0
        %1853 = vmatpush.bf16.xpose.msra.mxu0 %v1844
        %1854 = vmatmul.bf16.gmra.mxu0 %v1841
        %v1855 = vpop.f32.mrf.mxu0
        %v1856 = vadd.f32 %v1832, %v1855
        %v1857 = vpop.f32.mrf.mxu0
        %1858 = vdwg.mxu0
        %v1861 = vunpack.c.l.b16 %v1475
        %v1862 = vunpack.c.l.b16 %v1476
        %v1863 = vpack.c.b16 %v1862, %v1861
        %v1865 = vsel %vm1839, %v1131, 0
        %v1868 = vsel %vm1839, %v1863, 0
        %1870 = vmatpush.bf16.xpose.msra.mxu0 0
        %1871 = vmatpush.bf16.xpose.msra.mxu0 0
        %1872 = vmatpush.bf16.xpose.msra.mxu0 0
        %1873 = vmatpush.bf16.xpose.msra.mxu0 0
        %1874 = vmatpush.bf16.xpose.msra.mxu0 0
        %1875 = vmatpush.bf16.xpose.msra.mxu0 0
        %1876 = vmatpush.bf16.xpose.msra.mxu0 0
        %1877 = vmatpush.bf16.xpose.msra.mxu0 %v1868
        %1878 = vmatmul.bf16.gmra.mxu0 %v1865
        %v1879 = vpop.f32.mrf.mxu0
        %v1880 = vadd.f32 %v1832, %v1879
        %v1881 = vpop.f32.mrf.mxu0
        %1882 = vdwg.mxu0
        %v1885 = vunpack.c.l.b16 %v1477
        %v1886 = vunpack.c.l.b16 %v1478
        %v1887 = vpack.c.b16 %v1886, %v1885
        %v1889 = vsel %vm1839, %v1132, 0
        %v1892 = vsel %vm1839, %v1887, 0
        %1894 = vmatpush.bf16.xpose.msra.mxu0 0
        %1895 = vmatpush.bf16.xpose.msra.mxu0 0
        %1896 = vmatpush.bf16.xpose.msra.mxu0 0
        %1897 = vmatpush.bf16.xpose.msra.mxu0 0
        %1898 = vmatpush.bf16.xpose.msra.mxu0 0
        %1899 = vmatpush.bf16.xpose.msra.mxu0 0
        %1900 = vmatpush.bf16.xpose.msra.mxu0 0
        %1901 = vmatpush.bf16.xpose.msra.mxu0 %v1892
        %1902 = vmatmul.bf16.gmra.mxu0 %v1889
        %v1903 = vpop.f32.mrf.mxu0
        %v1904 = vadd.f32 %v1832, %v1903
        %v1905 = vpop.f32.mrf.mxu0
        %1906 = vdwg.mxu0
        %v1909 = vunpack.c.l.b16 %v1479
        %v1910 = vunpack.c.l.b16 %v1480
        %v1911 = vpack.c.b16 %v1910, %v1909
        %v1913 = vsel %vm1839, %v1133, 0
        %v1916 = vsel %vm1839, %v1911, 0
        %1918 = vmatpush.bf16.xpose.msra.mxu0 0
        %1919 = vmatpush.bf16.xpose.msra.mxu0 0
        %1920 = vmatpush.bf16.xpose.msra.mxu0 0
        %1921 = vmatpush.bf16.xpose.msra.mxu0 0
        %1922 = vmatpush.bf16.xpose.msra.mxu0 0
        %1923 = vmatpush.bf16.xpose.msra.mxu0 0
        %1924 = vmatpush.bf16.xpose.msra.mxu0 0
        %1925 = vmatpush.bf16.xpose.msra.mxu0 %v1916
        %1926 = vmatmul.bf16.gmra.mxu0 %v1913
        %v1927 = vpop.f32.mrf.mxu0
        %v1928 = vadd.f32 %v1832, %v1927
        %v1929 = vpop.f32.mrf.mxu0
        %1930 = vdwg.mxu0
        %vm1931 = vcmask 130048
        %v1932 = vsel %vm1931, %v1856, -inf
        %1933 = vmax.xlane.f32.xlu0 %v1932
        %v1934 = vpop.xlane.xlu0 %1933
        %v1935 = vsel %vm1931, %v1880, -inf
        %1936 = vmax.xlane.f32.xlu0 %v1935
        %v1937 = vpop.xlane.xlu0 %1936
        %v1938 = vsel %vm1931, %v1904, -inf
        %1939 = vmax.xlane.f32.xlu0 %v1938
        %v1940 = vpop.xlane.xlu0 %1939
        %v1941 = vsel %vm1931, %v1928, -inf
        %1942 = vmax.xlane.f32.xlu0 %v1941
        %v1943 = vpop.xlane.xlu0 %1942
        %v1944 = vsub.f32 %v1856, %v1934
        %v1945 = vsub.f32 %v1880, %v1937
        %v1946 = vsub.f32 %v1904, %v1940
        %v1947 = vsub.f32 %v1928, %v1943
        %v1948 = vmul.f32 %v1944, 1.442695
        %v1949 = vpow.pop %v1948
        %v1950 = vmul.f32 %v1945, 1.442695
        %v1951 = vpow.pop %v1950
        %v1952 = vmul.f32 %v1946, 1.442695
        %v1953 = vpow.pop %v1952
        %v1954 = vmul.f32 %v1947, 1.442695
        %v1955 = vpow.pop %v1954
        %v1956 = vsel %vm1931, %v1949, 0.0
        %1957 = vadd.xlane.f32.xlu0 %v1956
        %v1958 = vpop.xlane.xlu0 %1957
        %v1959 = vsel %vm1931, %v1951, 0.0
        %1960 = vadd.xlane.f32.xlu0 %v1959
        %v1961 = vpop.xlane.xlu0 %1960
        %v1962 = vsel %vm1931, %v1953, 0.0
        %1963 = vadd.xlane.f32.xlu0 %v1962
        %v1964 = vpop.xlane.xlu0 %1963
        %v1965 = vsel %vm1931, %v1955, 0.0
        %1966 = vadd.xlane.f32.xlu0 %v1965
        %v1967 = vpop.xlane.xlu0 %1966
        %v1968 = vrcp.pop %v1958
        %v1969 = vrcp.pop %v1961
        %v1970 = vrcp.pop %v1964
        %v1971 = vrcp.pop %v1967
        %v1972 = vmul.f32 %v1949, %v1968
        %v1973 = vmul.f32 %v1951, %v1969
        %v1974 = vmul.f32 %v1953, %v1970
        %v1975 = vmul.f32 %v1955, %v1971
        %v1976 = vpack.c.bf16 %v1972, %v1972
        %v1977 = vpack.c.bf16 %v1973, %v1973
        %v1978 = vpack.c.bf16 %v1974, %v1974
        %v1979 = vpack.c.bf16 %v1975, %v1975
        %v1982 = vunpack.c.l.b16 %v1820
        %v1983 = vunpack.c.l.b16 %v1821
        %v1984 = vpack.c.b16 %v1983, %v1982
        %v1987 = vsel %vm1931, %v1976, 0
        %1989 = vmatpush.bf16.msra.mxu0 0
        %1990 = vmatpush.bf16.msra.mxu0 0
        %1991 = vmatpush.bf16.msra.mxu0 0
        %1992 = vmatpush.bf16.msra.mxu0 0
        %1993 = vmatpush.bf16.msra.mxu0 0
        %1994 = vmatpush.bf16.msra.mxu0 0
        %1995 = vmatpush.bf16.msra.mxu0 0
        %1996 = vmatpush.bf16.msra.mxu0 %v1984
        %1997 = vmatmul.bf16.gmra.mxu0 %v1987
        %v1998 = vpop.f32.mrf.mxu0
        %v1999 = vadd.f32 0.0, %v1998
        %v2000 = vpop.f32.mrf.mxu0
        %2001 = vdwg.mxu0
        %v2004 = vunpack.c.l.b16 %v1822
        %v2005 = vunpack.c.l.b16 %v1823
        %v2006 = vpack.c.b16 %v2005, %v2004
        %v2009 = vsel %vm1931, %v1977, 0
        %2011 = vmatpush.bf16.msra.mxu0 0
        %2012 = vmatpush.bf16.msra.mxu0 0
        %2013 = vmatpush.bf16.msra.mxu0 0
        %2014 = vmatpush.bf16.msra.mxu0 0
        %2015 = vmatpush.bf16.msra.mxu0 0
        %2016 = vmatpush.bf16.msra.mxu0 0
        %2017 = vmatpush.bf16.msra.mxu0 0
        %2018 = vmatpush.bf16.msra.mxu0 %v2006
        %2019 = vmatmul.bf16.gmra.mxu0 %v2009
        %v2020 = vpop.f32.mrf.mxu0
        %v2021 = vadd.f32 0.0, %v2020
        %v2022 = vpop.f32.mrf.mxu0
        %2023 = vdwg.mxu0
        %v2026 = vunpack.c.l.b16 %v1824
        %v2027 = vunpack.c.l.b16 %v1825
        %v2028 = vpack.c.b16 %v2027, %v2026
        %v2031 = vsel %vm1931, %v1978, 0
        %2033 = vmatpush.bf16.msra.mxu0 0
        %2034 = vmatpush.bf16.msra.mxu0 0
        %2035 = vmatpush.bf16.msra.mxu0 0
        %2036 = vmatpush.bf16.msra.mxu0 0
        %2037 = vmatpush.bf16.msra.mxu0 0
        %2038 = vmatpush.bf16.msra.mxu0 0
        %2039 = vmatpush.bf16.msra.mxu0 0
        %2040 = vmatpush.bf16.msra.mxu0 %v2028
        %2041 = vmatmul.bf16.gmra.mxu0 %v2031
        %v2042 = vpop.f32.mrf.mxu0
        %v2043 = vadd.f32 0.0, %v2042
        %v2044 = vpop.f32.mrf.mxu0
        %2045 = vdwg.mxu0
        %v2048 = vunpack.c.l.b16 %v1826
        %v2049 = vunpack.c.l.b16 %v1827
        %v2050 = vpack.c.b16 %v2049, %v2048
        %v2053 = vsel %vm1931, %v1979, 0
        %2055 = vmatpush.bf16.msra.mxu0 0
        %2056 = vmatpush.bf16.msra.mxu0 0
        %2057 = vmatpush.bf16.msra.mxu0 0
        %2058 = vmatpush.bf16.msra.mxu0 0
        %2059 = vmatpush.bf16.msra.mxu0 0
        %2060 = vmatpush.bf16.msra.mxu0 0
        %2061 = vmatpush.bf16.msra.mxu0 0
        %2062 = vmatpush.bf16.msra.mxu0 %v2050
        %2063 = vmatmul.bf16.gmra.mxu0 %v2053
        %v2064 = vpop.f32.mrf.mxu0
        %v2065 = vadd.f32 0.0, %v2064
        %v2066 = vpop.f32.mrf.mxu0
        %2067 = vdwg.mxu0
        %v2068 = vpack.c.bf16 %v1999, %v1999
        %v2069 = vpack.c.bf16 %v2021, %v2021
        %v2070 = vpack.c.bf16 %v2043, %v2043
        %v2071 = vpack.c.bf16 %v2065, %v2065
        %v2072 = vld [vmem:[%s9] sm:$0xf]
        %v2073 = vld [vmem:[%s9 + $0x4] sm:$0xf]
        %v2074 = vld [vmem:[%s9 + $0x8] sm:$0xf]
        %v2075 = vld [vmem:[%s9 + $0xc] sm:$0xf]
        %v2076 = vld [vmem:[%s9 + $0x10] sm:$0xf]
        %v2077 = vld [vmem:[%s9 + $0x14] sm:$0xf]
        %v2078 = vld [vmem:[%s9 + $0x18] sm:$0xf]
        %v2079 = vld [vmem:[%s9 + $0x1c] sm:$0xf]
        %v2080 = vld [vmem:[%s9 + $0x20] sm:$0xf]
        %v2081 = vld [vmem:[%s9 + $0x24] sm:$0xf]
        %v2082 = vld [vmem:[%s9 + $0x28] sm:$0xf]
        %v2083 = vld [vmem:[%s9 + $0x2c] sm:$0xf]
        %v2084 = vld [vmem:[%s9 + $0x30] sm:$0xf]
        %v2085 = vld [vmem:[%s9 + $0x34] sm:$0xf]
        %v2086 = vld [vmem:[%s9 + $0x38] sm:$0xf]
        %v2087 = vld [vmem:[%s9 + $0x3c] sm:$0xf]
        %v2092 = vunpack.c.l.b16 %v2072
        %v2093 = vunpack.c.l.b16 %v2073
        %v2094 = vunpack.c.l.b16 %v2074
        %v2095 = vunpack.c.l.b16 %v2075
        %v2096 = vpack.c.b16 %v2093, %v2092
        %v2097 = vpack.c.b16 %v2095, %v2094
        %v2101 = vsel %vm1839, %v2068, 0
        %2103 = vmatpush.bf16.msra.mxu0 0
        %2104 = vmatpush.bf16.msra.mxu0 0
        %2105 = vmatpush.bf16.msra.mxu0 0
        %2106 = vmatpush.bf16.msra.mxu0 0
        %2107 = vmatpush.bf16.msra.mxu0 0
        %2108 = vmatpush.bf16.msra.mxu0 0
        %2109 = vmatpush.bf16.msra.mxu0 %v2097
        %2110 = vmatpush.bf16.msra.mxu0 %v2096
        %2111 = vmatmul.bf16.gmra.mxu0 %v2101
        %v2112 = vpop.f32.mrf.mxu0
        %v2113 = vadd.f32 0.0, %v2112
        %v2114 = vpop.f32.mrf.mxu0
        %2115 = vdwg.mxu0
        %v2120 = vunpack.c.l.b16 %v2076
        %v2121 = vunpack.c.l.b16 %v2077
        %v2122 = vunpack.c.l.b16 %v2078
        %v2123 = vunpack.c.l.b16 %v2079
        %v2124 = vpack.c.b16 %v2121, %v2120
        %v2125 = vpack.c.b16 %v2123, %v2122
        %v2129 = vsel %vm1839, %v2069, 0
        %2131 = vmatpush.bf16.msra.mxu0 0
        %2132 = vmatpush.bf16.msra.mxu0 0
        %2133 = vmatpush.bf16.msra.mxu0 0
        %2134 = vmatpush.bf16.msra.mxu0 0
        %2135 = vmatpush.bf16.msra.mxu0 0
        %2136 = vmatpush.bf16.msra.mxu0 0
        %2137 = vmatpush.bf16.msra.mxu0 %v2125
        %2138 = vmatpush.bf16.msra.mxu0 %v2124
        %2139 = vmatmul.bf16.gmra.mxu0 %v2129
        %v2140 = vpop.f32.mrf.mxu0
        %v2141 = vadd.f32 0.0, %v2140
        %v2142 = vpop.f32.mrf.mxu0
        %2143 = vdwg.mxu0
        %v2148 = vunpack.c.l.b16 %v2080
        %v2149 = vunpack.c.l.b16 %v2081
        %v2150 = vunpack.c.l.b16 %v2082
        %v2151 = vunpack.c.l.b16 %v2083
        %v2152 = vpack.c.b16 %v2149, %v2148
        %v2153 = vpack.c.b16 %v2151, %v2150
        %v2157 = vsel %vm1839, %v2070, 0
        %2159 = vmatpush.bf16.msra.mxu0 0
        %2160 = vmatpush.bf16.msra.mxu0 0
        %2161 = vmatpush.bf16.msra.mxu0 0
        %2162 = vmatpush.bf16.msra.mxu0 0
        %2163 = vmatpush.bf16.msra.mxu0 0
        %2164 = vmatpush.bf16.msra.mxu0 0
        %2165 = vmatpush.bf16.msra.mxu0 %v2153
        %2166 = vmatpush.bf16.msra.mxu0 %v2152
        %2167 = vmatmul.bf16.gmra.mxu0 %v2157
        %v2168 = vpop.f32.mrf.mxu0
        %v2169 = vadd.f32 0.0, %v2168
        %v2170 = vpop.f32.mrf.mxu0
        %2171 = vdwg.mxu0
        %v2176 = vunpack.c.l.b16 %v2084
        %v2177 = vunpack.c.l.b16 %v2085
        %v2178 = vunpack.c.l.b16 %v2086
        %v2179 = vunpack.c.l.b16 %v2087
        %v2180 = vpack.c.b16 %v2177, %v2176
        %v2181 = vpack.c.b16 %v2179, %v2178
        %v2185 = vsel %vm1839, %v2071, 0
        %2187 = vmatpush.bf16.msra.mxu0 0
        %2188 = vmatpush.bf16.msra.mxu0 0
        %2189 = vmatpush.bf16.msra.mxu0 0
        %2190 = vmatpush.bf16.msra.mxu0 0
        %2191 = vmatpush.bf16.msra.mxu0 0
        %2192 = vmatpush.bf16.msra.mxu0 0
        %2193 = vmatpush.bf16.msra.mxu0 %v2181
        %2194 = vmatpush.bf16.msra.mxu0 %v2180
        %2195 = vmatmul.bf16.gmra.mxu0 %v2185
        %v2196 = vpop.f32.mrf.mxu0
        %v2197 = vadd.f32 0.0, %v2196
        %v2198 = vpop.f32.mrf.mxu0
        %2199 = vdwg.mxu0
        %v2200 = vadd.f32 %v2113, %v2141
        %v2201 = vadd.f32 %v2200, %v2169
        %v2202 = vadd.f32 %v2201, %v2197
        %v2203 = vld [vmem:[%s10] sm:$0x1]
        %v2205 = vperm.slane %v2203, 0
        %v2207 = vadd.f32 %v2202, %v2205
        %v2208 = vadd.f32 %v663, %v2207
        %v2209 = vld [vmem:[%s17] sm:$0x1]
        %2210 = vadd.xlane.f32.xlu0 %v2208
        %v2211 = vpop.xlane.xlu0 %2210
        %v2212 = vmul.f32 %v2211, %v676
        %v2213 = vsub.f32 %v2208, %v2212
        %v2214 = vmul.f32 %v2213, %v2213
        %2215 = vadd.xlane.f32.xlu0 %v2214
        %v2216 = vpop.xlane.xlu0 %2215
        %v2217 = vmul.f32 %v2216, 0.007874016
        %v2218 = vrsqrt.pop %v2217
        %v2219 = vmul.f32 %v2218, %v2217
        %v2220 = vmul.f32 %v2219, %v2218
        %v2221 = vmul.f32 0.5, %v2220
        %v2222 = vsub.f32 1.5, %v2221
        %v2223 = vmul.f32 %v2218, %v2222
        %v2224 = vmul.f32 %v2217, %v2223
        %vm2225 = vcmp.eq.f32.partialorder %v2217, inf
        %v2226 = vsel %vm2225, %v2217, %v2224
        %vm2227 = vcmp.eq.f32.partialorder %v2217, 0.0
        %v2228 = vand.u32 %v2217, 2147483648
        %v2229 = vsel %vm2227, %v2228, %v2226
        %v2230 = vadd.f32 %v2229, 1e-06
        %v2231 = vrcp.pop %v2230
        %v2232 = vmul.f32 %v2230, %v2231
        %v2233 = vsub.f32 1.0, %v2232
        %v2234 = vmul.f32 %v2231, %v2233
        %v2235 = vadd.f32 %v2231, %v2234
        %vm2236 = vweird.f32 %v2230
        %vm2237 = vweird.f32 %v2231
        %vm2238 = vmor %vm2236, %vm2237
        %v2239 = vsel %vm2238, %v2231, %v2235
        %v2240 = vand.u32 2147483647, %v2230
        %vm2241 = vcmp.eq.f32.partialorder %v2240, 8.507059e+37
        %v2242 = vand.u32 %v2230, 2147483648
        %v2243 = vor.u32 1.1754944e-38, %v2242
        %v2244 = vsel %vm2241, %v2243, %v2239
        %v2245 = vmul.f32 %v2213, %v2244
        %v2247 = vperm.slane %v2209, 0
        %v2249 = vmul.f32 %v2247, %v2245
        %v2250 = vld [vmem:[%s18] sm:$0x1]
        %v2252 = vperm.slane %v2250, 0
        %v2254 = vadd.f32 %v2249, %v2252
        %v2255 = vpack.c.bf16 %v2254, %v2254
        %v2256 = vld [vmem:[%s11] sm:$0xff]
        %v2257 = vld [vmem:[%s11 + $0x8] sm:$0xff]
        %v2258 = vld [vmem:[%s11 + $0x10] sm:$0xff]
        %v2259 = vld [vmem:[%s11 + $0x18] sm:$0xff]
        %v2260 = vld [vmem:[%s11 + $0x20] sm:$0xff]
        %v2261 = vld [vmem:[%s11 + $0x28] sm:$0xff]
        %v2262 = vld [vmem:[%s11 + $0x30] sm:$0xff]
        %v2263 = vld [vmem:[%s11 + $0x38] sm:$0xff]
        %v2264 = vld [vmem:[%s11 + $0x40] sm:$0xff]
        %v2265 = vld [vmem:[%s11 + $0x48] sm:$0xff]
        %v2266 = vld [vmem:[%s11 + $0x50] sm:$0xff]
        %v2267 = vld [vmem:[%s11 + $0x58] sm:$0xff]
        %v2268 = vld [vmem:[%s11 + $0x60] sm:$0xff]
        %v2269 = vld [vmem:[%s11 + $0x68] sm:$0xff]
        %v2270 = vld [vmem:[%s11 + $0x70] sm:$0xff]
        %v2271 = vld [vmem:[%s11 + $0x78] sm:$0xff]
        %v2272 = vld [vmem:[%s12] sm:$0x3]
        %v2274 = vperm.slane %v2272, 0
        %v2275 = vperm.slane %v2272, 1
        %v2294 = vunpack.c.l.b16 %v2256
        %v2295 = vunpack.c.h.b16 %v2256
        %v2296 = vunpack.c.l.b16 %v2257
        %v2297 = vunpack.c.h.b16 %v2257
        %v2298 = vunpack.c.l.b16 %v2258
        %v2299 = vunpack.c.h.b16 %v2258
        %v2300 = vunpack.c.l.b16 %v2259
        %v2301 = vunpack.c.h.b16 %v2259
        %v2302 = vunpack.c.l.b16 %v2260
        %v2303 = vunpack.c.h.b16 %v2260
        %v2304 = vunpack.c.l.b16 %v2261
        %v2305 = vunpack.c.h.b16 %v2261
        %v2306 = vunpack.c.l.b16 %v2262
        %v2307 = vunpack.c.h.b16 %v2262
        %v2308 = vunpack.c.l.b16 %v2263
        %v2309 = vunpack.c.h.b16 %v2263
        %v2310 = vunpack.c.l.b16 %v2264
        %v2311 = vunpack.c.h.b16 %v2264
        %v2312 = vunpack.c.l.b16 %v2265
        %v2313 = vunpack.c.h.b16 %v2265
        %v2314 = vunpack.c.l.b16 %v2266
        %v2315 = vunpack.c.h.b16 %v2266
        %v2316 = vunpack.c.l.b16 %v2267
        %v2317 = vunpack.c.h.b16 %v2267
        %v2318 = vunpack.c.l.b16 %v2268
        %v2319 = vunpack.c.h.b16 %v2268
        %v2320 = vunpack.c.l.b16 %v2269
        %v2321 = vunpack.c.h.b16 %v2269
        %v2322 = vunpack.c.l.b16 %v2270
        %v2323 = vunpack.c.h.b16 %v2270
        %v2324 = vunpack.c.l.b16 %v2271
        %v2325 = vunpack.c.h.b16 %v2271
        %v2326 = vpack.c.b16 %v2296, %v2294
        %v2327 = vpack.c.b16 %v2297, %v2295
        %v2328 = vpack.c.b16 %v2300, %v2298
        %v2329 = vpack.c.b16 %v2301, %v2299
        %v2330 = vpack.c.b16 %v2304, %v2302
        %v2331 = vpack.c.b16 %v2305, %v2303
        %v2332 = vpack.c.b16 %v2308, %v2306
        %v2333 = vpack.c.b16 %v2309, %v2307
        %v2334 = vpack.c.b16 %v2312, %v2310
        %v2335 = vpack.c.b16 %v2313, %v2311
        %v2336 = vpack.c.b16 %v2316, %v2314
        %v2337 = vpack.c.b16 %v2317, %v2315
        %v2338 = vpack.c.b16 %v2320, %v2318
        %v2339 = vpack.c.b16 %v2321, %v2319
        %v2340 = vpack.c.b16 %v2324, %v2322
        %v2341 = vpack.c.b16 %v2325, %v2323
        %2358 = vmatpush.bf16.msra.mxu0 %v2340
        %2359 = vmatpush.bf16.msra.mxu0 %v2338
        %2360 = vmatpush.bf16.msra.mxu0 %v2336
        %2361 = vmatpush.bf16.msra.mxu0 %v2334
        %2362 = vmatpush.bf16.msra.mxu0 %v2332
        %2363 = vmatpush.bf16.msra.mxu0 %v2330
        %2364 = vmatpush.bf16.msra.mxu0 %v2328
        %2365 = vmatpush.bf16.msra.mxu0 %v2326
        %2366 = vmatmul.bf16.gmra.mxu0 %v2255
        %v2367 = vpop.f32.mrf.mxu0
        %v2368 = vadd.f32 %v2274, %v2367
        %v2369 = vpop.f32.mrf.mxu0
        %2370 = vdwg.mxu0
        %2371 = vmatpush.bf16.msra.mxu0 %v2341
        %2372 = vmatpush.bf16.msra.mxu0 %v2339
        %2373 = vmatpush.bf16.msra.mxu0 %v2337
        %2374 = vmatpush.bf16.msra.mxu0 %v2335
        %2375 = vmatpush.bf16.msra.mxu0 %v2333
        %2376 = vmatpush.bf16.msra.mxu0 %v2331
        %2377 = vmatpush.bf16.msra.mxu0 %v2329
        %2378 = vmatpush.bf16.msra.mxu0 %v2327
        %2379 = vmatmul.bf16.gmra.mxu0 %v2255
        %v2380 = vpop.f32.mrf.mxu0
        %v2381 = vadd.f32 %v2275, %v2380
        %v2382 = vpop.f32.mrf.mxu0
        %2383 = vdwg.mxu0
        %v2384 = vmax.f32 %v2368, 0.0
        %v2385 = vmax.f32 %v2381, 0.0
        %v2386 = vpack.c.bf16 %v2384, %v2384
        %v2387 = vpack.c.bf16 %v2385, %v2385
        %v2388 = vld [vmem:[%s13] sm:$0xf]
        %v2389 = vld [vmem:[%s13 + $0x4] sm:$0xf]
        %v2390 = vld [vmem:[%s13 + $0x8] sm:$0xf]
        %v2391 = vld [vmem:[%s13 + $0xc] sm:$0xf]
        %v2392 = vld [vmem:[%s13 + $0x10] sm:$0xf]
        %v2393 = vld [vmem:[%s13 + $0x14] sm:$0xf]
        %v2394 = vld [vmem:[%s13 + $0x18] sm:$0xf]
        %v2395 = vld [vmem:[%s13 + $0x1c] sm:$0xf]
        %v2396 = vld [vmem:[%s13 + $0x20] sm:$0xf]
        %v2397 = vld [vmem:[%s13 + $0x24] sm:$0xf]
        %v2398 = vld [vmem:[%s13 + $0x28] sm:$0xf]
        %v2399 = vld [vmem:[%s13 + $0x2c] sm:$0xf]
        %v2400 = vld [vmem:[%s13 + $0x30] sm:$0xf]
        %v2401 = vld [vmem:[%s13 + $0x34] sm:$0xf]
        %v2402 = vld [vmem:[%s13 + $0x38] sm:$0xf]
        %v2403 = vld [vmem:[%s13 + $0x3c] sm:$0xf]
        %v2404 = vld [vmem:[%s13 + $0x40] sm:$0xf]
        %v2405 = vld [vmem:[%s13 + $0x44] sm:$0xf]
        %v2406 = vld [vmem:[%s13 + $0x48] sm:$0xf]
        %v2407 = vld [vmem:[%s13 + $0x4c] sm:$0xf]
        %v2408 = vld [vmem:[%s13 + $0x50] sm:$0xf]
        %v2409 = vld [vmem:[%s13 + $0x54] sm:$0xf]
        %v2410 = vld [vmem:[%s13 + $0x58] sm:$0xf]
        %v2411 = vld [vmem:[%s13 + $0x5c] sm:$0xf]
        %v2412 = vld [vmem:[%s13 + $0x60] sm:$0xf]
        %v2413 = vld [vmem:[%s13 + $0x64] sm:$0xf]
        %v2414 = vld [vmem:[%s13 + $0x68] sm:$0xf]
        %v2415 = vld [vmem:[%s13 + $0x6c] sm:$0xf]
        %v2416 = vld [vmem:[%s13 + $0x70] sm:$0xf]
        %v2417 = vld [vmem:[%s13 + $0x74] sm:$0xf]
        %v2418 = vld [vmem:[%s13 + $0x78] sm:$0xf]
        %v2419 = vld [vmem:[%s13 + $0x7c] sm:$0xf]
        %v2420 = vld [vmem:[%s14] sm:$0x1]
        %v2422 = vperm.slane %v2420, 0
        %v2456 = vunpack.c.l.b16 %v2388
        %v2457 = vunpack.c.l.b16 %v2389
        %v2458 = vunpack.c.l.b16 %v2390
        %v2459 = vunpack.c.l.b16 %v2391
        %v2460 = vunpack.c.l.b16 %v2392
        %v2461 = vunpack.c.l.b16 %v2393
        %v2462 = vunpack.c.l.b16 %v2394
        %v2463 = vunpack.c.l.b16 %v2395
        %v2464 = vunpack.c.l.b16 %v2396
        %v2465 = vunpack.c.l.b16 %v2397
        %v2466 = vunpack.c.l.b16 %v2398
        %v2467 = vunpack.c.l.b16 %v2399
        %v2468 = vunpack.c.l.b16 %v2400
        %v2469 = vunpack.c.l.b16 %v2401
        %v2470 = vunpack.c.l.b16 %v2402
        %v2471 = vunpack.c.l.b16 %v2403
        %v2472 = vunpack.c.l.b16 %v2404
        %v2473 = vunpack.c.l.b16 %v2405
        %v2474 = vunpack.c.l.b16 %v2406
        %v2475 = vunpack.c.l.b16 %v2407
        %v2476 = vunpack.c.l.b16 %v2408
        %v2477 = vunpack.c.l.b16 %v2409
        %v2478 = vunpack.c.l.b16 %v2410
        %v2479 = vunpack.c.l.b16 %v2411
        %v2480 = vunpack.c.l.b16 %v2412
        %v2481 = vunpack.c.l.b16 %v2413
        %v2482 = vunpack.c.l.b16 %v2414
        %v2483 = vunpack.c.l.b16 %v2415
        %v2484 = vunpack.c.l.b16 %v2416
        %v2485 = vunpack.c.l.b16 %v2417
        %v2486 = vunpack.c.l.b16 %v2418
        %v2487 = vunpack.c.l.b16 %v2419
        %v2488 = vpack.c.b16 %v2457, %v2456
        %v2489 = vpack.c.b16 %v2459, %v2458
        %v2490 = vpack.c.b16 %v2461, %v2460
        %v2491 = vpack.c.b16 %v2463, %v2462
        %v2492 = vpack.c.b16 %v2465, %v2464
        %v2493 = vpack.c.b16 %v2467, %v2466
        %v2494 = vpack.c.b16 %v2469, %v2468
        %v2495 = vpack.c.b16 %v2471, %v2470
        %v2496 = vpack.c.b16 %v2473, %v2472
        %v2497 = vpack.c.b16 %v2475, %v2474
        %v2498 = vpack.c.b16 %v2477, %v2476
        %v2499 = vpack.c.b16 %v2479, %v2478
        %v2500 = vpack.c.b16 %v2481, %v2480
        %v2501 = vpack.c.b16 %v2483, %v2482
        %v2502 = vpack.c.b16 %v2485, %v2484
        %v2503 = vpack.c.b16 %v2487, %v2486
        %2520 = vmatpush.bf16.msra.mxu0 %v2495
        %2521 = vmatpush.bf16.msra.mxu0 %v2494
        %2522 = vmatpush.bf16.msra.mxu0 %v2493
        %2523 = vmatpush.bf16.msra.mxu0 %v2492
        %2524 = vmatpush.bf16.msra.mxu0 %v2491
        %2525 = vmatpush.bf16.msra.mxu0 %v2490
        %2526 = vmatpush.bf16.msra.mxu0 %v2489
        %2527 = vmatpush.bf16.msra.mxu0 %v2488
        %2528 = vmatmul.bf16.gmra.mxu0 %v2386
        %v2529 = vpop.f32.mrf.mxu0
        %v2530 = vadd.f32 %v2422, %v2529
        %v2531 = vpop.f32.mrf.mxu0
        %2532 = vdwg.mxu0
        %2533 = vmatpush.bf16.msra.mxu0 %v2503
        %2534 = vmatpush.bf16.msra.mxu0 %v2502
        %2535 = vmatpush.bf16.msra.mxu0 %v2501
        %2536 = vmatpush.bf16.msra.mxu0 %v2500
        %2537 = vmatpush.bf16.msra.mxu0 %v2499
        %2538 = vmatpush.bf16.msra.mxu0 %v2498
        %2539 = vmatpush.bf16.msra.mxu0 %v2497
        %2540 = vmatpush.bf16.msra.mxu0 %v2496
        %2541 = vmatmul.bf16.gmra.mxu0 %v2387
        %v2542 = vpop.f32.mrf.mxu0
        %v2543 = vadd.f32 %v2530, %v2542
        %v2544 = vpop.f32.mrf.mxu0
        %2545 = vdwg.mxu0
        %v2546 = vadd.f32 %v2208, %v2543
        %2547 = vst [vmem:[%s643] sm:$0xff] %v2546
        %s2548 = sand.u32 %s471, 1
        %s2549 = scalar_lea.sflag [#allocation3], %s2548
        %s2550 = sand.u32 %s471, 1
        %s2551 = smul.addr %s2550, 8
        %s2552 = scalar_lea.vmem [#allocation2], %s2551
        // Predicated region
        $region97: #{tpu_custom_call.1} parent=95 // pred_check
          %p2553 = pneg %p481
        $region98: #{tpu_custom_call.1} parent=95 // pred_check_branch
          %2555 = sbr.rel (%p2553) target = $region100
        $region99: #{tpu_custom_call.1} parent=95 // pred_region
          %2557 = vsyncadd %s2549, 0
          %s2558 = smul.addr %s37, 2
          %s2559 = sadd.s32 %s38, %s2558
          %s2560 = smul.addr %s2559, 8
          %s2561 = scalar_lea.hbm %s19, %s2560
          %s2563 = sshll.u32 %s2552, 4
          %s2564 = int_to_ptr.vmem [resolvable:$true] %s2563
          %s2565 = sshll.u32 %s2561, 4
          %s2566 = int_to_ptr.hbm [resolvable:$true] %s2565
          %2568 = dma.vmem_to_hbm [thread:$0]  %s2564, 128, %s2566, %s2549
        $region100: #{tpu_custom_call.1} parent=95 // pred_fallthru
          _
      $region96: #{tpu_custom_call.1} parent=5 // pred_fallthru
        _
      %p2569 = scmp.le.s32.totalorder 2, %s28
      // Predicated region
      $region101: #{tpu_custom_call.1} parent=5 // pred_check
        %p2570 = pneg %p2569
      $region102: #{tpu_custom_call.1} parent=5 // pred_check_branch
        %2572 = sbr.rel (%p2570) target = $region104
      $region103: #{tpu_custom_call.1} parent=5 // pred_region
        %s2573 = ssub.s32 %s28, 2
        // Predicated region
        $region105: #{tpu_custom_call.1} parent=103 // pred_check
          %p2574 = pneg %p487
        $region106: #{tpu_custom_call.1} parent=103 // pred_check_branch
          %2576 = sbr.rel (%p2574) target = $region108
        $region107: #{tpu_custom_call.1} parent=103 // pred_region
          %s2577 = sand.u32 %s472, 1
          %s2578 = scalar_lea.sflag [#allocation3], %s2577
          %s2579 = sand.u32 %s472, 1
          %s2580 = smul.addr %s2579, 8
          %s2581 = scalar_lea.vmem [#allocation2], %s2580
          %2583 = dma.done %s2578, 128
        $region108: #{tpu_custom_call.1} parent=103 // pred_fallthru
          _
      $region104: #{tpu_custom_call.1} parent=5 // pred_fallthru
        _
    $region6: #{tpu_custom_call.1} parent=1 // loop_footer
      %s32 = sadd.s32 1, %s28
    $region7: #{tpu_custom_call.1} parent=1 // loop_footer_branch
      %27 = sbr.rel target = $region3
    $region8: #{tpu_custom_call.1} parent=1 // loop_exit
      _
    %2584 = vsyncpa [#allocation3], 1
    %s2585 = scalar_lea.sflag [#allocation3], 1
    %2586 = vsyncpa %s2585, 1

// kernel: tpu_custom_call.1
$region0: #{tpu_custom_call.1}
  #allocation0 [shape = 'u32[]', space=smem, size = 0x4, offset = 0x4, fixed_abs, tag = 'smem constant byte address 0x4 - core index']
  #allocation1 [shape = 'u32[72,128]{1,0:T(1,128)}', space=vmem, size = 0x9000, scoped, tag = 'internal scratch']
  %s0 = inlined_call_operand.vmem [shape: f32[2,16,128], index: 0, kind: input, shape index: {}]
  %s1 = inlined_call_operand.vmem [shape: f32[2,16,128], index: 1, kind: input, shape index: {}]
  %s2 = inlined_call_operand.vmem [shape: f32[2,1,16], index: 2, kind: input, shape index: {}]
  %s3 = inlined_call_operand.vmem [shape: bf16[4,128,32], index: 3, kind: input, shape index: {}]
  %s4 = inlined_call_operand.vmem [shape: bf16[4,128,32], index: 4, kind: input, shape index: {}]
  %s5 = inlined_call_operand.vmem [shape: bf16[4,128,32], index: 5, kind: input, shape index: {}]
  %s6 = inlined_call_operand.vmem [shape: f32[4,1,32], index: 6, kind: input, shape index: {}]
  %s7 = inlined_call_operand.vmem [shape: f32[4,1,32], index: 7, kind: input, shape index: {}]
  %s8 = inlined_call_operand.vmem [shape: f32[4,1,32], index: 8, kind: input, shape index: {}]
  %s9 = inlined_call_operand.vmem [shape: bf16[4,32,128], index: 9, kind: input, shape index: {}]
  %s10 = inlined_call_operand.vmem [shape: f32[1,128], index: 10, kind: input, shape index: {}]
  %s11 = inlined_call_operand.vmem [shape: bf16[128,256], index: 11, kind: input, shape index: {}]
  %s12 = inlined_call_operand.vmem [shape: f32[1,256], index: 12, kind: input, shape index: {}]
  %s13 = inlined_call_operand.vmem [shape: bf16[256,128], index: 13, kind: input, shape index: {}]
  %s14 = inlined_call_operand.vmem [shape: f32[1,128], index: 14, kind: input, shape index: {}]
  %s15 = inlined_call_operand.vmem [shape: f32[1,128], index: 15, kind: input, shape index: {}]
  %s16 = inlined_call_operand.vmem [shape: f32[1,128], index: 16, kind: input, shape index: {}]
  %s17 = inlined_call_operand.vmem [shape: f32[1,128], index: 17, kind: input, shape index: {}]
  %s18 = inlined_call_operand.vmem [shape: f32[1,128], index: 18, kind: input, shape index: {}]
  %s19 = inlined_call_operand.hbm [shape: f32[2,16,128], index: 19, kind: output, shape index: {}]
  %s20 = sld [smem:[#allocation0]]
  $region109: #{tpu_custom_call.1} parent=0
    _
  %s22 = ssub.s32 1, %s20
  %s23 = scalar_select 0, %s22, %s20
  $region1: #{tpu_custom_call.1} parent=0
    #allocation2 [shape = 'u8[8192]{0}', space=vmem, size = 0x2000, scoped, tag = 'output window, operand 0']
    #allocation3 [shape = 's32[2]{0}', space=sflag, size = 0x8, scoped, tag = 'scoped memory for tpu_custom_call.1']
    %24 = vsyncpa [#allocation3], 0
    %s25 = scalar_lea.sflag [#allocation3], 1
    %26 = vsyncpa %s25, 0
    loop: start=0, step=1, limit=6
    $region2: #{tpu_custom_call.1} parent=1 // loop_pre_header
      _
    $region3: #{tpu_custom_call.1} parent=1 // loop_header
      %s28 = sphi 0, %s32
      %p29 = scmp.ge.s32.totalorder %s28, 6
      %s35 = sphi 0, %s47
      %s36 = sphi 0, %s43
      %s37 = sphi 0, %s35
      %s38 = sphi 0, %s36
      %s39 = sphi 0, %s37
      %s40 = sphi 0, %s38
      %s50 = sphi 0, %s52
      %s53 = sphi 0, %s50
      %s54 = sphi 0, %s53
      %s70 = sphi 0, %s54
      %s78 = sphi 0, %s80
      %s81 = sphi 0, %s78
      %s82 = sphi 0, %s81
      %s98 = sphi 0, %s82
      %s104 = sphi 0, %s106
      %s107 = sphi 0, %s104
      %s108 = sphi 0, %s107
      %s124 = sphi 0, %s108
      %s128 = sphi 0, %s128
      %s130 = sphi 0, %s128
      %s131 = sphi 0, %s130
      %s145 = sphi 0, %s131
      %s149 = sphi 0, %s149
      %s151 = sphi 0, %s149
      %s152 = sphi 0, %s151
      %s166 = sphi 0, %s152
      %s170 = sphi 0, %s170
      %s172 = sphi 0, %s170
      %s173 = sphi 0, %s172
      %s187 = sphi 0, %s173
      %s191 = sphi 0, %s191
      %s193 = sphi 0, %s191
      %s194 = sphi 0, %s193
      %s208 = sphi 0, %s194
      %s212 = sphi 0, %s212
      %s214 = sphi 0, %s212
      %s215 = sphi 0, %s214
      %s229 = sphi 0, %s215
      %s233 = sphi 0, %s233
      %s235 = sphi 0, %s233
      %s236 = sphi 0, %s235
      %s250 = sphi 0, %s236
      %s254 = sphi 0, %s254
      %s256 = sphi 0, %s254
      %s257 = sphi 0, %s256
      %s271 = sphi 0, %s257
      %s275 = sphi 0, %s275
      %s277 = sphi 0, %s275
      %s278 = sphi 0, %s277
      %s292 = sphi 0, %s278
      %s296 = sphi 0, %s296
      %s298 = sphi 0, %s296
      %s299 = sphi 0, %s298
      %s313 = sphi 0, %s299
      %s317 = sphi 0, %s317
      %s319 = sphi 0, %s317
      %s320 = sphi 0, %s319
      %s334 = sphi 0, %s320
      %s338 = sphi 0, %s338
      %s340 = sphi 0, %s338
      %s341 = sphi 0, %s340
      %s355 = sphi 0, %s341
      %s359 = sphi 0, %s359
      %s361 = sphi 0, %s359
      %s362 = sphi 0, %s361
      %s376 = sphi 0, %s362
      %s380 = sphi 0, %s380
      %s382 = sphi 0, %s380
      %s383 = sphi 0, %s382
      %s397 = sphi 0, %s383
      %s401 = sphi 0, %s401
      %s403 = sphi 0, %s401
      %s404 = sphi 0, %s403
      %s418 = sphi 0, %s404
      %s422 = sphi 0, %s422
      %s424 = sphi 0, %s422
      %s425 = sphi 0, %s424
      %s439 = sphi 0, %s425
      %s443 = sphi 0, %s443
      %s445 = sphi 0, %s443
      %s446 = sphi 0, %s445
      %s460 = sphi 0, %s446
      %s468 = sphi 0, %s470
      %s471 = sphi 0, %s468
      %s472 = sphi 0, %s471
      %s488 = sphi 0, %s472
    $region4: #{tpu_custom_call.1} parent=1 // loop_header_branch
      %31 = sbr.rel (%p29) target = $region8
    $region5: #{tpu_custom_call.1} parent=1 // loop_body
      %s33 = ssub.s32 %s28, 1
      %s34 = ssub.s32 %s28, 2
      %s41 = sadd.s32 1, %s36
      %p42 = scmp.ge.s32.totalorder %s41, 2
      %s43 = scalar_select %p42, 0, %s41
      %s44 = sadd.s32 1, %s35
      %s45 = scalar_select %p42, %s44, %s35
      %p46 = scmp.ge.s32.totalorder %s45, 2
      %s47 = scalar_select %p46, 0, %s45
      %s48 = ssub.s32 %s35, %s47
      %p49 = scmp.eq.s32.totalorder %s48, 0
      %s51 = sadd.s32 %s50, 1
      %s52 = scalar_select %p49, %s50, %s51
      %p55 = pneg %p49
      %p56 = scmp.eq.s32.totalorder %s28, 3
      %p57 = por %p55, %p56
      %p58 = scmp.ne.s32.totalorder %s50, %s53
      %p59 = scmp.eq.s32.totalorder %s28, 0
      %p60 = por %p58, %p59
      %p61 = scmp.ne.s32.totalorder %s50, %s53
      %p62 = scmp.eq.s32.totalorder %s33, 3
      %p63 = por %p61, %p62
      %p64 = scmp.ne.s32.totalorder %s53, %s54
      %p65 = scmp.eq.s32.totalorder %s33, 0
      %p66 = por %p64, %p65
      %p67 = scmp.ne.s32.totalorder %s53, %s54
      %p68 = scmp.eq.s32.totalorder %s34, 3
      %p69 = por %p67, %p68
      %p71 = scmp.ne.s32.totalorder %s54, %s70
      %p72 = scmp.eq.s32.totalorder %s34, 0
      %p73 = por %p71, %p72
      %s74 = ssub.s32 %s35, %s47
      %s75 = ssub.s32 %s36, %s43
      %s76 = sor.u32 %s74, %s75
      %p77 = scmp.eq.s32.totalorder %s76, 0
      %s79 = sadd.s32 %s78, 1
      %s80 = scalar_select %p77, %s78, %s79
      %p83 = pneg %p77
      %p84 = scmp.eq.s32.totalorder %s28, 3
      %p85 = por %p83, %p84
      %p86 = scmp.ne.s32.totalorder %s78, %s81
      %p87 = scmp.eq.s32.totalorder %s28, 0
      %p88 = por %p86, %p87
      %p89 = scmp.ne.s32.totalorder %s78, %s81
      %p90 = scmp.eq.s32.totalorder %s33, 3
      %p91 = por %p89, %p90
      %p92 = scmp.ne.s32.totalorder %s81, %s82
      %p93 = scmp.eq.s32.totalorder %s33, 0
      %p94 = por %p92, %p93
      %p95 = scmp.ne.s32.totalorder %s81, %s82
      %p96 = scmp.eq.s32.totalorder %s34, 3
      %p97 = por %p95, %p96
      %p99 = scmp.ne.s32.totalorder %s82, %s98
      %p100 = scmp.eq.s32.totalorder %s34, 0
      %p101 = por %p99, %p100
      %s102 = ssub.s32 %s35, %s47
      %p103 = scmp.eq.s32.totalorder %s102, 0
      %s105 = sadd.s32 %s104, 1
      %s106 = scalar_select %p103, %s104, %s105
      %p109 = pneg %p103
      %p110 = scmp.eq.s32.totalorder %s28, 3
      %p111 = por %p109, %p110
      %p112 = scmp.ne.s32.totalorder %s104, %s107
      %p113 = scmp.eq.s32.totalorder %s28, 0
      %p114 = por %p112, %p113
      %p115 = scmp.ne.s32.totalorder %s104, %s107
      %p116 = scmp.eq.s32.totalorder %s33, 3
      %p117 = por %p115, %p116
      %p118 = scmp.ne.s32.totalorder %s107, %s108
      %p119 = scmp.eq.s32.totalorder %s33, 0
      %p120 = por %p118, %p119
      %p121 = scmp.ne.s32.totalorder %s107, %s108
      %p122 = scmp.eq.s32.totalorder %s34, 3
      %p123 = por %p121, %p122
      %p125 = scmp.ne.s32.totalorder %s108, %s124
      %p126 = scmp.eq.s32.totalorder %s34, 0
      %p127 = por %p125, %p126
      %s129 = sadd.s32 %s128, 1
      %p132 = scmp.eq.s32.totalorder %s28, 3
      %p133 = scmp.ne.s32.totalorder %s128, %s130
      %p134 = scmp.eq.s32.totalorder %s28, 0
      %p135 = por %p133, %p134
      %p136 = scmp.ne.s32.totalorder %s128, %s130
      %p137 = scmp.eq.s32.totalorder %s33, 3
      %p138 = por %p136, %p137
      %p139 = scmp.ne.s32.totalorder %s130, %s131
      %p140 = scmp.eq.s32.totalorder %s33, 0
      %p141 = por %p139, %p140
      %p142 = scmp.ne.s32.totalorder %s130, %s131
      %p143 = scmp.eq.s32.totalorder %s34, 3
      %p144 = por %p142, %p143
      %p146 = scmp.ne.s32.totalorder %s131, %s145
      %p147 = scmp.eq.s32.totalorder %s34, 0
      %p148 = por %p146, %p147
      %s150 = sadd.s32 %s149, 1
      %p153 = scmp.eq.s32.totalorder %s28, 3
      %p154 = scmp.ne.s32.totalorder %s149, %s151
      %p155 = scmp.eq.s32.totalorder %s28, 0
      %p156 = por %p154, %p155
      %p157 = scmp.ne.s32.totalorder %s149, %s151
      %p158 = scmp.eq.s32.totalorder %s33, 3
      %p159 = por %p157, %p158
      %p160 = scmp.ne.s32.totalorder %s151, %s152
      %p161 = scmp.eq.s32.totalorder %s33, 0
      %p162 = por %p160, %p161
      %p163 = scmp.ne.s32.totalorder %s151, %s152
      %p164 = scmp.eq.s32.totalorder %s34, 3
      %p165 = por %p163, %p164
      %p167 = scmp.ne.s32.totalorder %s152, %s166
      %p168 = scmp.eq.s32.totalorder %s34, 0
      %p169 = por %p167, %p168
      %s171 = sadd.s32 %s170, 1
      %p174 = scmp.eq.s32.totalorder %s28, 3
      %p175 = scmp.ne.s32.totalorder %s170, %s172
      %p176 = scmp.eq.s32.totalorder %s28, 0
      %p177 = por %p175, %p176
      %p178 = scmp.ne.s32.totalorder %s170, %s172
      %p179 = scmp.eq.s32.totalorder %s33, 3
      %p180 = por %p178, %p179
      %p181 = scmp.ne.s32.totalorder %s172, %s173
      %p182 = scmp.eq.s32.totalorder %s33, 0
      %p183 = por %p181, %p182
      %p184 = scmp.ne.s32.totalorder %s172, %s173
      %p185 = scmp.eq.s32.totalorder %s34, 3
      %p186 = por %p184, %p185
      %p188 = scmp.ne.s32.totalorder %s173, %s187
      %p189 = scmp.eq.s32.totalorder %s34, 0
      %p190 = por %p188, %p189
      %s192 = sadd.s32 %s191, 1
      %p195 = scmp.eq.s32.totalorder %s28, 3
      %p196 = scmp.ne.s32.totalorder %s191, %s193
      %p197 = scmp.eq.s32.totalorder %s28, 0
      %p198 = por %p196, %p197
      %p199 = scmp.ne.s32.totalorder %s191, %s193
      %p200 = scmp.eq.s32.totalorder %s33, 3
      %p201 = por %p199, %p200
      %p202 = scmp.ne.s32.totalorder %s193, %s194
      %p203 = scmp.eq.s32.totalorder %s33, 0
      %p204 = por %p202, %p203
      %p205 = scmp.ne.s32.totalorder %s193, %s194
      %p206 = scmp.eq.s32.totalorder %s34, 3
      %p207 = por %p205, %p206
      %p209 = scmp.ne.s32.totalorder %s194, %s208
      %p210 = scmp.eq.s32.totalorder %s34, 0
      %p211 = por %p209, %p210
      %s213 = sadd.s32 %s212, 1
      %p216 = scmp.eq.s32.totalorder %s28, 3
      %p217 = scmp.ne.s32.totalorder %s212, %s214
      %p218 = scmp.eq.s32.totalorder %s28, 0
      %p219 = por %p217, %p218
      %p220 = scmp.ne.s32.totalorder %s212, %s214
      %p221 = scmp.eq.s32.totalorder %s33, 3
      %p222 = por %p220, %p221
      %p223 = scmp.ne.s32.totalorder %s214, %s215
      %p224 = scmp.eq.s32.totalorder %s33, 0
      %p225 = por %p223, %p224
      %p226 = scmp.ne.s32.totalorder %s214, %s215
      %p227 = scmp.eq.s32.totalorder %s34, 3
      %p228 = por %p226, %p227
      %p230 = scmp.ne.s32.totalorder %s215, %s229
      %p231 = scmp.eq.s32.totalorder %s34, 0
      %p232 = por %p230, %p231
      %s234 = sadd.s32 %s233, 1
      %p237 = scmp.eq.s32.totalorder %s28, 3
      %p238 = scmp.ne.s32.totalorder %s233, %s235
      %p239 = scmp.eq.s32.totalorder %s28, 0
      %p240 = por %p238, %p239
      %p241 = scmp.ne.s32.totalorder %s233, %s235
      %p242 = scmp.eq.s32.totalorder %s33, 3
      %p243 = por %p241, %p242
      %p244 = scmp.ne.s32.totalorder %s235, %s236
      %p245 = scmp.eq.s32.totalorder %s33, 0
      %p246 = por %p244, %p245
      %p247 = scmp.ne.s32.totalorder %s235, %s236
      %p248 = scmp.eq.s32.totalorder %s34, 3
      %p249 = por %p247, %p248
      %p251 = scmp.ne.s32.totalorder %s236, %s250
      %p252 = scmp.eq.s32.totalorder %s34, 0
      %p253 = por %p251, %p252
      %s255 = sadd.s32 %s254, 1
      %p258 = scmp.eq.s32.totalorder %s28, 3
      %p259 = scmp.ne.s32.totalorder %s254, %s256
      %p260 = scmp.eq.s32.totalorder %s28, 0
      %p261 = por %p259, %p260
      %p262 = scmp.ne.s32.totalorder %s254, %s256
      %p263 = scmp.eq.s32.totalorder %s33, 3
      %p264 = por %p262, %p263
      %p265 = scmp.ne.s32.totalorder %s256, %s257
      %p266 = scmp.eq.s32.totalorder %s33, 0
      %p267 = por %p265, %p266
      %p268 = scmp.ne.s32.totalorder %s256, %s257
      %p269 = scmp.eq.s32.totalorder %s34, 3
      %p270 = por %p268, %p269
      %p272 = scmp.ne.s32.totalorder %s257, %s271
      %p273 = scmp.eq.s32.totalorder %s34, 0
      %p274 = por %p272, %p273
      %s276 = sadd.s32 %s275, 1
      %p279 = scmp.eq.s32.totalorder %s28, 3
      %p280 = scmp.ne.s32.totalorder %s275, %s277
      %p281 = scmp.eq.s32.totalorder %s28, 0
      %p282 = por %p280, %p281
      %p283 = scmp.ne.s32.totalorder %s275, %s277
      %p284 = scmp.eq.s32.totalorder %s33, 3
      %p285 = por %p283, %p284
      %p286 = scmp.ne.s32.totalorder %s277, %s278
      %p287 = scmp.eq.s32.totalorder %s33, 0
      %p288 = por %p286, %p287
      %p289 = scmp.ne.s32.totalorder %s277, %s278
      %p290 = scmp.eq.s32.totalorder %s34, 3
      %p291 = por %p289, %p290
      %p293 = scmp.ne.s32.totalorder %s278, %s292
      %p294 = scmp.eq.s32.totalorder %s34, 0
      %p295 = por %p293, %p294
      %s297 = sadd.s32 %s296, 1
      %p300 = scmp.eq.s32.totalorder %s28, 3
      %p301 = scmp.ne.s32.totalorder %s296, %s298
      %p302 = scmp.eq.s32.totalorder %s28, 0
      %p303 = por %p301, %p302
      %p304 = scmp.ne.s32.totalorder %s296, %s298
      %p305 = scmp.eq.s32.totalorder %s33, 3
      %p306 = por %p304, %p305
      %p307 = scmp.ne.s32.totalorder %s298, %s299
      %p308 = scmp.eq.s32.totalorder %s33, 0
      %p309 = por %p307, %p308
      %p310 = scmp.ne.s32.totalorder %s298, %s299
      %p311 = scmp.eq.s32.totalorder %s34, 3
      %p312 = por %p310, %p311
      %p314 = scmp.ne.s32.totalorder %s299, %s313
      %p315 = scmp.eq.s32.totalorder %s34, 0
      %p316 = por %p314, %p315
      %s318 = sadd.s32 %s317, 1
      %p321 = scmp.eq.s32.totalorder %s28, 3
      %p322 = scmp.ne.s32.totalorder %s317, %s319
      %p323 = scmp.eq.s32.totalorder %s28, 0
      %p324 = por %p322, %p323
      %p325 = scmp.ne.s32.totalorder %s317, %s319
      %p326 = scmp.eq.s32.totalorder %s33, 3
      %p327 = por %p325, %p326
      %p328 = scmp.ne.s32.totalorder %s319, %s320
      %p329 = scmp.eq.s32.totalorder %s33, 0
      %p330 = por %p328, %p329
      %p331 = scmp.ne.s32.totalorder %s319, %s320
      %p332 = scmp.eq.s32.totalorder %s34, 3
      %p333 = por %p331, %p332
      %p335 = scmp.ne.s32.totalorder %s320, %s334
      %p336 = scmp.eq.s32.totalorder %s34, 0
      %p337 = por %p335, %p336
      %s339 = sadd.s32 %s338, 1
      %p342 = scmp.eq.s32.totalorder %s28, 3
      %p343 = scmp.ne.s32.totalorder %s338, %s340
      %p344 = scmp.eq.s32.totalorder %s28, 0
      %p345 = por %p343, %p344
      %p346 = scmp.ne.s32.totalorder %s338, %s340
      %p347 = scmp.eq.s32.totalorder %s33, 3
      %p348 = por %p346, %p347
      %p349 = scmp.ne.s32.totalorder %s340, %s341
      %p350 = scmp.eq.s32.totalorder %s33, 0
      %p351 = por %p349, %p350
      %p352 = scmp.ne.s32.totalorder %s340, %s341
      %p353 = scmp.eq.s32.totalorder %s34, 3
      %p354 = por %p352, %p353
      %p356 = scmp.ne.s32.totalorder %s341, %s355
      %p357 = scmp.eq.s32.totalorder %s34, 0
      %p358 = por %p356, %p357
      %s360 = sadd.s32 %s359, 1
      %p363 = scmp.eq.s32.totalorder %s28, 3
      %p364 = scmp.ne.s32.totalorder %s359, %s361
      %p365 = scmp.eq.s32.totalorder %s28, 0
      %p366 = por %p364, %p365
      %p367 = scmp.ne.s32.totalorder %s359, %s361
      %p368 = scmp.eq.s32.totalorder %s33, 3
      %p369 = por %p367, %p368
      %p370 = scmp.ne.s32.totalorder %s361, %s362
      %p371 = scmp.eq.s32.totalorder %s33, 0
      %p372 = por %p370, %p371
      %p373 = scmp.ne.s32.totalorder %s361, %s362
      %p374 = scmp.eq.s32.totalorder %s34, 3
      %p375 = por %p373, %p374
      %p377 = scmp.ne.s32.totalorder %s362, %s376
      %p378 = scmp.eq.s32.totalorder %s34, 0
      %p379 = por %p377, %p378
      %s381 = sadd.s32 %s380, 1
      %p384 = scmp.eq.s32.totalorder %s28, 3
      %p385 = scmp.ne.s32.totalorder %s380, %s382
      %p386 = scmp.eq.s32.totalorder %s28, 0
      %p387 = por %p385, %p386
      %p388 = scmp.ne.s32.totalorder %s380, %s382
      %p389 = scmp.eq.s32.totalorder %s33, 3
      %p390 = por %p388, %p389
      %p391 = scmp.ne.s32.totalorder %s382, %s383
      %p392 = scmp.eq.s32.totalorder %s33, 0
      %p393 = por %p391, %p392
      %p394 = scmp.ne.s32.totalorder %s382, %s383
      %p395 = scmp.eq.s32.totalorder %s34, 3
      %p396 = por %p394, %p395
      %p398 = scmp.ne.s32.totalorder %s383, %s397
      %p399 = scmp.eq.s32.totalorder %s34, 0
      %p400 = por %p398, %p399
      %s402 = sadd.s32 %s401, 1
      %p405 = scmp.eq.s32.totalorder %s28, 3
      %p406 = scmp.ne.s32.totalorder %s401, %s403
      %p407 = scmp.eq.s32.totalorder %s28, 0
      %p408 = por %p406, %p407
      %p409 = scmp.ne.s32.totalorder %s401, %s403
      %p410 = scmp.eq.s32.totalorder %s33, 3
      %p411 = por %p409, %p410
      %p412 = scmp.ne.s32.totalorder %s403, %s404
      %p413 = scmp.eq.s32.totalorder %s33, 0
      %p414 = por %p412, %p413
      %p415 = scmp.ne.s32.totalorder %s403, %s404
      %p416 = scmp.eq.s32.totalorder %s34, 3
      %p417 = por %p415, %p416
      %p419 = scmp.ne.s32.totalorder %s404, %s418
      %p420 = scmp.eq.s32.totalorder %s34, 0
      %p421 = por %p419, %p420
      %s423 = sadd.s32 %s422, 1
      %p426 = scmp.eq.s32.totalorder %s28, 3
      %p427 = scmp.ne.s32.totalorder %s422, %s424
      %p428 = scmp.eq.s32.totalorder %s28, 0
      %p429 = por %p427, %p428
      %p430 = scmp.ne.s32.totalorder %s422, %s424
      %p431 = scmp.eq.s32.totalorder %s33, 3
      %p432 = por %p430, %p431
      %p433 = scmp.ne.s32.totalorder %s424, %s425
      %p434 = scmp.eq.s32.totalorder %s33, 0
      %p435 = por %p433, %p434
      %p436 = scmp.ne.s32.totalorder %s424, %s425
      %p437 = scmp.eq.s32.totalorder %s34, 3
      %p438 = por %p436, %p437
      %p440 = scmp.ne.s32.totalorder %s425, %s439
      %p441 = scmp.eq.s32.totalorder %s34, 0
      %p442 = por %p440, %p441
      %s444 = sadd.s32 %s443, 1
      %p447 = scmp.eq.s32.totalorder %s28, 3
      %p448 = scmp.ne.s32.totalorder %s443, %s445
      %p449 = scmp.eq.s32.totalorder %s28, 0
      %p450 = por %p448, %p449
      %p451 = scmp.ne.s32.totalorder %s443, %s445
      %p452 = scmp.eq.s32.totalorder %s33, 3
      %p453 = por %p451, %p452
      %p454 = scmp.ne.s32.totalorder %s445, %s446
      %p455 = scmp.eq.s32.totalorder %s33, 0
      %p456 = por %p454, %p455
      %p457 = scmp.ne.s32.totalorder %s445, %s446
      %p458 = scmp.eq.s32.totalorder %s34, 3
      %p459 = por %p457, %p458
      %p461 = scmp.ne.s32.totalorder %s446, %s460
      %p462 = scmp.eq.s32.totalorder %s34, 0
      %p463 = por %p461, %p462
      %s464 = ssub.s32 %s35, %s47
      %s465 = ssub.s32 %s36, %s43
      %s466 = sor.u32 %s464, %s465
      %p467 = scmp.eq.s32.totalorder %s466, 0
      %s469 = sadd.s32 %s468, 1
      %s470 = scalar_select %p467, %s468, %s469
      %p473 = pneg %p467
      %p474 = scmp.eq.s32.totalorder %s28, 3
      %p475 = por %p473, %p474
      %p476 = scmp.ne.s32.totalorder %s468, %s471
      %p477 = scmp.eq.s32.totalorder %s28, 0
      %p478 = por %p476, %p477
      %p479 = scmp.ne.s32.totalorder %s468, %s471
      %p480 = scmp.eq.s32.totalorder %s33, 3
      %p481 = por %p479, %p480
      %p482 = scmp.ne.s32.totalorder %s471, %s472
      %p483 = scmp.eq.s32.totalorder %s33, 0
      %p484 = por %p482, %p483
      %p485 = scmp.ne.s32.totalorder %s471, %s472
      %p486 = scmp.eq.s32.totalorder %s34, 3
      %p487 = por %p485, %p486
      %p489 = scmp.ne.s32.totalorder %s472, %s488
      %p490 = scmp.eq.s32.totalorder %s34, 0
      %p491 = por %p489, %p490
      %p492 = scmp.le.s32.totalorder 1, %s28
      %p493 = scmp.lt.s32.totalorder %s28, 5
      %p494 = pnand %p492, %p493
      %p495 = pneg %p494
      // Predicated region
      $region9: #{tpu_custom_call.1} parent=5 // pred_check
        _
      $region10: #{tpu_custom_call.1} parent=5 // pred_check_branch
        %497 = sbr.rel (%p494) target = $region12
      $region11: #{tpu_custom_call.1} parent=5 // pred_region
        %s498 = ssub.s32 %s28, 1
        // Predicated region
        $region13: #{tpu_custom_call.1} parent=11 // pred_check
          %p499 = pneg %p141
        $region14: #{tpu_custom_call.1} parent=11 // pred_check_branch
          %501 = sbr.rel (%p499) target = $region16
        $region15: #{tpu_custom_call.1} parent=11 // pred_region
          _
        $region16: #{tpu_custom_call.1} parent=11 // pred_fallthru
          _
        // Predicated region
        $region17: #{tpu_custom_call.1} parent=11 // pred_check
          %p502 = pneg %p162
        $region18: #{tpu_custom_call.1} parent=11 // pred_check_branch
          %504 = sbr.rel (%p502) target = $region20
        $region19: #{tpu_custom_call.1} parent=11 // pred_region
          _
        $region20: #{tpu_custom_call.1} parent=11 // pred_fallthru
          _
        // Predicated region
        $region21: #{tpu_custom_call.1} parent=11 // pred_check
          %p505 = pneg %p183
        $region22: #{tpu_custom_call.1} parent=11 // pred_check_branch
          %507 = sbr.rel (%p505) target = $region24
        $region23: #{tpu_custom_call.1} parent=11 // pred_region
          _
        $region24: #{tpu_custom_call.1} parent=11 // pred_fallthru
          _
        // Predicated region
        $region25: #{tpu_custom_call.1} parent=11 // pred_check
          %p508 = pneg %p204
        $region26: #{tpu_custom_call.1} parent=11 // pred_check_branch
          %510 = sbr.rel (%p508) target = $region28
        $region27: #{tpu_custom_call.1} parent=11 // pred_region
          _
        $region28: #{tpu_custom_call.1} parent=11 // pred_fallthru
          _
        // Predicated region
        $region29: #{tpu_custom_call.1} parent=11 // pred_check
          %p511 = pneg %p225
        $region30: #{tpu_custom_call.1} parent=11 // pred_check_branch
          %513 = sbr.rel (%p511) target = $region32
        $region31: #{tpu_custom_call.1} parent=11 // pred_region
          _
        $region32: #{tpu_custom_call.1} parent=11 // pred_fallthru
          _
        // Predicated region
        $region33: #{tpu_custom_call.1} parent=11 // pred_check
          %p514 = pneg %p246
        $region34: #{tpu_custom_call.1} parent=11 // pred_check_branch
          %516 = sbr.rel (%p514) target = $region36
        $region35: #{tpu_custom_call.1} parent=11 // pred_region
          _
        $region36: #{tpu_custom_call.1} parent=11 // pred_fallthru
          _
        // Predicated region
        $region37: #{tpu_custom_call.1} parent=11 // pred_check
          %p517 = pneg %p267
        $region38: #{tpu_custom_call.1} parent=11 // pred_check_branch
          %519 = sbr.rel (%p517) target = $region40
        $region39: #{tpu_custom_call.1} parent=11 // pred_region
          _
        $region40: #{tpu_custom_call.1} parent=11 // pred_fallthru
          _
        // Predicated region
        $region41: #{tpu_custom_call.1} parent=11 // pred_check
          %p520 = pneg %p288
        $region42: #{tpu_custom_call.1} parent=11 // pred_check_branch
          %522 = sbr.rel (%p520) target = $region44
        $region43: #{tpu_custom_call.1} parent=11 // pred_region
          _
        $region44: #{tpu_custom_call.1} parent=11 // pred_fallthru
          _
        // Predicated region
        $region45: #{tpu_custom_call.1} parent=11 // pred_check
          %p523 = pneg %p309
        $region46: #{tpu_custom_call.1} parent=11 // pred_check_branch
          %525 = sbr.rel (%p523) target = $region48
        $region47: #{tpu_custom_call.1} parent=11 // pred_region
          _
        $region48: #{tpu_custom_call.1} parent=11 // pred_fallthru
          _
        // Predicated region
        $region49: #{tpu_custom_call.1} parent=11 // pred_check
          %p526 = pneg %p330
        $region50: #{tpu_custom_call.1} parent=11 // pred_check_branch
          %528 = sbr.rel (%p526) target = $region52
        $region51: #{tpu_custom_call.1} parent=11 // pred_region
          _
        $region52: #{tpu_custom_call.1} parent=11 // pred_fallthru
          _
        // Predicated region
        $region53: #{tpu_custom_call.1} parent=11 // pred_check
          %p529 = pneg %p351
        $region54: #{tpu_custom_call.1} parent=11 // pred_check_branch
          %531 = sbr.rel (%p529) target = $region56
        $region55: #{tpu_custom_call.1} parent=11 // pred_region
          _
        $region56: #{tpu_custom_call.1} parent=11 // pred_fallthru
          _
        // Predicated region
        $region57: #{tpu_custom_call.1} parent=11 // pred_check
          %p532 = pneg %p372
        $region58: #{tpu_custom_call.1} parent=11 // pred_check_branch
          %534 = sbr.rel (%p532) target = $region60
        $region59: #{tpu_custom_call.1} parent=11 // pred_region
          _
        $region60: #{tpu_custom_call.1} parent=11 // pred_fallthru
          _
        // Predicated region
        $region61: #{tpu_custom_call.1} parent=11 // pred_check
          %p535 = pneg %p393
        $region62: #{tpu_custom_call.1} parent=11 // pred_check_branch
          %537 = sbr.rel (%p535) target = $region64
        $region63: #{tpu_custom_call.1} parent=11 // pred_region
          _
        $region64: #{tpu_custom_call.1} parent=11 // pred_fallthru
          _
        // Predicated region
        $region65: #{tpu_custom_call.1} parent=11 // pred_check
          %p538 = pneg %p414
        $region66: #{tpu_custom_call.1} parent=11 // pred_check_branch
          %540 = sbr.rel (%p538) target = $region68
        $region67: #{tpu_custom_call.1} parent=11 // pred_region
          _
        $region68: #{tpu_custom_call.1} parent=11 // pred_fallthru
          _
        // Predicated region
        $region69: #{tpu_custom_call.1} parent=11 // pred_check
          %p541 = pneg %p435
        $region70: #{tpu_custom_call.1} parent=11 // pred_check_branch
          %543 = sbr.rel (%p541) target = $region72
        $region71: #{tpu_custom_call.1} parent=11 // pred_region
          _
        $region72: #{tpu_custom_call.1} parent=11 // pred_fallthru
          _
        // Predicated region
        $region73: #{tpu_custom_call.1} parent=11 // pred_check
          %p544 = pneg %p456
        $region74: #{tpu_custom_call.1} parent=11 // pred_check_branch
          %546 = sbr.rel (%p544) target = $region76
        $region75: #{tpu_custom_call.1} parent=11 // pred_region
          _
        $region76: #{tpu_custom_call.1} parent=11 // pred_fallthru
          _
      $region12: #{tpu_custom_call.1} parent=5 // pred_fallthru
        _
      %p547 = scmp.lt.s32.totalorder %s28, 4
      // Predicated region
      $region77: #{tpu_custom_call.1} parent=5 // pred_check
        %p548 = pneg %p547
      $region78: #{tpu_custom_call.1} parent=5 // pred_check_branch
        %550 = sbr.rel (%p548) target = $region80
      $region79: #{tpu_custom_call.1} parent=5 // pred_region
        // Predicated region
        $region81: #{tpu_custom_call.1} parent=79 // pred_check
          %p551 = pneg %p60
        $region82: #{tpu_custom_call.1} parent=79 // pred_check_branch
          %553 = sbr.rel (%p551) target = $region84
        $region83: #{tpu_custom_call.1} parent=79 // pred_region
          %p554 = scmp.lt.s32.totalorder %s35, 1
          %s555 = scalar_select %p554, %s35, 1
          %s556 = smul.addr %s555, 2
          %s557 = smul.addr %s556, 8
          %s558 = scalar_lea.vmem %s0, %s557
        $region84: #{tpu_custom_call.1} parent=79 // pred_fallthru
          _
        // Predicated region
        $region85: #{tpu_custom_call.1} parent=79 // pred_check
          %p559 = pneg %p88
        $region86: #{tpu_custom_call.1} parent=79 // pred_check_branch
          %561 = sbr.rel (%p559) target = $region88
        $region87: #{tpu_custom_call.1} parent=79 // pred_region
          %p562 = scmp.lt.s32.totalorder %s35, 1
          %s563 = scalar_select %p562, %s35, 1
          %p564 = scmp.lt.s32.totalorder %s36, 1
          %s565 = scalar_select %p564, %s36, 1
          %s566 = smul.addr %s563, 2
          %s567 = sadd.s32 %s565, %s566
          %s568 = smul.addr %s567, 8
          %s569 = scalar_lea.vmem %s1, %s568
        $region88: #{tpu_custom_call.1} parent=79 // pred_fallthru
          _
        // Predicated region
        $region89: #{tpu_custom_call.1} parent=79 // pred_check
          %p570 = pneg %p114
        $region90: #{tpu_custom_call.1} parent=79 // pred_check_branch
          %572 = sbr.rel (%p570) target = $region92
        $region91: #{tpu_custom_call.1} parent=79 // pred_region
          %p573 = scmp.lt.s32.totalorder %s35, 1
          %s574 = scalar_select %p573, %s35, 1
          %s575 = scalar_lea.vmem %s2, %s574
        $region92: #{tpu_custom_call.1} parent=79 // pred_fallthru
          _
      $region80: #{tpu_custom_call.1} parent=5 // pred_fallthru
        _
      %p576 = scmp.le.s32.totalorder 1, %s28
      %p577 = scmp.lt.s32.totalorder %s28, 5
      %p578 = pnand %p576, %p577
      %p579 = pneg %p578
      // Predicated region
      $region93: #{tpu_custom_call.1} parent=5 // pred_check
        _
      $region94: #{tpu_custom_call.1} parent=5 // pred_check_branch
        %581 = sbr.rel (%p578) target = $region96
      $region95: #{tpu_custom_call.1} parent=5 // pred_region
        %s582 = ssub.s32 %s28, 1
        %p583 = scmp.lt.s32.totalorder %s37, 1
        %s584 = scalar_select %p583, %s37, 1
        %s585 = smul.addr %s584, 2
        %s586 = smul.addr %s585, 8
        %s587 = scalar_lea.vmem %s0, %s586
        %p588 = pneg %p66
        %p589 = pneg %p63
        %p590 = scmp.lt.s32.totalorder %s37, 1
        %s591 = scalar_select %p590, %s37, 1
        %p592 = scmp.lt.s32.totalorder %s38, 1
        %s593 = scalar_select %p592, %s38, 1
        %s594 = smul.addr %s591, 2
        %s595 = sadd.s32 %s593, %s594
        %s596 = smul.addr %s595, 8
        %s597 = scalar_lea.vmem %s1, %s596
        %p598 = pneg %p94
        %p599 = pneg %p91
        %p600 = scmp.lt.s32.totalorder %s37, 1
        %s601 = scalar_select %p600, %s37, 1
        %s602 = scalar_lea.vmem %s2, %s601
        %p603 = pneg %p120
        %p604 = pneg %p117
        %p605 = pneg %p141
        %p606 = pneg %p138
        %p607 = pneg %p162
        %p608 = pneg %p159
        %p609 = pneg %p183
        %p610 = pneg %p180
        %p611 = pneg %p204
        %p612 = pneg %p201
        %p613 = pneg %p225
        %p614 = pneg %p222
        %p615 = pneg %p246
        %p616 = pneg %p243
        %p617 = pneg %p267
        %p618 = pneg %p264
        %p619 = pneg %p288
        %p620 = pneg %p285
        %p621 = pneg %p309
        %p622 = pneg %p306
        %p623 = pneg %p330
        %p624 = pneg %p327
        %p625 = pneg %p351
        %p626 = pneg %p348
        %p627 = pneg %p372
        %p628 = pneg %p369
        %p629 = pneg %p393
        %p630 = pneg %p390
        %p631 = pneg %p414
        %p632 = pneg %p411
        %p633 = pneg %p435
        %p634 = pneg %p432
        %p635 = pneg %p456
        %p636 = pneg %p453
        %p637 = pneg %p484
        %p638 = pneg %p481
        %s639 = sand.u32 %s471, 1
        %s640 = scalar_lea.sflag [#allocation3], %s639
        %s641 = sand.u32 %s471, 1
        %s642 = smul.addr %s641, 8
        %s643 = scalar_lea.vmem [#allocation2], %s642
        %p644 = scmp.lt.s32.totalorder %s37, 1
        %s645 = scalar_select %p644, %s37, 1
        %s646 = smul.addr %s645, 2
        %s647 = smul.addr %s646, 8
        %s648 = scalar_lea.vmem %s0, %s647
        %p649 = scmp.lt.s32.totalorder %s37, 1
        %s650 = scalar_select %p649, %s37, 1
        %p651 = scmp.lt.s32.totalorder %s38, 1
        %s652 = scalar_select %p651, %s38, 1
        %s653 = smul.addr %s650, 2
        %s654 = sadd.s32 %s652, %s653
        %s655 = smul.addr %s654, 8
        %s656 = scalar_lea.vmem %s1, %s655
        %p657 = scmp.lt.s32.totalorder %s37, 1
        %s658 = scalar_select %p657, %s37, 1
        %s659 = scalar_lea.vmem %s2, %s658
        %v661 = vld [vmem:[%s648] sm:$0xff]
        %v662 = vld [vmem:[%s648 + $0x8] sm:$0xff]
        %v663 = vld [vmem:[%s656] sm:$0xff]
        %v664 = vld [vmem:[%s15] sm:$0x1]
        %v665 = vld [vmem:[%s16] sm:$0x1]
        %666 = vadd.xlane.f32.xlu0 %v661
        %v667 = vpop.xlane.xlu0 %666
        %668 = vadd.xlane.f32.xlu0 %v662
        %v669 = vpop.xlane.xlu0 %668
        %v670 = vrcp.pop 128.0
        %v671 = vmul.f32 128.0, %v670
        %v672 = vsub.f32 1.0, %v671
        %v673 = vmul.f32 %v670, %v672
        %v674 = vadd.f32 %v670, %v673
        %vm675 = vweird.f32 %v670
        %v676 = vsel %vm675, %v670, %v674
        %v677 = vmul.f32 %v667, %v676
        %v678 = vmul.f32 %v669, %v676
        %v679 = vsub.f32 %v661, %v677
        %v680 = vsub.f32 %v662, %v678
        %v681 = vmul.f32 %v679, %v679
        %v682 = vmul.f32 %v680, %v680
        %683 = vadd.xlane.f32.xlu0 %v681
        %v684 = vpop.xlane.xlu0 %683
        %685 = vadd.xlane.f32.xlu0 %v682
        %v686 = vpop.xlane.xlu0 %685
        %v687 = vmul.f32 %v684, 0.007874016
        %v688 = vmul.f32 %v686, 0.007874016
        %v689 = vrsqrt.pop %v687
        %v690 = vmul.f32 %v689, %v687
        %v691 = vmul.f32 %v690, %v689
        %v692 = vmul.f32 0.5, %v691
        %v693 = vsub.f32 1.5, %v692
        %v694 = vmul.f32 %v689, %v693
        %v695 = vmul.f32 %v687, %v694
        %vm696 = vcmp.eq.f32.partialorder %v687, inf
        %v697 = vsel %vm696, %v687, %v695
        %vm698 = vcmp.eq.f32.partialorder %v687, 0.0
        %v699 = vand.u32 %v687, 2147483648
        %v700 = vsel %vm698, %v699, %v697
        %v701 = vrsqrt.pop %v688
        %v702 = vmul.f32 %v701, %v688
        %v703 = vmul.f32 %v702, %v701
        %v704 = vmul.f32 0.5, %v703
        %v705 = vsub.f32 1.5, %v704
        %v706 = vmul.f32 %v701, %v705
        %v707 = vmul.f32 %v688, %v706
        %vm708 = vcmp.eq.f32.partialorder %v688, inf
        %v709 = vsel %vm708, %v688, %v707
        %vm710 = vcmp.eq.f32.partialorder %v688, 0.0
        %v711 = vand.u32 %v688, 2147483648
        %v712 = vsel %vm710, %v711, %v709
        %v713 = vadd.f32 %v700, 1e-06
        %v714 = vadd.f32 %v712, 1e-06
        %v715 = vrcp.pop %v713
        %v716 = vmul.f32 %v713, %v715
        %v717 = vsub.f32 1.0, %v716
        %v718 = vmul.f32 %v715, %v717
        %v719 = vadd.f32 %v715, %v718
        %vm720 = vweird.f32 %v713
        %vm721 = vweird.f32 %v715
        %vm722 = vmor %vm720, %vm721
        %v723 = vsel %vm722, %v715, %v719
        %v724 = vand.u32 2147483647, %v713
        %vm725 = vcmp.eq.f32.partialorder %v724, 8.507059e+37
        %v726 = vand.u32 %v713, 2147483648
        %v727 = vor.u32 1.1754944e-38, %v726
        %v728 = vsel %vm725, %v727, %v723
        %v729 = vmul.f32 %v679, %v728
        %v730 = vrcp.pop %v714
        %v731 = vmul.f32 %v714, %v730
        %v732 = vsub.f32 1.0, %v731
        %v733 = vmul.f32 %v730, %v732
        %v734 = vadd.f32 %v730, %v733
        %vm735 = vweird.f32 %v714
        %vm736 = vweird.f32 %v730
        %vm737 = vmor %vm735, %vm736
        %v738 = vsel %vm737, %v730, %v734
        %v739 = vand.u32 2147483647, %v714
        %vm740 = vcmp.eq.f32.partialorder %v739, 8.507059e+37
        %v741 = vand.u32 %v714, 2147483648
        %v742 = vor.u32 1.1754944e-38, %v741
        %v743 = vsel %vm740, %v742, %v738
        %v744 = vmul.f32 %v680, %v743
        %v746 = vperm.slane %v664, 0
        %v748 = vmul.f32 %v746, %v729
        %v749 = vmul.f32 %v746, %v744
        %v751 = vperm.slane %v665, 0
        %v753 = vadd.f32 %v748, %v751
        %v754 = vadd.f32 %v749, %v751
        %v755 = vpack.c.bf16 %v754, %v753
        %756 = vadd.xlane.f32.xlu0 %v663
        %v757 = vpop.xlane.xlu0 %756
        %v758 = vmul.f32 %v757, %v676
        %v759 = vsub.f32 %v663, %v758
        %v760 = vmul.f32 %v759, %v759
        %761 = vadd.xlane.f32.xlu0 %v760
        %v762 = vpop.xlane.xlu0 %761
        %v763 = vmul.f32 %v762, 0.007874016
        %v764 = vrsqrt.pop %v763
        %v765 = vmul.f32 %v764, %v763
        %v766 = vmul.f32 %v765, %v764
        %v767 = vmul.f32 0.5, %v766
        %v768 = vsub.f32 1.5, %v767
        %v769 = vmul.f32 %v764, %v768
        %v770 = vmul.f32 %v763, %v769
        %vm771 = vcmp.eq.f32.partialorder %v763, inf
        %v772 = vsel %vm771, %v763, %v770
        %vm773 = vcmp.eq.f32.partialorder %v763, 0.0
        %v774 = vand.u32 %v763, 2147483648
        %v775 = vsel %vm773, %v774, %v772
        %v776 = vadd.f32 %v775, 1e-06
        %v777 = vrcp.pop %v776
        %v778 = vmul.f32 %v776, %v777
        %v779 = vsub.f32 1.0, %v778
        %v780 = vmul.f32 %v777, %v779
        %v781 = vadd.f32 %v777, %v780
        %vm782 = vweird.f32 %v776
        %vm783 = vweird.f32 %v777
        %vm784 = vmor %vm782, %vm783
        %v785 = vsel %vm784, %v777, %v781
        %v786 = vand.u32 2147483647, %v776
        %vm787 = vcmp.eq.f32.partialorder %v786, 8.507059e+37
        %v788 = vand.u32 %v776, 2147483648
        %v789 = vor.u32 1.1754944e-38, %v788
        %v790 = vsel %vm787, %v789, %v785
        %v791 = vmul.f32 %v759, %v790
        %v792 = vmul.f32 %v746, %v791
        %v793 = vadd.f32 %v792, %v751
        %v794 = vpack.c.bf16 %v793, %v793
        %v795 = vld [vmem:[%s3] sm:$0xf]
        %v796 = vld [vmem:[%s3 + $0x4] sm:$0xf]
        %v797 = vld [vmem:[%s3 + $0x8] sm:$0xf]
        %v798 = vld [vmem:[%s3 + $0xc] sm:$0xf]
        %v799 = vld [vmem:[%s3 + $0x10] sm:$0xf]
        %v800 = vld [vmem:[%s3 + $0x14] sm:$0xf]
        %v801 = vld [vmem:[%s3 + $0x18] sm:$0xf]
        %v802 = vld [vmem:[%s3 + $0x1c] sm:$0xf]
        %v803 = vld [vmem:[%s3 + $0x20] sm:$0xf]
        %v804 = vld [vmem:[%s3 + $0x24] sm:$0xf]
        %v805 = vld [vmem:[%s3 + $0x28] sm:$0xf]
        %v806 = vld [vmem:[%s3 + $0x2c] sm:$0xf]
        %v807 = vld [vmem:[%s3 + $0x30] sm:$0xf]
        %v808 = vld [vmem:[%s3 + $0x34] sm:$0xf]
        %v809 = vld [vmem:[%s3 + $0x38] sm:$0xf]
        %v810 = vld [vmem:[%s3 + $0x3c] sm:$0xf]
        %v827 = vunpack.c.l.b16 %v795
        %v828 = vunpack.c.l.b16 %v796
        %v829 = vunpack.c.l.b16 %v797
        %v830 = vunpack.c.l.b16 %v798
        %v831 = vunpack.c.l.b16 %v799
        %v832 = vunpack.c.l.b16 %v800
        %v833 = vunpack.c.l.b16 %v801
        %v834 = vunpack.c.l.b16 %v802
        %v835 = vunpack.c.l.b16 %v803
        %v836 = vunpack.c.l.b16 %v804
        %v837 = vunpack.c.l.b16 %v805
        %v838 = vunpack.c.l.b16 %v806
        %v839 = vunpack.c.l.b16 %v807
        %v840 = vunpack.c.l.b16 %v808
        %v841 = vunpack.c.l.b16 %v809
        %v842 = vunpack.c.l.b16 %v810
        %v843 = vpack.c.b16 %v828, %v827
        %v844 = vpack.c.b16 %v830, %v829
        %v845 = vpack.c.b16 %v832, %v831
        %v846 = vpack.c.b16 %v834, %v833
        %v847 = vpack.c.b16 %v836, %v835
        %v848 = vpack.c.b16 %v838, %v837
        %v849 = vpack.c.b16 %v840, %v839
        %v850 = vpack.c.b16 %v842, %v841
        %859 = vmatpush.bf16.msra.mxu0 %v850
        %860 = vmatpush.bf16.msra.mxu0 %v849
        %861 = vmatpush.bf16.msra.mxu0 %v848
        %862 = vmatpush.bf16.msra.mxu0 %v847
        %863 = vmatpush.bf16.msra.mxu0 %v846
        %864 = vmatpush.bf16.msra.mxu0 %v845
        %865 = vmatpush.bf16.msra.mxu0 %v844
        %866 = vmatpush.bf16.msra.mxu0 %v843
        %867 = vmatmul.bf16.gmra.mxu0 %v794
        %v868 = vpop.f32.mrf.mxu0
        %v869 = vadd.f32 0.0, %v868
        %v870 = vpop.f32.mrf.mxu0
        %871 = vdwg.mxu0
        %s872 = scalar_lea.vmem %s3, 64
        %v873 = vld [vmem:[%s872] sm:$0xf]
        %v874 = vld [vmem:[%s872 + $0x4] sm:$0xf]
        %v875 = vld [vmem:[%s872 + $0x8] sm:$0xf]
        %v876 = vld [vmem:[%s872 + $0xc] sm:$0xf]
        %v877 = vld [vmem:[%s872 + $0x10] sm:$0xf]
        %v878 = vld [vmem:[%s872 + $0x14] sm:$0xf]
        %v879 = vld [vmem:[%s872 + $0x18] sm:$0xf]
        %v880 = vld [vmem:[%s872 + $0x1c] sm:$0xf]
        %v881 = vld [vmem:[%s872 + $0x20] sm:$0xf]
        %v882 = vld [vmem:[%s872 + $0x24] sm:$0xf]
        %v883 = vld [vmem:[%s872 + $0x28] sm:$0xf]
        %v884 = vld [vmem:[%s872 + $0x2c] sm:$0xf]
        %v885 = vld [vmem:[%s872 + $0x30] sm:$0xf]
        %v886 = vld [vmem:[%s872 + $0x34] sm:$0xf]
        %v887 = vld [vmem:[%s872 + $0x38] sm:$0xf]
        %v888 = vld [vmem:[%s872 + $0x3c] sm:$0xf]
        %v905 = vunpack.c.l.b16 %v873
        %v906 = vunpack.c.l.b16 %v874
        %v907 = vunpack.c.l.b16 %v875
        %v908 = vunpack.c.l.b16 %v876
        %v909 = vunpack.c.l.b16 %v877
        %v910 = vunpack.c.l.b16 %v878
        %v911 = vunpack.c.l.b16 %v879
        %v912 = vunpack.c.l.b16 %v880
        %v913 = vunpack.c.l.b16 %v881
        %v914 = vunpack.c.l.b16 %v882
        %v915 = vunpack.c.l.b16 %v883
        %v916 = vunpack.c.l.b16 %v884
        %v917 = vunpack.c.l.b16 %v885
        %v918 = vunpack.c.l.b16 %v886
        %v919 = vunpack.c.l.b16 %v887
        %v920 = vunpack.c.l.b16 %v888
        %v921 = vpack.c.b16 %v906, %v905
        %v922 = vpack.c.b16 %v908, %v907
        %v923 = vpack.c.b16 %v910, %v909
        %v924 = vpack.c.b16 %v912, %v911
        %v925 = vpack.c.b16 %v914, %v913
        %v926 = vpack.c.b16 %v916, %v915
        %v927 = vpack.c.b16 %v918, %v917
        %v928 = vpack.c.b16 %v920, %v919
        %937 = vmatpush.bf16.msra.mxu0 %v928
        %938 = vmatpush.bf16.msra.mxu0 %v927
        %939 = vmatpush.bf16.msra.mxu0 %v926
        %940 = vmatpush.bf16.msra.mxu0 %v925
        %941 = vmatpush.bf16.msra.mxu0 %v924
        %942 = vmatpush.bf16.msra.mxu0 %v923
        %943 = vmatpush.bf16.msra.mxu0 %v922
        %944 = vmatpush.bf16.msra.mxu0 %v921
        %945 = vmatmul.bf16.gmra.mxu0 %v794
        %v946 = vpop.f32.mrf.mxu0
        %v947 = vadd.f32 0.0, %v946
        %v948 = vpop.f32.mrf.mxu0
        %949 = vdwg.mxu0
        %s950 = scalar_lea.vmem %s3, 128
        %v951 = vld [vmem:[%s950] sm:$0xf]
        %v952 = vld [vmem:[%s950 + $0x4] sm:$0xf]
        %v953 = vld [vmem:[%s950 + $0x8] sm:$0xf]
        %v954 = vld [vmem:[%s950 + $0xc] sm:$0xf]
        %v955 = vld [vmem:[%s950 + $0x10] sm:$0xf]
        %v956 = vld [vmem:[%s950 + $0x14] sm:$0xf]
        %v957 = vld [vmem:[%s950 + $0x18] sm:$0xf]
        %v958 = vld [vmem:[%s950 + $0x1c] sm:$0xf]
        %v959 = vld [vmem:[%s950 + $0x20] sm:$0xf]
        %v960 = vld [vmem:[%s950 + $0x24] sm:$0xf]
        %v961 = vld [vmem:[%s950 + $0x28] sm:$0xf]
        %v962 = vld [vmem:[%s950 + $0x2c] sm:$0xf]
        %v963 = vld [vmem:[%s950 + $0x30] sm:$0xf]
        %v964 = vld [vmem:[%s950 + $0x34] sm:$0xf]
        %v965 = vld [vmem:[%s950 + $0x38] sm:$0xf]
        %v966 = vld [vmem:[%s950 + $0x3c] sm:$0xf]
        %v983 = vunpack.c.l.b16 %v951
        %v984 = vunpack.c.l.b16 %v952
        %v985 = vunpack.c.l.b16 %v953
        %v986 = vunpack.c.l.b16 %v954
        %v987 = vunpack.c.l.b16 %v955
        %v988 = vunpack.c.l.b16 %v956
        %v989 = vunpack.c.l.b16 %v957
        %v990 = vunpack.c.l.b16 %v958
        %v991 = vunpack.c.l.b16 %v959
        %v992 = vunpack.c.l.b16 %v960
        %v993 = vunpack.c.l.b16 %v961
        %v994 = vunpack.c.l.b16 %v962
        %v995 = vunpack.c.l.b16 %v963
        %v996 = vunpack.c.l.b16 %v964
        %v997 = vunpack.c.l.b16 %v965
        %v998 = vunpack.c.l.b16 %v966
        %v999 = vpack.c.b16 %v984, %v983
        %v1000 = vpack.c.b16 %v986, %v985
        %v1001 = vpack.c.b16 %v988, %v987
        %v1002 = vpack.c.b16 %v990, %v989
        %v1003 = vpack.c.b16 %v992, %v991
        %v1004 = vpack.c.b16 %v994, %v993
        %v1005 = vpack.c.b16 %v996, %v995
        %v1006 = vpack.c.b16 %v998, %v997
        %1015 = vmatpush.bf16.msra.mxu0 %v1006
        %1016 = vmatpush.bf16.msra.mxu0 %v1005
        %1017 = vmatpush.bf16.msra.mxu0 %v1004
        %1018 = vmatpush.bf16.msra.mxu0 %v1003
        %1019 = vmatpush.bf16.msra.mxu0 %v1002
        %1020 = vmatpush.bf16.msra.mxu0 %v1001
        %1021 = vmatpush.bf16.msra.mxu0 %v1000
        %1022 = vmatpush.bf16.msra.mxu0 %v999
        %1023 = vmatmul.bf16.gmra.mxu0 %v794
        %v1024 = vpop.f32.mrf.mxu0
        %v1025 = vadd.f32 0.0, %v1024
        %v1026 = vpop.f32.mrf.mxu0
        %1027 = vdwg.mxu0
        %s1028 = scalar_lea.vmem %s3, 192
        %v1029 = vld [vmem:[%s1028] sm:$0xf]
        %v1030 = vld [vmem:[%s1028 + $0x4] sm:$0xf]
        %v1031 = vld [vmem:[%s1028 + $0x8] sm:$0xf]
        %v1032 = vld [vmem:[%s1028 + $0xc] sm:$0xf]
        %v1033 = vld [vmem:[%s1028 + $0x10] sm:$0xf]
        %v1034 = vld [vmem:[%s1028 + $0x14] sm:$0xf]
        %v1035 = vld [vmem:[%s1028 + $0x18] sm:$0xf]
        %v1036 = vld [vmem:[%s1028 + $0x1c] sm:$0xf]
        %v1037 = vld [vmem:[%s1028 + $0x20] sm:$0xf]
        %v1038 = vld [vmem:[%s1028 + $0x24] sm:$0xf]
        %v1039 = vld [vmem:[%s1028 + $0x28] sm:$0xf]
        %v1040 = vld [vmem:[%s1028 + $0x2c] sm:$0xf]
        %v1041 = vld [vmem:[%s1028 + $0x30] sm:$0xf]
        %v1042 = vld [vmem:[%s1028 + $0x34] sm:$0xf]
        %v1043 = vld [vmem:[%s1028 + $0x38] sm:$0xf]
        %v1044 = vld [vmem:[%s1028 + $0x3c] sm:$0xf]
        %v1061 = vunpack.c.l.b16 %v1029
        %v1062 = vunpack.c.l.b16 %v1030
        %v1063 = vunpack.c.l.b16 %v1031
        %v1064 = vunpack.c.l.b16 %v1032
        %v1065 = vunpack.c.l.b16 %v1033
        %v1066 = vunpack.c.l.b16 %v1034
        %v1067 = vunpack.c.l.b16 %v1035
        %v1068 = vunpack.c.l.b16 %v1036
        %v1069 = vunpack.c.l.b16 %v1037
        %v1070 = vunpack.c.l.b16 %v1038
        %v1071 = vunpack.c.l.b16 %v1039
        %v1072 = vunpack.c.l.b16 %v1040
        %v1073 = vunpack.c.l.b16 %v1041
        %v1074 = vunpack.c.l.b16 %v1042
        %v1075 = vunpack.c.l.b16 %v1043
        %v1076 = vunpack.c.l.b16 %v1044
        %v1077 = vpack.c.b16 %v1062, %v1061
        %v1078 = vpack.c.b16 %v1064, %v1063
        %v1079 = vpack.c.b16 %v1066, %v1065
        %v1080 = vpack.c.b16 %v1068, %v1067
        %v1081 = vpack.c.b16 %v1070, %v1069
        %v1082 = vpack.c.b16 %v1072, %v1071
        %v1083 = vpack.c.b16 %v1074, %v1073
        %v1084 = vpack.c.b16 %v1076, %v1075
        %1093 = vmatpush.bf16.msra.mxu0 %v1084
        %1094 = vmatpush.bf16.msra.mxu0 %v1083
        %1095 = vmatpush.bf16.msra.mxu0 %v1082
        %1096 = vmatpush.bf16.msra.mxu0 %v1081
        %1097 = vmatpush.bf16.msra.mxu0 %v1080
        %1098 = vmatpush.bf16.msra.mxu0 %v1079
        %1099 = vmatpush.bf16.msra.mxu0 %v1078
        %1100 = vmatpush.bf16.msra.mxu0 %v1077
        %1101 = vmatmul.bf16.gmra.mxu0 %v794
        %v1102 = vpop.f32.mrf.mxu0
        %v1103 = vadd.f32 0.0, %v1102
        %v1104 = vpop.f32.mrf.mxu0
        %1105 = vdwg.mxu0
        %v1106 = vld [vmem:[%s6] sm:$0x1]
        %v1107 = vld [vmem:[%s6 + $0x1] sm:$0x1]
        %v1108 = vld [vmem:[%s6 + $0x2] sm:$0x1]
        %v1109 = vld [vmem:[%s6 + $0x3] sm:$0x1]
        %v1114 = vperm.slane %v1106, 0
        %v1115 = vperm.slane %v1107, 0
        %v1116 = vperm.slane %v1108, 0
        %v1117 = vperm.slane %v1109, 0
        %v1122 = vadd.f32 %v869, %v1114
        %v1123 = vadd.f32 %v947, %v1115
        %v1124 = vadd.f32 %v1025, %v1116
        %v1125 = vadd.f32 %v1103, %v1117
        %v1126 = vmul.f32 %v1122, 0.17677669
        %v1127 = vmul.f32 %v1123, 0.17677669
        %v1128 = vmul.f32 %v1124, 0.17677669
        %v1129 = vmul.f32 %v1125, 0.17677669
        %v1130 = vpack.c.bf16 %v1126, %v1126
        %v1131 = vpack.c.bf16 %v1127, %v1127
        %v1132 = vpack.c.bf16 %v1128, %v1128
        %v1133 = vpack.c.bf16 %v1129, %v1129
        %v1134 = vld [vmem:[%s4] sm:$0xf]
        %v1135 = vld [vmem:[%s4 + $0x4] sm:$0xf]
        %v1136 = vld [vmem:[%s4 + $0x8] sm:$0xf]
        %v1137 = vld [vmem:[%s4 + $0xc] sm:$0xf]
        %v1138 = vld [vmem:[%s4 + $0x10] sm:$0xf]
        %v1139 = vld [vmem:[%s4 + $0x14] sm:$0xf]
        %v1140 = vld [vmem:[%s4 + $0x18] sm:$0xf]
        %v1141 = vld [vmem:[%s4 + $0x1c] sm:$0xf]
        %v1142 = vld [vmem:[%s4 + $0x20] sm:$0xf]
        %v1143 = vld [vmem:[%s4 + $0x24] sm:$0xf]
        %v1144 = vld [vmem:[%s4 + $0x28] sm:$0xf]
        %v1145 = vld [vmem:[%s4 + $0x2c] sm:$0xf]
        %v1146 = vld [vmem:[%s4 + $0x30] sm:$0xf]
        %v1147 = vld [vmem:[%s4 + $0x34] sm:$0xf]
        %v1148 = vld [vmem:[%s4 + $0x38] sm:$0xf]
        %v1149 = vld [vmem:[%s4 + $0x3c] sm:$0xf]
        %v1166 = vunpack.c.l.b16 %v1134
        %v1167 = vunpack.c.l.b16 %v1135
        %v1168 = vunpack.c.l.b16 %v1136
        %v1169 = vunpack.c.l.b16 %v1137
        %v1170 = vunpack.c.l.b16 %v1138
        %v1171 = vunpack.c.l.b16 %v1139
        %v1172 = vunpack.c.l.b16 %v1140
        %v1173 = vunpack.c.l.b16 %v1141
        %v1174 = vunpack.c.l.b16 %v1142
        %v1175 = vunpack.c.l.b16 %v1143
        %v1176 = vunpack.c.l.b16 %v1144
        %v1177 = vunpack.c.l.b16 %v1145
        %v1178 = vunpack.c.l.b16 %v1146
        %v1179 = vunpack.c.l.b16 %v1147
        %v1180 = vunpack.c.l.b16 %v1148
        %v1181 = vunpack.c.l.b16 %v1149
        %v1182 = vpack.c.b16 %v1167, %v1166
        %v1183 = vpack.c.b16 %v1169, %v1168
        %v1184 = vpack.c.b16 %v1171, %v1170
        %v1185 = vpack.c.b16 %v1173, %v1172
        %v1186 = vpack.c.b16 %v1175, %v1174
        %v1187 = vpack.c.b16 %v1177, %v1176
        %v1188 = vpack.c.b16 %v1179, %v1178
        %v1189 = vpack.c.b16 %v1181, %v1180
        %1198 = vmatpush.bf16.msra.mxu0 %v1189
        %1199 = vmatpush.bf16.msra.mxu0 %v1188
        %1200 = vmatpush.bf16.msra.mxu0 %v1187
        %1201 = vmatpush.bf16.msra.mxu0 %v1186
        %1202 = vmatpush.bf16.msra.mxu0 %v1185
        %1203 = vmatpush.bf16.msra.mxu0 %v1184
        %1204 = vmatpush.bf16.msra.mxu0 %v1183
        %1205 = vmatpush.bf16.msra.mxu0 %v1182
        %1206 = vmatmul.bf16.gmra.mxu0 %v755
        %v1207 = vpop.f32.mrf.mxu0
        %v1208 = vadd.f32 0.0, %v1207
        %v1209 = vpop.f32.mrf.mxu0
        %v1210 = vadd.f32 0.0, %v1209
        %1211 = vdwg.mxu0
        %s1212 = scalar_lea.vmem %s4, 64
        %v1213 = vld [vmem:[%s1212] sm:$0xf]
        %v1214 = vld [vmem:[%s1212 + $0x4] sm:$0xf]
        %v1215 = vld [vmem:[%s1212 + $0x8] sm:$0xf]
        %v1216 = vld [vmem:[%s1212 + $0xc] sm:$0xf]
        %v1217 = vld [vmem:[%s1212 + $0x10] sm:$0xf]
        %v1218 = vld [vmem:[%s1212 + $0x14] sm:$0xf]
        %v1219 = vld [vmem:[%s1212 + $0x18] sm:$0xf]
        %v1220 = vld [vmem:[%s1212 + $0x1c] sm:$0xf]
        %v1221 = vld [vmem:[%s1212 + $0x20] sm:$0xf]
        %v1222 = vld [vmem:[%s1212 + $0x24] sm:$0xf]
        %v1223 = vld [vmem:[%s1212 + $0x28] sm:$0xf]
        %v1224 = vld [vmem:[%s1212 + $0x2c] sm:$0xf]
        %v1225 = vld [vmem:[%s1212 + $0x30] sm:$0xf]
        %v1226 = vld [vmem:[%s1212 + $0x34] sm:$0xf]
        %v1227 = vld [vmem:[%s1212 + $0x38] sm:$0xf]
        %v1228 = vld [vmem:[%s1212 + $0x3c] sm:$0xf]
        %v1245 = vunpack.c.l.b16 %v1213
        %v1246 = vunpack.c.l.b16 %v1214
        %v1247 = vunpack.c.l.b16 %v1215
        %v1248 = vunpack.c.l.b16 %v1216
        %v1249 = vunpack.c.l.b16 %v1217
        %v1250 = vunpack.c.l.b16 %v1218
        %v1251 = vunpack.c.l.b16 %v1219
        %v1252 = vunpack.c.l.b16 %v1220
        %v1253 = vunpack.c.l.b16 %v1221
        %v1254 = vunpack.c.l.b16 %v1222
        %v1255 = vunpack.c.l.b16 %v1223
        %v1256 = vunpack.c.l.b16 %v1224
        %v1257 = vunpack.c.l.b16 %v1225
        %v1258 = vunpack.c.l.b16 %v1226
        %v1259 = vunpack.c.l.b16 %v1227
        %v1260 = vunpack.c.l.b16 %v1228
        %v1261 = vpack.c.b16 %v1246, %v1245
        %v1262 = vpack.c.b16 %v1248, %v1247
        %v1263 = vpack.c.b16 %v1250, %v1249
        %v1264 = vpack.c.b16 %v1252, %v1251
        %v1265 = vpack.c.b16 %v1254, %v1253
        %v1266 = vpack.c.b16 %v1256, %v1255
        %v1267 = vpack.c.b16 %v1258, %v1257
        %v1268 = vpack.c.b16 %v1260, %v1259
        %1277 = vmatpush.bf16.msra.mxu0 %v1268
        %1278 = vmatpush.bf16.msra.mxu0 %v1267
        %1279 = vmatpush.bf16.msra.mxu0 %v1266
        %1280 = vmatpush.bf16.msra.mxu0 %v1265
        %1281 = vmatpush.bf16.msra.mxu0 %v1264
        %1282 = vmatpush.bf16.msra.mxu0 %v1263
        %1283 = vmatpush.bf16.msra.mxu0 %v1262
        %1284 = vmatpush.bf16.msra.mxu0 %v1261
        %1285 = vmatmul.bf16.gmra.mxu0 %v755
        %v1286 = vpop.f32.mrf.mxu0
        %v1287 = vadd.f32 0.0, %v1286
        %v1288 = vpop.f32.mrf.mxu0
        %v1289 = vadd.f32 0.0, %v1288
        %1290 = vdwg.mxu0
        %s1291 = scalar_lea.vmem %s4, 128
        %v1292 = vld [vmem:[%s1291] sm:$0xf]
        %v1293 = vld [vmem:[%s1291 + $0x4] sm:$0xf]
        %v1294 = vld [vmem:[%s1291 + $0x8] sm:$0xf]
        %v1295 = vld [vmem:[%s1291 + $0xc] sm:$0xf]
        %v1296 = vld [vmem:[%s1291 + $0x10] sm:$0xf]
        %v1297 = vld [vmem:[%s1291 + $0x14] sm:$0xf]
        %v1298 = vld [vmem:[%s1291 + $0x18] sm:$0xf]
        %v1299 = vld [vmem:[%s1291 + $0x1c] sm:$0xf]
        %v1300 = vld [vmem:[%s1291 + $0x20] sm:$0xf]
        %v1301 = vld [vmem:[%s1291 + $0x24] sm:$0xf]
        %v1302 = vld [vmem:[%s1291 + $0x28] sm:$0xf]
        %v1303 = vld [vmem:[%s1291 + $0x2c] sm:$0xf]
        %v1304 = vld [vmem:[%s1291 + $0x30] sm:$0xf]
        %v1305 = vld [vmem:[%s1291 + $0x34] sm:$0xf]
        %v1306 = vld [vmem:[%s1291 + $0x38] sm:$0xf]
        %v1307 = vld [vmem:[%s1291 + $0x3c] sm:$0xf]
        %v1324 = vunpack.c.l.b16 %v1292
        %v1325 = vunpack.c.l.b16 %v1293
        %v1326 = vunpack.c.l.b16 %v1294
        %v1327 = vunpack.c.l.b16 %v1295
        %v1328 = vunpack.c.l.b16 %v1296
        %v1329 = vunpack.c.l.b16 %v1297
        %v1330 = vunpack.c.l.b16 %v1298
        %v1331 = vunpack.c.l.b16 %v1299
        %v1332 = vunpack.c.l.b16 %v1300
        %v1333 = vunpack.c.l.b16 %v1301
        %v1334 = vunpack.c.l.b16 %v1302
        %v1335 = vunpack.c.l.b16 %v1303
        %v1336 = vunpack.c.l.b16 %v1304
        %v1337 = vunpack.c.l.b16 %v1305
        %v1338 = vunpack.c.l.b16 %v1306
        %v1339 = vunpack.c.l.b16 %v1307
        %v1340 = vpack.c.b16 %v1325, %v1324
        %v1341 = vpack.c.b16 %v1327, %v1326
        %v1342 = vpack.c.b16 %v1329, %v1328
        %v1343 = vpack.c.b16 %v1331, %v1330
        %v1344 = vpack.c.b16 %v1333, %v1332
        %v1345 = vpack.c.b16 %v1335, %v1334
        %v1346 = vpack.c.b16 %v1337, %v1336
        %v1347 = vpack.c.b16 %v1339, %v1338
        %1356 = vmatpush.bf16.msra.mxu0 %v1347
        %1357 = vmatpush.bf16.msra.mxu0 %v1346
        %1358 = vmatpush.bf16.msra.mxu0 %v1345
        %1359 = vmatpush.bf16.msra.mxu0 %v1344
        %1360 = vmatpush.bf16.msra.mxu0 %v1343
        %1361 = vmatpush.bf16.msra.mxu0 %v1342
        %1362 = vmatpush.bf16.msra.mxu0 %v1341
        %1363 = vmatpush.bf16.msra.mxu0 %v1340
        %1364 = vmatmul.bf16.gmra.mxu0 %v755
        %v1365 = vpop.f32.mrf.mxu0
        %v1366 = vadd.f32 0.0, %v1365
        %v1367 = vpop.f32.mrf.mxu0
        %v1368 = vadd.f32 0.0, %v1367
        %1369 = vdwg.mxu0
        %s1370 = scalar_lea.vmem %s4, 192
        %v1371 = vld [vmem:[%s1370] sm:$0xf]
        %v1372 = vld [vmem:[%s1370 + $0x4] sm:$0xf]
        %v1373 = vld [vmem:[%s1370 + $0x8] sm:$0xf]
        %v1374 = vld [vmem:[%s1370 + $0xc] sm:$0xf]
        %v1375 = vld [vmem:[%s1370 + $0x10] sm:$0xf]
        %v1376 = vld [vmem:[%s1370 + $0x14] sm:$0xf]
        %v1377 = vld [vmem:[%s1370 + $0x18] sm:$0xf]
        %v1378 = vld [vmem:[%s1370 + $0x1c] sm:$0xf]
        %v1379 = vld [vmem:[%s1370 + $0x20] sm:$0xf]
        %v1380 = vld [vmem:[%s1370 + $0x24] sm:$0xf]
        %v1381 = vld [vmem:[%s1370 + $0x28] sm:$0xf]
        %v1382 = vld [vmem:[%s1370 + $0x2c] sm:$0xf]
        %v1383 = vld [vmem:[%s1370 + $0x30] sm:$0xf]
        %v1384 = vld [vmem:[%s1370 + $0x34] sm:$0xf]
        %v1385 = vld [vmem:[%s1370 + $0x38] sm:$0xf]
        %v1386 = vld [vmem:[%s1370 + $0x3c] sm:$0xf]
        %v1403 = vunpack.c.l.b16 %v1371
        %v1404 = vunpack.c.l.b16 %v1372
        %v1405 = vunpack.c.l.b16 %v1373
        %v1406 = vunpack.c.l.b16 %v1374
        %v1407 = vunpack.c.l.b16 %v1375
        %v1408 = vunpack.c.l.b16 %v1376
        %v1409 = vunpack.c.l.b16 %v1377
        %v1410 = vunpack.c.l.b16 %v1378
        %v1411 = vunpack.c.l.b16 %v1379
        %v1412 = vunpack.c.l.b16 %v1380
        %v1413 = vunpack.c.l.b16 %v1381
        %v1414 = vunpack.c.l.b16 %v1382
        %v1415 = vunpack.c.l.b16 %v1383
        %v1416 = vunpack.c.l.b16 %v1384
        %v1417 = vunpack.c.l.b16 %v1385
        %v1418 = vunpack.c.l.b16 %v1386
        %v1419 = vpack.c.b16 %v1404, %v1403
        %v1420 = vpack.c.b16 %v1406, %v1405
        %v1421 = vpack.c.b16 %v1408, %v1407
        %v1422 = vpack.c.b16 %v1410, %v1409
        %v1423 = vpack.c.b16 %v1412, %v1411
        %v1424 = vpack.c.b16 %v1414, %v1413
        %v1425 = vpack.c.b16 %v1416, %v1415
        %v1426 = vpack.c.b16 %v1418, %v1417
        %1435 = vmatpush.bf16.msra.mxu0 %v1426
        %1436 = vmatpush.bf16.msra.mxu0 %v1425
        %1437 = vmatpush.bf16.msra.mxu0 %v1424
        %1438 = vmatpush.bf16.msra.mxu0 %v1423
        %1439 = vmatpush.bf16.msra.mxu0 %v1422
        %1440 = vmatpush.bf16.msra.mxu0 %v1421
        %1441 = vmatpush.bf16.msra.mxu0 %v1420
        %1442 = vmatpush.bf16.msra.mxu0 %v1419
        %1443 = vmatmul.bf16.gmra.mxu0 %v755
        %v1444 = vpop.f32.mrf.mxu0
        %v1445 = vadd.f32 0.0, %v1444
        %v1446 = vpop.f32.mrf.mxu0
        %v1447 = vadd.f32 0.0, %v1446
        %1448 = vdwg.mxu0
        %v1449 = vld [vmem:[%s7] sm:$0x1]
        %v1450 = vld [vmem:[%s7 + $0x1] sm:$0x1]
        %v1451 = vld [vmem:[%s7 + $0x2] sm:$0x1]
        %v1452 = vld [vmem:[%s7 + $0x3] sm:$0x1]
        %v1457 = vperm.slane %v1449, 0
        %v1458 = vperm.slane %v1450, 0
        %v1459 = vperm.slane %v1451, 0
        %v1460 = vperm.slane %v1452, 0
        %v1465 = vadd.f32 %v1208, %v1457
        %v1466 = vadd.f32 %v1210, %v1457
        %v1467 = vadd.f32 %v1287, %v1458
        %v1468 = vadd.f32 %v1289, %v1458
        %v1469 = vadd.f32 %v1366, %v1459
        %v1470 = vadd.f32 %v1368, %v1459
        %v1471 = vadd.f32 %v1445, %v1460
        %v1472 = vadd.f32 %v1447, %v1460
        %v1473 = vpack.c.bf16 %v1465, %v1465
        %v1474 = vpack.c.bf16 %v1466, %v1466
        %v1475 = vpack.c.bf16 %v1467, %v1467
        %v1476 = vpack.c.bf16 %v1468, %v1468
        %v1477 = vpack.c.bf16 %v1469, %v1469
        %v1478 = vpack.c.bf16 %v1470, %v1470
        %v1479 = vpack.c.bf16 %v1471, %v1471
        %v1480 = vpack.c.bf16 %v1472, %v1472
        %v1481 = vld [vmem:[%s5] sm:$0xf]
        %v1482 = vld [vmem:[%s5 + $0x4] sm:$0xf]
        %v1483 = vld [vmem:[%s5 + $0x8] sm:$0xf]
        %v1484 = vld [vmem:[%s5 + $0xc] sm:$0xf]
        %v1485 = vld [vmem:[%s5 + $0x10] sm:$0xf]
        %v1486 = vld [vmem:[%s5 + $0x14] sm:$0xf]
        %v1487 = vld [vmem:[%s5 + $0x18] sm:$0xf]
        %v1488 = vld [vmem:[%s5 + $0x1c] sm:$0xf]
        %v1489 = vld [vmem:[%s5 + $0x20] sm:$0xf]
        %v1490 = vld [vmem:[%s5 + $0x24] sm:$0xf]
        %v1491 = vld [vmem:[%s5 + $0x28] sm:$0xf]
        %v1492 = vld [vmem:[%s5 + $0x2c] sm:$0xf]
        %v1493 = vld [vmem:[%s5 + $0x30] sm:$0xf]
        %v1494 = vld [vmem:[%s5 + $0x34] sm:$0xf]
        %v1495 = vld [vmem:[%s5 + $0x38] sm:$0xf]
        %v1496 = vld [vmem:[%s5 + $0x3c] sm:$0xf]
        %v1513 = vunpack.c.l.b16 %v1481
        %v1514 = vunpack.c.l.b16 %v1482
        %v1515 = vunpack.c.l.b16 %v1483
        %v1516 = vunpack.c.l.b16 %v1484
        %v1517 = vunpack.c.l.b16 %v1485
        %v1518 = vunpack.c.l.b16 %v1486
        %v1519 = vunpack.c.l.b16 %v1487
        %v1520 = vunpack.c.l.b16 %v1488
        %v1521 = vunpack.c.l.b16 %v1489
        %v1522 = vunpack.c.l.b16 %v1490
        %v1523 = vunpack.c.l.b16 %v1491
        %v1524 = vunpack.c.l.b16 %v1492
        %v1525 = vunpack.c.l.b16 %v1493
        %v1526 = vunpack.c.l.b16 %v1494
        %v1527 = vunpack.c.l.b16 %v1495
        %v1528 = vunpack.c.l.b16 %v1496
        %v1529 = vpack.c.b16 %v1514, %v1513
        %v1530 = vpack.c.b16 %v1516, %v1515
        %v1531 = vpack.c.b16 %v1518, %v1517
        %v1532 = vpack.c.b16 %v1520, %v1519
        %v1533 = vpack.c.b16 %v1522, %v1521
        %v1534 = vpack.c.b16 %v1524, %v1523
        %v1535 = vpack.c.b16 %v1526, %v1525
        %v1536 = vpack.c.b16 %v1528, %v1527
        %1545 = vmatpush.bf16.msra.mxu0 %v1536
        %1546 = vmatpush.bf16.msra.mxu0 %v1535
        %1547 = vmatpush.bf16.msra.mxu0 %v1534
        %1548 = vmatpush.bf16.msra.mxu0 %v1533
        %1549 = vmatpush.bf16.msra.mxu0 %v1532
        %1550 = vmatpush.bf16.msra.mxu0 %v1531
        %1551 = vmatpush.bf16.msra.mxu0 %v1530
        %1552 = vmatpush.bf16.msra.mxu0 %v1529
        %1553 = vmatmul.bf16.gmra.mxu0 %v755
        %v1554 = vpop.f32.mrf.mxu0
        %v1555 = vadd.f32 0.0, %v1554
        %v1556 = vpop.f32.mrf.mxu0
        %v1557 = vadd.f32 0.0, %v1556
        %1558 = vdwg.mxu0
        %s1559 = scalar_lea.vmem %s5, 64
        %v1560 = vld [vmem:[%s1559] sm:$0xf]
        %v1561 = vld [vmem:[%s1559 + $0x4] sm:$0xf]
        %v1562 = vld [vmem:[%s1559 + $0x8] sm:$0xf]
        %v1563 = vld [vmem:[%s1559 + $0xc] sm:$0xf]
        %v1564 = vld [vmem:[%s1559 + $0x10] sm:$0xf]
        %v1565 = vld [vmem:[%s1559 + $0x14] sm:$0xf]
        %v1566 = vld [vmem:[%s1559 + $0x18] sm:$0xf]
        %v1567 = vld [vmem:[%s1559 + $0x1c] sm:$0xf]
        %v1568 = vld [vmem:[%s1559 + $0x20] sm:$0xf]
        %v1569 = vld [vmem:[%s1559 + $0x24] sm:$0xf]
        %v1570 = vld [vmem:[%s1559 + $0x28] sm:$0xf]
        %v1571 = vld [vmem:[%s1559 + $0x2c] sm:$0xf]
        %v1572 = vld [vmem:[%s1559 + $0x30] sm:$0xf]
        %v1573 = vld [vmem:[%s1559 + $0x34] sm:$0xf]
        %v1574 = vld [vmem:[%s1559 + $0x38] sm:$0xf]
        %v1575 = vld [vmem:[%s1559 + $0x3c] sm:$0xf]
        %v1592 = vunpack.c.l.b16 %v1560
        %v1593 = vunpack.c.l.b16 %v1561
        %v1594 = vunpack.c.l.b16 %v1562
        %v1595 = vunpack.c.l.b16 %v1563
        %v1596 = vunpack.c.l.b16 %v1564
        %v1597 = vunpack.c.l.b16 %v1565
        %v1598 = vunpack.c.l.b16 %v1566
        %v1599 = vunpack.c.l.b16 %v1567
        %v1600 = vunpack.c.l.b16 %v1568
        %v1601 = vunpack.c.l.b16 %v1569
        %v1602 = vunpack.c.l.b16 %v1570
        %v1603 = vunpack.c.l.b16 %v1571
        %v1604 = vunpack.c.l.b16 %v1572
        %v1605 = vunpack.c.l.b16 %v1573
        %v1606 = vunpack.c.l.b16 %v1574
        %v1607 = vunpack.c.l.b16 %v1575
        %v1608 = vpack.c.b16 %v1593, %v1592
        %v1609 = vpack.c.b16 %v1595, %v1594
        %v1610 = vpack.c.b16 %v1597, %v1596
        %v1611 = vpack.c.b16 %v1599, %v1598
        %v1612 = vpack.c.b16 %v1601, %v1600
        %v1613 = vpack.c.b16 %v1603, %v1602
        %v1614 = vpack.c.b16 %v1605, %v1604
        %v1615 = vpack.c.b16 %v1607, %v1606
        %1624 = vmatpush.bf16.msra.mxu0 %v1615
        %1625 = vmatpush.bf16.msra.mxu0 %v1614
        %1626 = vmatpush.bf16.msra.mxu0 %v1613
        %1627 = vmatpush.bf16.msra.mxu0 %v1612
        %1628 = vmatpush.bf16.msra.mxu0 %v1611
        %1629 = vmatpush.bf16.msra.mxu0 %v1610
        %1630 = vmatpush.bf16.msra.mxu0 %v1609
        %1631 = vmatpush.bf16.msra.mxu0 %v1608
        %1632 = vmatmul.bf16.gmra.mxu0 %v755
        %v1633 = vpop.f32.mrf.mxu0
        %v1634 = vadd.f32 0.0, %v1633
        %v1635 = vpop.f32.mrf.mxu0
        %v1636 = vadd.f32 0.0, %v1635
        %1637 = vdwg.mxu0
        %s1638 = scalar_lea.vmem %s5, 128
        %v1639 = vld [vmem:[%s1638] sm:$0xf]
        %v1640 = vld [vmem:[%s1638 + $0x4] sm:$0xf]
        %v1641 = vld [vmem:[%s1638 + $0x8] sm:$0xf]
        %v1642 = vld [vmem:[%s1638 + $0xc] sm:$0xf]
        %v1643 = vld [vmem:[%s1638 + $0x10] sm:$0xf]
        %v1644 = vld [vmem:[%s1638 + $0x14] sm:$0xf]
        %v1645 = vld [vmem:[%s1638 + $0x18] sm:$0xf]
        %v1646 = vld [vmem:[%s1638 + $0x1c] sm:$0xf]
        %v1647 = vld [vmem:[%s1638 + $0x20] sm:$0xf]
        %v1648 = vld [vmem:[%s1638 + $0x24] sm:$0xf]
        %v1649 = vld [vmem:[%s1638 + $0x28] sm:$0xf]
        %v1650 = vld [vmem:[%s1638 + $0x2c] sm:$0xf]
        %v1651 = vld [vmem:[%s1638 + $0x30] sm:$0xf]
        %v1652 = vld [vmem:[%s1638 + $0x34] sm:$0xf]
        %v1653 = vld [vmem:[%s1638 + $0x38] sm:$0xf]
        %v1654 = vld [vmem:[%s1638 + $0x3c] sm:$0xf]
        %v1671 = vunpack.c.l.b16 %v1639
        %v1672 = vunpack.c.l.b16 %v1640
        %v1673 = vunpack.c.l.b16 %v1641
        %v1674 = vunpack.c.l.b16 %v1642
        %v1675 = vunpack.c.l.b16 %v1643
        %v1676 = vunpack.c.l.b16 %v1644
        %v1677 = vunpack.c.l.b16 %v1645
        %v1678 = vunpack.c.l.b16 %v1646
        %v1679 = vunpack.c.l.b16 %v1647
        %v1680 = vunpack.c.l.b16 %v1648
        %v1681 = vunpack.c.l.b16 %v1649
        %v1682 = vunpack.c.l.b16 %v1650
        %v1683 = vunpack.c.l.b16 %v1651
        %v1684 = vunpack.c.l.b16 %v1652
        %v1685 = vunpack.c.l.b16 %v1653
        %v1686 = vunpack.c.l.b16 %v1654
        %v1687 = vpack.c.b16 %v1672, %v1671
        %v1688 = vpack.c.b16 %v1674, %v1673
        %v1689 = vpack.c.b16 %v1676, %v1675
        %v1690 = vpack.c.b16 %v1678, %v1677
        %v1691 = vpack.c.b16 %v1680, %v1679
        %v1692 = vpack.c.b16 %v1682, %v1681
        %v1693 = vpack.c.b16 %v1684, %v1683
        %v1694 = vpack.c.b16 %v1686, %v1685
        %1703 = vmatpush.bf16.msra.mxu0 %v1694
        %1704 = vmatpush.bf16.msra.mxu0 %v1693
        %1705 = vmatpush.bf16.msra.mxu0 %v1692
        %1706 = vmatpush.bf16.msra.mxu0 %v1691
        %1707 = vmatpush.bf16.msra.mxu0 %v1690
        %1708 = vmatpush.bf16.msra.mxu0 %v1689
        %1709 = vmatpush.bf16.msra.mxu0 %v1688
        %1710 = vmatpush.bf16.msra.mxu0 %v1687
        %1711 = vmatmul.bf16.gmra.mxu0 %v755
        %v1712 = vpop.f32.mrf.mxu0
        %v1713 = vadd.f32 0.0, %v1712
        %v1714 = vpop.f32.mrf.mxu0
        %v1715 = vadd.f32 0.0, %v1714
        %1716 = vdwg.mxu0
        %s1717 = scalar_lea.vmem %s5, 192
        %v1718 = vld [vmem:[%s1717] sm:$0xf]
        %v1719 = vld [vmem:[%s1717 + $0x4] sm:$0xf]
        %v1720 = vld [vmem:[%s1717 + $0x8] sm:$0xf]
        %v1721 = vld [vmem:[%s1717 + $0xc] sm:$0xf]
        %v1722 = vld [vmem:[%s1717 + $0x10] sm:$0xf]
        %v1723 = vld [vmem:[%s1717 + $0x14] sm:$0xf]
        %v1724 = vld [vmem:[%s1717 + $0x18] sm:$0xf]
        %v1725 = vld [vmem:[%s1717 + $0x1c] sm:$0xf]
        %v1726 = vld [vmem:[%s1717 + $0x20] sm:$0xf]
        %v1727 = vld [vmem:[%s1717 + $0x24] sm:$0xf]
        %v1728 = vld [vmem:[%s1717 + $0x28] sm:$0xf]
        %v1729 = vld [vmem:[%s1717 + $0x2c] sm:$0xf]
        %v1730 = vld [vmem:[%s1717 + $0x30] sm:$0xf]
        %v1731 = vld [vmem:[%s1717 + $0x34] sm:$0xf]
        %v1732 = vld [vmem:[%s1717 + $0x38] sm:$0xf]
        %v1733 = vld [vmem:[%s1717 + $0x3c] sm:$0xf]
        %v1750 = vunpack.c.l.b16 %v1718
        %v1751 = vunpack.c.l.b16 %v1719
        %v1752 = vunpack.c.l.b16 %v1720
        %v1753 = vunpack.c.l.b16 %v1721
        %v1754 = vunpack.c.l.b16 %v1722
        %v1755 = vunpack.c.l.b16 %v1723
        %v1756 = vunpack.c.l.b16 %v1724
        %v1757 = vunpack.c.l.b16 %v1725
        %v1758 = vunpack.c.l.b16 %v1726
        %v1759 = vunpack.c.l.b16 %v1727
        %v1760 = vunpack.c.l.b16 %v1728
        %v1761 = vunpack.c.l.b16 %v1729
        %v1762 = vunpack.c.l.b16 %v1730
        %v1763 = vunpack.c.l.b16 %v1731
        %v1764 = vunpack.c.l.b16 %v1732
        %v1765 = vunpack.c.l.b16 %v1733
        %v1766 = vpack.c.b16 %v1751, %v1750
        %v1767 = vpack.c.b16 %v1753, %v1752
        %v1768 = vpack.c.b16 %v1755, %v1754
        %v1769 = vpack.c.b16 %v1757, %v1756
        %v1770 = vpack.c.b16 %v1759, %v1758
        %v1771 = vpack.c.b16 %v1761, %v1760
        %v1772 = vpack.c.b16 %v1763, %v1762
        %v1773 = vpack.c.b16 %v1765, %v1764
        %1782 = vmatpush.bf16.msra.mxu0 %v1773
        %1783 = vmatpush.bf16.msra.mxu0 %v1772
        %1784 = vmatpush.bf16.msra.mxu0 %v1771
        %1785 = vmatpush.bf16.msra.mxu0 %v1770
        %1786 = vmatpush.bf16.msra.mxu0 %v1769
        %1787 = vmatpush.bf16.msra.mxu0 %v1768
        %1788 = vmatpush.bf16.msra.mxu0 %v1767
        %1789 = vmatpush.bf16.msra.mxu0 %v1766
        %1790 = vmatmul.bf16.gmra.mxu0 %v755
        %v1791 = vpop.f32.mrf.mxu0
        %v1792 = vadd.f32 0.0, %v1791
        %v1793 = vpop.f32.mrf.mxu0
        %v1794 = vadd.f32 0.0, %v1793
        %1795 = vdwg.mxu0
        %v1796 = vld [vmem:[%s8] sm:$0x1]
        %v1797 = vld [vmem:[%s8 + $0x1] sm:$0x1]
        %v1798 = vld [vmem:[%s8 + $0x2] sm:$0x1]
        %v1799 = vld [vmem:[%s8 + $0x3] sm:$0x1]
        %v1804 = vperm.slane %v1796, 0
        %v1805 = vperm.slane %v1797, 0
        %v1806 = vperm.slane %v1798, 0
        %v1807 = vperm.slane %v1799, 0
        %v1812 = vadd.f32 %v1555, %v1804
        %v1813 = vadd.f32 %v1557, %v1804
        %v1814 = vadd.f32 %v1634, %v1805
        %v1815 = vadd.f32 %v1636, %v1805
        %v1816 = vadd.f32 %v1713, %v1806
        %v1817 = vadd.f32 %v1715, %v1806
        %v1818 = vadd.f32 %v1792, %v1807
        %v1819 = vadd.f32 %v1794, %v1807
        %v1820 = vpack.c.bf16 %v1812, %v1812
        %v1821 = vpack.c.bf16 %v1813, %v1813
        %v1822 = vpack.c.bf16 %v1814, %v1814
        %v1823 = vpack.c.bf16 %v1815, %v1815
        %v1824 = vpack.c.bf16 %v1816, %v1816
        %v1825 = vpack.c.bf16 %v1817, %v1817
        %v1826 = vpack.c.bf16 %v1818, %v1818
        %v1827 = vpack.c.bf16 %v1819, %v1819
        %v1828 = vld [vmem:[%s659] sm:$0x1]
        %v1829 = vsub.f32 %v1828, 1.0
        %v1830 = vmul.f32 %v1829, 1e+09
        %v1832 = vperm.slane %v1830, 0
        %v1836 = vunpack.c.l.b16 %v1473
        %v1837 = vunpack.c.l.b16 %v1474
        %v1838 = vpack.c.b16 %v1837, %v1836
        %vm1839 = vcmask 261120
        %v1841 = vsel %vm1839, %v1130, 0
        %v1844 = vsel %vm1839, %v1838, 0
        %1846 = vmatpush.bf16.xpose.msra.mxu0 0
        %1847 = vmatpush.bf16.xpose.msra.mxu0 0
        %1848 = vmatpush.bf16.xpose.msra.mxu0 0
        %1849 = vmatpush.bf16.xpose.msra.mxu0 0
        %1850 = vmatpush.bf16.xpose.msra.mxu0 0
        %1851 = vmatpush.bf16.xpose.msra.mxu0 0
        %1852 = vmatpush.bf16.xpose.msra.mxu0 0
        %1853 = vmatpush.bf16.xpose.msra.mxu0 %v1844
        %1854 = vmatmul.bf16.gmra.mxu0 %v1841
        %v1855 = vpop.f32.mrf.mxu0
        %v1856 = vadd.f32 %v1832, %v1855
        %v1857 = vpop.f32.mrf.mxu0
        %1858 = vdwg.mxu0
        %v1861 = vunpack.c.l.b16 %v1475
        %v1862 = vunpack.c.l.b16 %v1476
        %v1863 = vpack.c.b16 %v1862, %v1861
        %v1865 = vsel %vm1839, %v1131, 0
        %v1868 = vsel %vm1839, %v1863, 0
        %1870 = vmatpush.bf16.xpose.msra.mxu0 0
        %1871 = vmatpush.bf16.xpose.msra.mxu0 0
        %1872 = vmatpush.bf16.xpose.msra.mxu0 0
        %1873 = vmatpush.bf16.xpose.msra.mxu0 0
        %1874 = vmatpush.bf16.xpose.msra.mxu0 0
        %1875 = vmatpush.bf16.xpose.msra.mxu0 0
        %1876 = vmatpush.bf16.xpose.msra.mxu0 0
        %1877 = vmatpush.bf16.xpose.msra.mxu0 %v1868
        %1878 = vmatmul.bf16.gmra.mxu0 %v1865
        %v1879 = vpop.f32.mrf.mxu0
        %v1880 = vadd.f32 %v1832, %v1879
        %v1881 = vpop.f32.mrf.mxu0
        %1882 = vdwg.mxu0
        %v1885 = vunpack.c.l.b16 %v1477
        %v1886 = vunpack.c.l.b16 %v1478
        %v1887 = vpack.c.b16 %v1886, %v1885
        %v1889 = vsel %vm1839, %v1132, 0
        %v1892 = vsel %vm1839, %v1887, 0
        %1894 = vmatpush.bf16.xpose.msra.mxu0 0
        %1895 = vmatpush.bf16.xpose.msra.mxu0 0
        %1896 = vmatpush.bf16.xpose.msra.mxu0 0
        %1897 = vmatpush.bf16.xpose.msra.mxu0 0
        %1898 = vmatpush.bf16.xpose.msra.mxu0 0
        %1899 = vmatpush.bf16.xpose.msra.mxu0 0
        %1900 = vmatpush.bf16.xpose.msra.mxu0 0
        %1901 = vmatpush.bf16.xpose.msra.mxu0 %v1892
        %1902 = vmatmul.bf16.gmra.mxu0 %v1889
        %v1903 = vpop.f32.mrf.mxu0
        %v1904 = vadd.f32 %v1832, %v1903
        %v1905 = vpop.f32.mrf.mxu0
        %1906 = vdwg.mxu0
        %v1909 = vunpack.c.l.b16 %v1479
        %v1910 = vunpack.c.l.b16 %v1480
        %v1911 = vpack.c.b16 %v1910, %v1909
        %v1913 = vsel %vm1839, %v1133, 0
        %v1916 = vsel %vm1839, %v1911, 0
        %1918 = vmatpush.bf16.xpose.msra.mxu0 0
        %1919 = vmatpush.bf16.xpose.msra.mxu0 0
        %1920 = vmatpush.bf16.xpose.msra.mxu0 0
        %1921 = vmatpush.bf16.xpose.msra.mxu0 0
        %1922 = vmatpush.bf16.xpose.msra.mxu0 0
        %1923 = vmatpush.bf16.xpose.msra.mxu0 0
        %1924 = vmatpush.bf16.xpose.msra.mxu0 0
        %1925 = vmatpush.bf16.xpose.msra.mxu0 %v1916
        %1926 = vmatmul.bf16.gmra.mxu0 %v1913
        %v1927 = vpop.f32.mrf.mxu0
        %v1928 = vadd.f32 %v1832, %v1927
        %v1929 = vpop.f32.mrf.mxu0
        %1930 = vdwg.mxu0
        %vm1931 = vcmask 130048
        %v1932 = vsel %vm1931, %v1856, -inf
        %1933 = vmax.xlane.f32.xlu0 %v1932
        %v1934 = vpop.xlane.xlu0 %1933
        %v1935 = vsel %vm1931, %v1880, -inf
        %1936 = vmax.xlane.f32.xlu0 %v1935
        %v1937 = vpop.xlane.xlu0 %1936
        %v1938 = vsel %vm1931, %v1904, -inf
        %1939 = vmax.xlane.f32.xlu0 %v1938
        %v1940 = vpop.xlane.xlu0 %1939
        %v1941 = vsel %vm1931, %v1928, -inf
        %1942 = vmax.xlane.f32.xlu0 %v1941
        %v1943 = vpop.xlane.xlu0 %1942
        %v1944 = vsub.f32 %v1856, %v1934
        %v1945 = vsub.f32 %v1880, %v1937
        %v1946 = vsub.f32 %v1904, %v1940
        %v1947 = vsub.f32 %v1928, %v1943
        %v1948 = vmul.f32 %v1944, 1.442695
        %v1949 = vpow.pop %v1948
        %v1950 = vmul.f32 %v1945, 1.442695
        %v1951 = vpow.pop %v1950
        %v1952 = vmul.f32 %v1946, 1.442695
        %v1953 = vpow.pop %v1952
        %v1954 = vmul.f32 %v1947, 1.442695
        %v1955 = vpow.pop %v1954
        %v1956 = vsel %vm1931, %v1949, 0.0
        %1957 = vadd.xlane.f32.xlu0 %v1956
        %v1958 = vpop.xlane.xlu0 %1957
        %v1959 = vsel %vm1931, %v1951, 0.0
        %1960 = vadd.xlane.f32.xlu0 %v1959
        %v1961 = vpop.xlane.xlu0 %1960
        %v1962 = vsel %vm1931, %v1953, 0.0
        %1963 = vadd.xlane.f32.xlu0 %v1962
        %v1964 = vpop.xlane.xlu0 %1963
        %v1965 = vsel %vm1931, %v1955, 0.0
        %1966 = vadd.xlane.f32.xlu0 %v1965
        %v1967 = vpop.xlane.xlu0 %1966
        %v1968 = vrcp.pop %v1958
        %v1969 = vrcp.pop %v1961
        %v1970 = vrcp.pop %v1964
        %v1971 = vrcp.pop %v1967
        %v1972 = vmul.f32 %v1949, %v1968
        %v1973 = vmul.f32 %v1951, %v1969
        %v1974 = vmul.f32 %v1953, %v1970
        %v1975 = vmul.f32 %v1955, %v1971
        %v1976 = vpack.c.bf16 %v1972, %v1972
        %v1977 = vpack.c.bf16 %v1973, %v1973
        %v1978 = vpack.c.bf16 %v1974, %v1974
        %v1979 = vpack.c.bf16 %v1975, %v1975
        %v1982 = vunpack.c.l.b16 %v1820
        %v1983 = vunpack.c.l.b16 %v1821
        %v1984 = vpack.c.b16 %v1983, %v1982
        %v1987 = vsel %vm1931, %v1976, 0
        %1989 = vmatpush.bf16.msra.mxu0 0
        %1990 = vmatpush.bf16.msra.mxu0 0
        %1991 = vmatpush.bf16.msra.mxu0 0
        %1992 = vmatpush.bf16.msra.mxu0 0
        %1993 = vmatpush.bf16.msra.mxu0 0
        %1994 = vmatpush.bf16.msra.mxu0 0
        %1995 = vmatpush.bf16.msra.mxu0 0
        %1996 = vmatpush.bf16.msra.mxu0 %v1984
        %1997 = vmatmul.bf16.gmra.mxu0 %v1987
        %v1998 = vpop.f32.mrf.mxu0
        %v1999 = vadd.f32 0.0, %v1998
        %v2000 = vpop.f32.mrf.mxu0
        %2001 = vdwg.mxu0
        %v2004 = vunpack.c.l.b16 %v1822
        %v2005 = vunpack.c.l.b16 %v1823
        %v2006 = vpack.c.b16 %v2005, %v2004
        %v2009 = vsel %vm1931, %v1977, 0
        %2011 = vmatpush.bf16.msra.mxu0 0
        %2012 = vmatpush.bf16.msra.mxu0 0
        %2013 = vmatpush.bf16.msra.mxu0 0
        %2014 = vmatpush.bf16.msra.mxu0 0
        %2015 = vmatpush.bf16.msra.mxu0 0
        %2016 = vmatpush.bf16.msra.mxu0 0
        %2017 = vmatpush.bf16.msra.mxu0 0
        %2018 = vmatpush.bf16.msra.mxu0 %v2006
        %2019 = vmatmul.bf16.gmra.mxu0 %v2009
        %v2020 = vpop.f32.mrf.mxu0
        %v2021 = vadd.f32 0.0, %v2020
        %v2022 = vpop.f32.mrf.mxu0
        %2023 = vdwg.mxu0
        %v2026 = vunpack.c.l.b16 %v1824
        %v2027 = vunpack.c.l.b16 %v1825
        %v2028 = vpack.c.b16 %v2027, %v2026
        %v2031 = vsel %vm1931, %v1978, 0
        %2033 = vmatpush.bf16.msra.mxu0 0
        %2034 = vmatpush.bf16.msra.mxu0 0
        %2035 = vmatpush.bf16.msra.mxu0 0
        %2036 = vmatpush.bf16.msra.mxu0 0
        %2037 = vmatpush.bf16.msra.mxu0 0
        %2038 = vmatpush.bf16.msra.mxu0 0
        %2039 = vmatpush.bf16.msra.mxu0 0
        %2040 = vmatpush.bf16.msra.mxu0 %v2028
        %2041 = vmatmul.bf16.gmra.mxu0 %v2031
        %v2042 = vpop.f32.mrf.mxu0
        %v2043 = vadd.f32 0.0, %v2042
        %v2044 = vpop.f32.mrf.mxu0
        %2045 = vdwg.mxu0
        %v2048 = vunpack.c.l.b16 %v1826
        %v2049 = vunpack.c.l.b16 %v1827
        %v2050 = vpack.c.b16 %v2049, %v2048
        %v2053 = vsel %vm1931, %v1979, 0
        %2055 = vmatpush.bf16.msra.mxu0 0
        %2056 = vmatpush.bf16.msra.mxu0 0
        %2057 = vmatpush.bf16.msra.mxu0 0
        %2058 = vmatpush.bf16.msra.mxu0 0
        %2059 = vmatpush.bf16.msra.mxu0 0
        %2060 = vmatpush.bf16.msra.mxu0 0
        %2061 = vmatpush.bf16.msra.mxu0 0
        %2062 = vmatpush.bf16.msra.mxu0 %v2050
        %2063 = vmatmul.bf16.gmra.mxu0 %v2053
        %v2064 = vpop.f32.mrf.mxu0
        %v2065 = vadd.f32 0.0, %v2064
        %v2066 = vpop.f32.mrf.mxu0
        %2067 = vdwg.mxu0
        %v2068 = vpack.c.bf16 %v1999, %v1999
        %v2069 = vpack.c.bf16 %v2021, %v2021
        %v2070 = vpack.c.bf16 %v2043, %v2043
        %v2071 = vpack.c.bf16 %v2065, %v2065
        %v2072 = vld [vmem:[%s9] sm:$0xf]
        %v2073 = vld [vmem:[%s9 + $0x4] sm:$0xf]
        %v2074 = vld [vmem:[%s9 + $0x8] sm:$0xf]
        %v2075 = vld [vmem:[%s9 + $0xc] sm:$0xf]
        %v2076 = vld [vmem:[%s9 + $0x10] sm:$0xf]
        %v2077 = vld [vmem:[%s9 + $0x14] sm:$0xf]
        %v2078 = vld [vmem:[%s9 + $0x18] sm:$0xf]
        %v2079 = vld [vmem:[%s9 + $0x1c] sm:$0xf]
        %v2080 = vld [vmem:[%s9 + $0x20] sm:$0xf]
        %v2081 = vld [vmem:[%s9 + $0x24] sm:$0xf]
        %v2082 = vld [vmem:[%s9 + $0x28] sm:$0xf]
        %v2083 = vld [vmem:[%s9 + $0x2c] sm:$0xf]
        %v2084 = vld [vmem:[%s9 + $0x30] sm:$0xf]
        %v2085 = vld [vmem:[%s9 + $0x34] sm:$0xf]
        %v2086 = vld [vmem:[%s9 + $0x38] sm:$0xf]
        %v2087 = vld [vmem:[%s9 + $0x3c] sm:$0xf]
        %v2092 = vunpack.c.l.b16 %v2072
        %v2093 = vunpack.c.l.b16 %v2073
        %v2094 = vunpack.c.l.b16 %v2074
        %v2095 = vunpack.c.l.b16 %v2075
        %v2096 = vpack.c.b16 %v2093, %v2092
        %v2097 = vpack.c.b16 %v2095, %v2094
        %v2101 = vsel %vm1839, %v2068, 0
        %2103 = vmatpush.bf16.msra.mxu0 0
        %2104 = vmatpush.bf16.msra.mxu0 0
        %2105 = vmatpush.bf16.msra.mxu0 0
        %2106 = vmatpush.bf16.msra.mxu0 0
        %2107 = vmatpush.bf16.msra.mxu0 0
        %2108 = vmatpush.bf16.msra.mxu0 0
        %2109 = vmatpush.bf16.msra.mxu0 %v2097
        %2110 = vmatpush.bf16.msra.mxu0 %v2096
        %2111 = vmatmul.bf16.gmra.mxu0 %v2101
        %v2112 = vpop.f32.mrf.mxu0
        %v2113 = vadd.f32 0.0, %v2112
        %v2114 = vpop.f32.mrf.mxu0
        %2115 = vdwg.mxu0
        %v2120 = vunpack.c.l.b16 %v2076
        %v2121 = vunpack.c.l.b16 %v2077
        %v2122 = vunpack.c.l.b16 %v2078
        %v2123 = vunpack.c.l.b16 %v2079
        %v2124 = vpack.c.b16 %v2121, %v2120
        %v2125 = vpack.c.b16 %v2123, %v2122
        %v2129 = vsel %vm1839, %v2069, 0
        %2131 = vmatpush.bf16.msra.mxu0 0
        %2132 = vmatpush.bf16.msra.mxu0 0
        %2133 = vmatpush.bf16.msra.mxu0 0
        %2134 = vmatpush.bf16.msra.mxu0 0
        %2135 = vmatpush.bf16.msra.mxu0 0
        %2136 = vmatpush.bf16.msra.mxu0 0
        %2137 = vmatpush.bf16.msra.mxu0 %v2125
        %2138 = vmatpush.bf16.msra.mxu0 %v2124
        %2139 = vmatmul.bf16.gmra.mxu0 %v2129
        %v2140 = vpop.f32.mrf.mxu0
        %v2141 = vadd.f32 0.0, %v2140
        %v2142 = vpop.f32.mrf.mxu0
        %2143 = vdwg.mxu0
        %v2148 = vunpack.c.l.b16 %v2080
        %v2149 = vunpack.c.l.b16 %v2081
        %v2150 = vunpack.c.l.b16 %v2082
        %v2151 = vunpack.c.l.b16 %v2083
        %v2152 = vpack.c.b16 %v2149, %v2148
        %v2153 = vpack.c.b16 %v2151, %v2150
        %v2157 = vsel %vm1839, %v2070, 0
        %2159 = vmatpush.bf16.msra.mxu0 0
        %2160 = vmatpush.bf16.msra.mxu0 0
        %2161 = vmatpush.bf16.msra.mxu0 0
        %2162 = vmatpush.bf16.msra.mxu0 0
        %2163 = vmatpush.bf16.msra.mxu0 0
        %2164 = vmatpush.bf16.msra.mxu0 0
        %2165 = vmatpush.bf16.msra.mxu0 %v2153
        %2166 = vmatpush.bf16.msra.mxu0 %v2152
        %2167 = vmatmul.bf16.gmra.mxu0 %v2157
        %v2168 = vpop.f32.mrf.mxu0
        %v2169 = vadd.f32 0.0, %v2168
        %v2170 = vpop.f32.mrf.mxu0
        %2171 = vdwg.mxu0
        %v2176 = vunpack.c.l.b16 %v2084
        %v2177 = vunpack.c.l.b16 %v2085
        %v2178 = vunpack.c.l.b16 %v2086
        %v2179 = vunpack.c.l.b16 %v2087
        %v2180 = vpack.c.b16 %v2177, %v2176
        %v2181 = vpack.c.b16 %v2179, %v2178
        %v2185 = vsel %vm1839, %v2071, 0
        %2187 = vmatpush.bf16.msra.mxu0 0
        %2188 = vmatpush.bf16.msra.mxu0 0
        %2189 = vmatpush.bf16.msra.mxu0 0
        %2190 = vmatpush.bf16.msra.mxu0 0
        %2191 = vmatpush.bf16.msra.mxu0 0
        %2192 = vmatpush.bf16.msra.mxu0 0
        %2193 = vmatpush.bf16.msra.mxu0 %v2181
        %2194 = vmatpush.bf16.msra.mxu0 %v2180
        %2195 = vmatmul.bf16.gmra.mxu0 %v2185
        %v2196 = vpop.f32.mrf.mxu0
        %v2197 = vadd.f32 0.0, %v2196
        %v2198 = vpop.f32.mrf.mxu0
        %2199 = vdwg.mxu0
        %v2200 = vadd.f32 %v2113, %v2141
        %v2201 = vadd.f32 %v2200, %v2169
        %v2202 = vadd.f32 %v2201, %v2197
        %v2203 = vld [vmem:[%s10] sm:$0x1]
        %v2205 = vperm.slane %v2203, 0
        %v2207 = vadd.f32 %v2202, %v2205
        %v2208 = vadd.f32 %v663, %v2207
        %v2209 = vld [vmem:[%s17] sm:$0x1]
        %2210 = vadd.xlane.f32.xlu0 %v2208
        %v2211 = vpop.xlane.xlu0 %2210
        %v2212 = vmul.f32 %v2211, %v676
        %v2213 = vsub.f32 %v2208, %v2212
        %v2214 = vmul.f32 %v2213, %v2213
        %2215 = vadd.xlane.f32.xlu0 %v2214
        %v2216 = vpop.xlane.xlu0 %2215
        %v2217 = vmul.f32 %v2216, 0.007874016
        %v2218 = vrsqrt.pop %v2217
        %v2219 = vmul.f32 %v2218, %v2217
        %v2220 = vmul.f32 %v2219, %v2218
        %v2221 = vmul.f32 0.5, %v2220
        %v2222 = vsub.f32 1.5, %v2221
        %v2223 = vmul.f32 %v2218, %v2222
        %v2224 = vmul.f32 %v2217, %v2223
        %vm2225 = vcmp.eq.f32.partialorder %v2217, inf
        %v2226 = vsel %vm2225, %v2217, %v2224
        %vm2227 = vcmp.eq.f32.partialorder %v2217, 0.0
        %v2228 = vand.u32 %v2217, 2147483648
        %v2229 = vsel %vm2227, %v2228, %v2226
        %v2230 = vadd.f32 %v2229, 1e-06
        %v2231 = vrcp.pop %v2230
        %v2232 = vmul.f32 %v2230, %v2231
        %v2233 = vsub.f32 1.0, %v2232
        %v2234 = vmul.f32 %v2231, %v2233
        %v2235 = vadd.f32 %v2231, %v2234
        %vm2236 = vweird.f32 %v2230
        %vm2237 = vweird.f32 %v2231
        %vm2238 = vmor %vm2236, %vm2237
        %v2239 = vsel %vm2238, %v2231, %v2235
        %v2240 = vand.u32 2147483647, %v2230
        %vm2241 = vcmp.eq.f32.partialorder %v2240, 8.507059e+37
        %v2242 = vand.u32 %v2230, 2147483648
        %v2243 = vor.u32 1.1754944e-38, %v2242
        %v2244 = vsel %vm2241, %v2243, %v2239
        %v2245 = vmul.f32 %v2213, %v2244
        %v2247 = vperm.slane %v2209, 0
        %v2249 = vmul.f32 %v2247, %v2245
        %v2250 = vld [vmem:[%s18] sm:$0x1]
        %v2252 = vperm.slane %v2250, 0
        %v2254 = vadd.f32 %v2249, %v2252
        %v2255 = vpack.c.bf16 %v2254, %v2254
        %v2256 = vld [vmem:[%s11] sm:$0xff]
        %v2257 = vld [vmem:[%s11 + $0x8] sm:$0xff]
        %v2258 = vld [vmem:[%s11 + $0x10] sm:$0xff]
        %v2259 = vld [vmem:[%s11 + $0x18] sm:$0xff]
        %v2260 = vld [vmem:[%s11 + $0x20] sm:$0xff]
        %v2261 = vld [vmem:[%s11 + $0x28] sm:$0xff]
        %v2262 = vld [vmem:[%s11 + $0x30] sm:$0xff]
        %v2263 = vld [vmem:[%s11 + $0x38] sm:$0xff]
        %v2264 = vld [vmem:[%s11 + $0x40] sm:$0xff]
        %v2265 = vld [vmem:[%s11 + $0x48] sm:$0xff]
        %v2266 = vld [vmem:[%s11 + $0x50] sm:$0xff]
        %v2267 = vld [vmem:[%s11 + $0x58] sm:$0xff]
        %v2268 = vld [vmem:[%s11 + $0x60] sm:$0xff]
        %v2269 = vld [vmem:[%s11 + $0x68] sm:$0xff]
        %v2270 = vld [vmem:[%s11 + $0x70] sm:$0xff]
        %v2271 = vld [vmem:[%s11 + $0x78] sm:$0xff]
        %v2272 = vld [vmem:[%s12] sm:$0x3]
        %v2274 = vperm.slane %v2272, 0
        %v2275 = vperm.slane %v2272, 1
        %v2294 = vunpack.c.l.b16 %v2256
        %v2295 = vunpack.c.h.b16 %v2256
        %v2296 = vunpack.c.l.b16 %v2257
        %v2297 = vunpack.c.h.b16 %v2257
        %v2298 = vunpack.c.l.b16 %v2258
        %v2299 = vunpack.c.h.b16 %v2258
        %v2300 = vunpack.c.l.b16 %v2259
        %v2301 = vunpack.c.h.b16 %v2259
        %v2302 = vunpack.c.l.b16 %v2260
        %v2303 = vunpack.c.h.b16 %v2260
        %v2304 = vunpack.c.l.b16 %v2261
        %v2305 = vunpack.c.h.b16 %v2261
        %v2306 = vunpack.c.l.b16 %v2262
        %v2307 = vunpack.c.h.b16 %v2262
        %v2308 = vunpack.c.l.b16 %v2263
        %v2309 = vunpack.c.h.b16 %v2263
        %v2310 = vunpack.c.l.b16 %v2264
        %v2311 = vunpack.c.h.b16 %v2264
        %v2312 = vunpack.c.l.b16 %v2265
        %v2313 = vunpack.c.h.b16 %v2265
        %v2314 = vunpack.c.l.b16 %v2266
        %v2315 = vunpack.c.h.b16 %v2266
        %v2316 = vunpack.c.l.b16 %v2267
        %v2317 = vunpack.c.h.b16 %v2267
        %v2318 = vunpack.c.l.b16 %v2268
        %v2319 = vunpack.c.h.b16 %v2268
        %v2320 = vunpack.c.l.b16 %v2269
        %v2321 = vunpack.c.h.b16 %v2269
        %v2322 = vunpack.c.l.b16 %v2270
        %v2323 = vunpack.c.h.b16 %v2270
        %v2324 = vunpack.c.l.b16 %v2271
        %v2325 = vunpack.c.h.b16 %v2271
        %v2326 = vpack.c.b16 %v2296, %v2294
        %v2327 = vpack.c.b16 %v2297, %v2295
        %v2328 = vpack.c.b16 %v2300, %v2298
        %v2329 = vpack.c.b16 %v2301, %v2299
        %v2330 = vpack.c.b16 %v2304, %v2302
        %v2331 = vpack.c.b16 %v2305, %v2303
        %v2332 = vpack.c.b16 %v2308, %v2306
        %v2333 = vpack.c.b16 %v2309, %v2307
        %v2334 = vpack.c.b16 %v2312, %v2310
        %v2335 = vpack.c.b16 %v2313, %v2311
        %v2336 = vpack.c.b16 %v2316, %v2314
        %v2337 = vpack.c.b16 %v2317, %v2315
        %v2338 = vpack.c.b16 %v2320, %v2318
        %v2339 = vpack.c.b16 %v2321, %v2319
        %v2340 = vpack.c.b16 %v2324, %v2322
        %v2341 = vpack.c.b16 %v2325, %v2323
        %2358 = vmatpush.bf16.msra.mxu0 %v2340
        %2359 = vmatpush.bf16.msra.mxu0 %v2338
        %2360 = vmatpush.bf16.msra.mxu0 %v2336
        %2361 = vmatpush.bf16.msra.mxu0 %v2334
        %2362 = vmatpush.bf16.msra.mxu0 %v2332
        %2363 = vmatpush.bf16.msra.mxu0 %v2330
        %2364 = vmatpush.bf16.msra.mxu0 %v2328
        %2365 = vmatpush.bf16.msra.mxu0 %v2326
        %2366 = vmatmul.bf16.gmra.mxu0 %v2255
        %v2367 = vpop.f32.mrf.mxu0
        %v2368 = vadd.f32 %v2274, %v2367
        %v2369 = vpop.f32.mrf.mxu0
        %2370 = vdwg.mxu0
        %2371 = vmatpush.bf16.msra.mxu0 %v2341
        %2372 = vmatpush.bf16.msra.mxu0 %v2339
        %2373 = vmatpush.bf16.msra.mxu0 %v2337
        %2374 = vmatpush.bf16.msra.mxu0 %v2335
        %2375 = vmatpush.bf16.msra.mxu0 %v2333
        %2376 = vmatpush.bf16.msra.mxu0 %v2331
        %2377 = vmatpush.bf16.msra.mxu0 %v2329
        %2378 = vmatpush.bf16.msra.mxu0 %v2327
        %2379 = vmatmul.bf16.gmra.mxu0 %v2255
        %v2380 = vpop.f32.mrf.mxu0
        %v2381 = vadd.f32 %v2275, %v2380
        %v2382 = vpop.f32.mrf.mxu0
        %2383 = vdwg.mxu0
        %v2384 = vmax.f32 %v2368, 0.0
        %v2385 = vmax.f32 %v2381, 0.0
        %v2386 = vpack.c.bf16 %v2384, %v2384
        %v2387 = vpack.c.bf16 %v2385, %v2385
        %v2388 = vld [vmem:[%s13] sm:$0xf]
        %v2389 = vld [vmem:[%s13 + $0x4] sm:$0xf]
        %v2390 = vld [vmem:[%s13 + $0x8] sm:$0xf]
        %v2391 = vld [vmem:[%s13 + $0xc] sm:$0xf]
        %v2392 = vld [vmem:[%s13 + $0x10] sm:$0xf]
        %v2393 = vld [vmem:[%s13 + $0x14] sm:$0xf]
        %v2394 = vld [vmem:[%s13 + $0x18] sm:$0xf]
        %v2395 = vld [vmem:[%s13 + $0x1c] sm:$0xf]
        %v2396 = vld [vmem:[%s13 + $0x20] sm:$0xf]
        %v2397 = vld [vmem:[%s13 + $0x24] sm:$0xf]
        %v2398 = vld [vmem:[%s13 + $0x28] sm:$0xf]
        %v2399 = vld [vmem:[%s13 + $0x2c] sm:$0xf]
        %v2400 = vld [vmem:[%s13 + $0x30] sm:$0xf]
        %v2401 = vld [vmem:[%s13 + $0x34] sm:$0xf]
        %v2402 = vld [vmem:[%s13 + $0x38] sm:$0xf]
        %v2403 = vld [vmem:[%s13 + $0x3c] sm:$0xf]
        %v2404 = vld [vmem:[%s13 + $0x40] sm:$0xf]
        %v2405 = vld [vmem:[%s13 + $0x44] sm:$0xf]
        %v2406 = vld [vmem:[%s13 + $0x48] sm:$0xf]
        %v2407 = vld [vmem:[%s13 + $0x4c] sm:$0xf]
        %v2408 = vld [vmem:[%s13 + $0x50] sm:$0xf]
        %v2409 = vld [vmem:[%s13 + $0x54] sm:$0xf]
        %v2410 = vld [vmem:[%s13 + $0x58] sm:$0xf]
        %v2411 = vld [vmem:[%s13 + $0x5c] sm:$0xf]
        %v2412 = vld [vmem:[%s13 + $0x60] sm:$0xf]
        %v2413 = vld [vmem:[%s13 + $0x64] sm:$0xf]
        %v2414 = vld [vmem:[%s13 + $0x68] sm:$0xf]
        %v2415 = vld [vmem:[%s13 + $0x6c] sm:$0xf]
        %v2416 = vld [vmem:[%s13 + $0x70] sm:$0xf]
        %v2417 = vld [vmem:[%s13 + $0x74] sm:$0xf]
        %v2418 = vld [vmem:[%s13 + $0x78] sm:$0xf]
        %v2419 = vld [vmem:[%s13 + $0x7c] sm:$0xf]
        %v2420 = vld [vmem:[%s14] sm:$0x1]
        %v2422 = vperm.slane %v2420, 0
        %v2456 = vunpack.c.l.b16 %v2388
        %v2457 = vunpack.c.l.b16 %v2389
        %v2458 = vunpack.c.l.b16 %v2390
        %v2459 = vunpack.c.l.b16 %v2391
        %v2460 = vunpack.c.l.b16 %v2392
        %v2461 = vunpack.c.l.b16 %v2393
        %v2462 = vunpack.c.l.b16 %v2394
        %v2463 = vunpack.c.l.b16 %v2395
        %v2464 = vunpack.c.l.b16 %v2396
        %v2465 = vunpack.c.l.b16 %v2397
        %v2466 = vunpack.c.l.b16 %v2398
        %v2467 = vunpack.c.l.b16 %v2399
        %v2468 = vunpack.c.l.b16 %v2400
        %v2469 = vunpack.c.l.b16 %v2401
        %v2470 = vunpack.c.l.b16 %v2402
        %v2471 = vunpack.c.l.b16 %v2403
        %v2472 = vunpack.c.l.b16 %v2404
        %v2473 = vunpack.c.l.b16 %v2405
        %v2474 = vunpack.c.l.b16 %v2406
        %v2475 = vunpack.c.l.b16 %v2407
        %v2476 = vunpack.c.l.b16 %v2408
        %v2477 = vunpack.c.l.b16 %v2409
        %v2478 = vunpack.c.l.b16 %v2410
        %v2479 = vunpack.c.l.b16 %v2411
        %v2480 = vunpack.c.l.b16 %v2412
        %v2481 = vunpack.c.l.b16 %v2413
        %v2482 = vunpack.c.l.b16 %v2414
        %v2483 = vunpack.c.l.b16 %v2415
        %v2484 = vunpack.c.l.b16 %v2416
        %v2485 = vunpack.c.l.b16 %v2417
        %v2486 = vunpack.c.l.b16 %v2418
        %v2487 = vunpack.c.l.b16 %v2419
        %v2488 = vpack.c.b16 %v2457, %v2456
        %v2489 = vpack.c.b16 %v2459, %v2458
        %v2490 = vpack.c.b16 %v2461, %v2460
        %v2491 = vpack.c.b16 %v2463, %v2462
        %v2492 = vpack.c.b16 %v2465, %v2464
        %v2493 = vpack.c.b16 %v2467, %v2466
        %v2494 = vpack.c.b16 %v2469, %v2468
        %v2495 = vpack.c.b16 %v2471, %v2470
        %v2496 = vpack.c.b16 %v2473, %v2472
        %v2497 = vpack.c.b16 %v2475, %v2474
        %v2498 = vpack.c.b16 %v2477, %v2476
        %v2499 = vpack.c.b16 %v2479, %v2478
        %v2500 = vpack.c.b16 %v2481, %v2480
        %v2501 = vpack.c.b16 %v2483, %v2482
        %v2502 = vpack.c.b16 %v2485, %v2484
        %v2503 = vpack.c.b16 %v2487, %v2486
        %2520 = vmatpush.bf16.msra.mxu0 %v2495
        %2521 = vmatpush.bf16.msra.mxu0 %v2494
        %2522 = vmatpush.bf16.msra.mxu0 %v2493
        %2523 = vmatpush.bf16.msra.mxu0 %v2492
        %2524 = vmatpush.bf16.msra.mxu0 %v2491
        %2525 = vmatpush.bf16.msra.mxu0 %v2490
        %2526 = vmatpush.bf16.msra.mxu0 %v2489
        %2527 = vmatpush.bf16.msra.mxu0 %v2488
        %2528 = vmatmul.bf16.gmra.mxu0 %v2386
        %v2529 = vpop.f32.mrf.mxu0
        %v2530 = vadd.f32 %v2422, %v2529
        %v2531 = vpop.f32.mrf.mxu0
        %2532 = vdwg.mxu0
        %2533 = vmatpush.bf16.msra.mxu0 %v2503
        %2534 = vmatpush.bf16.msra.mxu0 %v2502
        %2535 = vmatpush.bf16.msra.mxu0 %v2501
        %2536 = vmatpush.bf16.msra.mxu0 %v2500
        %2537 = vmatpush.bf16.msra.mxu0 %v2499
        %2538 = vmatpush.bf16.msra.mxu0 %v2498
        %2539 = vmatpush.bf16.msra.mxu0 %v2497
        %2540 = vmatpush.bf16.msra.mxu0 %v2496
        %2541 = vmatmul.bf16.gmra.mxu0 %v2387
        %v2542 = vpop.f32.mrf.mxu0
        %v2543 = vadd.f32 %v2530, %v2542
        %v2544 = vpop.f32.mrf.mxu0
        %2545 = vdwg.mxu0
        %v2546 = vadd.f32 %v2208, %v2543
        %2547 = vst [vmem:[%s643] sm:$0xff] %v2546
        %s2548 = sand.u32 %s471, 1
        %s2549 = scalar_lea.sflag [#allocation3], %s2548
        %s2550 = sand.u32 %s471, 1
        %s2551 = smul.addr %s2550, 8
        %s2552 = scalar_lea.vmem [#allocation2], %s2551
        // Predicated region
        $region97: #{tpu_custom_call.1} parent=95 // pred_check
          %p2553 = pneg %p481
        $region98: #{tpu_custom_call.1} parent=95 // pred_check_branch
          %2555 = sbr.rel (%p2553) target = $region100
        $region99: #{tpu_custom_call.1} parent=95 // pred_region
          %2557 = vsyncadd %s2549, 0
          %s2558 = smul.addr %s37, 2
          %s2559 = sadd.s32 %s38, %s2558
          %s2560 = smul.addr %s2559, 8
          %s2561 = scalar_lea.hbm %s19, %s2560
          %s2563 = sshll.u32 %s2552, 4
          %s2564 = int_to_ptr.vmem [resolvable:$true] %s2563
          %s2565 = sshll.u32 %s2561, 4
          %s2566 = int_to_ptr.hbm [resolvable:$true] %s2565
          %2568 = dma.vmem_to_hbm [thread:$0]  %s2564, 128, %s2566, %s2549
        $region100: #{tpu_custom_call.1} parent=95 // pred_fallthru
          _
      $region96: #{tpu_custom_call.1} parent=5 // pred_fallthru
        _
      %p2569 = scmp.le.s32.totalorder 2, %s28
      // Predicated region
      $region101: #{tpu_custom_call.1} parent=5 // pred_check
        %p2570 = pneg %p2569
      $region102: #{tpu_custom_call.1} parent=5 // pred_check_branch
        %2572 = sbr.rel (%p2570) target = $region104
      $region103: #{tpu_custom_call.1} parent=5 // pred_region
        %s2573 = ssub.s32 %s28, 2
        // Predicated region
        $region105: #{tpu_custom_call.1} parent=103 // pred_check
          %p2574 = pneg %p487
        $region106: #{tpu_custom_call.1} parent=103 // pred_check_branch
          %2576 = sbr.rel (%p2574) target = $region108
        $region107: #{tpu_custom_call.1} parent=103 // pred_region
          %s2577 = sand.u32 %s472, 1
          %s2578 = scalar_lea.sflag [#allocation3], %s2577
          %s2579 = sand.u32 %s472, 1
          %s2580 = smul.addr %s2579, 8
          %s2581 = scalar_lea.vmem [#allocation2], %s2580
          %2583 = dma.done %s2578, 128
        $region108: #{tpu_custom_call.1} parent=103 // pred_fallthru
          _
      $region104: #{tpu_custom_call.1} parent=5 // pred_fallthru
        _
    $region6: #{tpu_custom_call.1} parent=1 // loop_footer
      %s32 = sadd.s32 1, %s28
    $region7: #{tpu_custom_call.1} parent=1 // loop_footer_branch
      %27 = sbr.rel target = $region3
    $region8: #{tpu_custom_call.1} parent=1 // loop_exit
      _
    %2584 = vsyncpa [#allocation3], 1
    %s2585 = scalar_lea.sflag [#allocation3], 1
    %2586 = vsyncpa %s2585, 1

</llo_original>
